<compile_context>
chip_gen: v6e
topology: v6e:2x2x1
jax: 0.10.0
libtpu: 0.0.40
codegen_flags: <defaults>
</compile_context>

<pallas_src>
import numpy as np

import jax
import jax.numpy as jnp
from jax import lax
from jax.experimental import pallas as pl
from jax.experimental.pallas import tpu as pltpu


def _attention_kernel(feats_ref, embs_ref,
                      w_i2h_ref, w_h2h_ref, b_h2h_ref, w_score_ref,
                      w_ih_f_ref, w_ih_e_ref, b_ih_ref,
                      w_hh_ref, b_hh_ref, w_gen_ref, b_gen_ref,
                      probs_ref,
                      fproj_scr, egate_scr):
    """Fused attention-GRU decoder.

    feats_ref:   (nT, nB, nC)      encoder features
    embs_ref:    (S,  nB, E)       teacher-forced char embeddings per step
    w_i2h_ref:   (nC, H)           i2h weight (pre-transposed, no bias)
    w_h2h_ref:   (H, H), b_h2h:(1,H)
    w_score_ref: (1, H)            score weight (row vector)
    w_ih_f_ref:  (nC, 3H)          GRU input weights, feats-context part
    w_ih_e_ref:  (E, 3H)           GRU input weights, embedding part
    b_ih_ref:    (1, 3H)
    w_hh_ref:    (H, 3H), b_hh:(1,3H)
    w_gen_ref:   (H, nCls), b_gen:(1,nCls)
    probs_ref:   (S, nB, nCls)     generator(hidden_i) for every step
    fproj_scr:   (nT, nB, H)       scratch: i2h(feats), computed once
    egate_scr:   (S, nB, 3H)       scratch: emb @ W_ih_e + b_ih, computed once
    """
    nT, nB, nC = feats_ref.shape
    S = embs_ref.shape[0]
    H = w_h2h_ref.shape[0]
    nCls = w_gen_ref.shape[1]
    f32 = jnp.float32

    # ---- hoisted, step-invariant work (the PyTorch module recomputes these every step) ----
    w_i2h = w_i2h_ref[...]
    for t in range(nT):                           # static trip count, unrolls at trace time
        fproj_scr[t] = jnp.dot(feats_ref[t], w_i2h, preferred_element_type=f32)

    w_ih_e = w_ih_e_ref[...]
    b_ih_b = jnp.broadcast_to(b_ih_ref[...], (nB, 3 * H))
    for i in range(S):
        egate_scr[i] = jnp.dot(embs_ref[i], w_ih_e,
                               preferred_element_type=f32) + b_ih_b

    # hoisted weight loads and bias broadcasts (JAX does not CSE broadcast_in_dim)
    w_h2h = w_h2h_ref[...]
    b_h2h_b = jnp.broadcast_to(b_h2h_ref[...], (nB, H))
    w_score_b = w_score_ref[...][None, :, :]          # (1, 1, H)
    w_ih_f = w_ih_f_ref[...]
    w_hh = w_hh_ref[...]
    b_hh_b = jnp.broadcast_to(b_hh_ref[...], (nB, 3 * H))
    w_gen = w_gen_ref[...]
    b_gen_b = jnp.broadcast_to(b_gen_ref[...], (nB, nCls))

    def step(i, h):
        # -- attention over the nT feature positions --
        php = jnp.dot(h, w_h2h, preferred_element_type=f32) + b_h2h_b      # (nB, H)
        e = jnp.tanh(fproj_scr[...] + php[None, :, :])                      # (nT, nB, H)
        em = jnp.sum(e * w_score_b, axis=-1, keepdims=True)                 # (nT, nB, 1)
        m = jnp.max(em, axis=0, keepdims=True)
        p = jnp.exp(em - m)
        alpha = p / jnp.sum(p, axis=0, keepdims=True)                       # softmax over T
        ctx = jnp.sum(feats_ref[...] * alpha, axis=0)                       # (nB, nC)

        # -- GRU cell (PyTorch gate order [r, z, n]); emb + input-bias part precomputed --
        gx = jnp.dot(ctx, w_ih_f, preferred_element_type=f32) + egate_scr[i]  # (nB, 3H)
        gh = jnp.dot(h, w_hh, preferred_element_type=f32) + b_hh_b            # (nB, 3H)
        rz = jax.nn.sigmoid(gx[:, :2 * H] + gh[:, :2 * H])   # one EUP call for r and z
        r = rz[:, :H]
        z = rz[:, H:2 * H]
        n = jnp.tanh(gx[:, 2 * H:] + r * gh[:, 2 * H:])
        h_new = (1.0 - z) * n + z * h

        # -- generator, fused (off the recurrence carry chain) --
        probs_ref[i] = (jnp.dot(h_new, w_gen, preferred_element_type=f32)
                        + b_gen_b).astype(probs_ref.dtype)
        return h_new

    h0 = jnp.zeros((nB, H), f32)
    lax.fori_loop(0, S, step, h0, unroll=True)


def attention_forward(feats, text_length, text, params):
    """Training-mode (teacher forcing) forward of the `Attention` module.

    feats:       (nT, nB, nC) float32
    text_length: (nB,) concrete int lengths
    text:        (sum(text_length),) concrete int labels in [0, num_classes)
    returns:     (num_labels, num_classes) float32
    """
    nT, nB, nC = feats.shape
    H = params["w_h2h"].shape[0]
    nCls = params["w_gen"].shape[1]
    text_length = np.asarray(text_length)
    text = np.asarray(text)
    assert nC == params["w_i2h"].shape[0]
    assert nB == text_length.size
    S = int(text_length.max())

    # teacher-forcing targets (host side; lengths are concrete). Row 0 = <start> token 0.
    targets = np.zeros((S + 1, nB), dtype=np.int32)
    start = 0
    for b in range(nB):
        L = int(text_length[b])
        targets[1:1 + L, b] = text[start:start + L] + 1
        start += L

    # char-embedding lookup for the S decoder inputs (tiny gather, plain JAX)
    embs = jnp.take(params["char_emb"], jnp.asarray(targets[:S]), axis=0)  # (S, nB, E)

    vmem = pl.BlockSpec(memory_space=pltpu.MemorySpace.VMEM)
    probs_all = pl.pallas_call(
        _attention_kernel,
        out_shape=jax.ShapeDtypeStruct((S, nB, nCls), jnp.float32),
        in_specs=[vmem] * 13,
        out_specs=vmem,
        scratch_shapes=[pltpu.VMEM((nT, nB, H), jnp.float32),
                        pltpu.VMEM((S, nB, 3 * H), jnp.float32)],
    )(feats, embs,
      params["w_i2h"], params["w_h2h"], params["b_h2h"], params["w_score"],
      params["w_ih_f"], params["w_ih_e"], params["b_ih"],
      params["w_hh"], params["b_hh"], params["w_gen"], params["b_gen"])

    # ragged re-packing: for batch b keep steps 0..L_b-1 (same row order as PyTorch)
    step_idx = np.concatenate([np.arange(int(L)) for L in text_length]).astype(np.int32)
    batch_idx = np.concatenate(
        [np.full(int(L), b) for b, L in enumerate(text_length)]).astype(np.int32)
    return probs_all[jnp.asarray(step_idx), jnp.asarray(batch_idx)]


def init_params(key, input_size, hidden_size, num_classes, num_embeddings):
    """Deterministic init mirroring PyTorch Linear/GRUCell uniform(-k, k) and randn embeddings."""
    H = hidden_size
    ks = jax.random.split(key, 11)

    def u(k, shape, bound):
        return jax.random.uniform(k, shape, jnp.float32, -bound, bound)

    k_i2h = 1.0 / np.sqrt(input_size)
    k_h = 1.0 / np.sqrt(H)

    w_i2h = u(ks[0], (H, input_size), k_i2h).T                 # (nC, H)
    w_h2h = u(ks[1], (H, H), k_h).T                             # (H, H)
    b_h2h = u(ks[2], (H,), k_h).reshape(1, H)
    w_score = u(ks[3], (1, H), k_h)                             # (1, H)
    # GRUCell(input_size + E, H): weight_ih (3H, nC+E) gate order [r, z, n]; pre-transpose.
    w_ih = u(ks[4], (3 * H, input_size + num_embeddings), k_h).T   # (nC+E, 3H)
    w_hh = u(ks[5], (3 * H, H), k_h).T                              # (H, 3H)
    b_ih = u(ks[6], (3 * H,), k_h).reshape(1, 3 * H)
    b_hh = u(ks[7], (3 * H,), k_h).reshape(1, 3 * H)
    w_gen = u(ks[8], (num_classes, H), k_h).T                   # (H, nCls)
    b_gen = u(ks[9], (num_classes,), k_h).reshape(1, num_classes)
    char_emb = jax.random.normal(ks[10], (num_classes + 1, num_embeddings), jnp.float32)

    return dict(w_i2h=w_i2h, w_h2h=w_h2h, b_h2h=b_h2h, w_score=w_score,
                w_ih_f=w_ih[:input_size], w_ih_e=w_ih[input_size:],
                b_ih=b_ih, w_hh=w_hh, b_hh=b_hh,
                w_gen=w_gen, b_gen=b_gen, char_emb=char_emb)


def _reference(feats, text_length, text, params):
    """Pure-JAX reference of the same math (PyTorch semantics, fracPickup = identity)."""
    nT, nB, nC = feats.shape
    H = params["w_h2h"].shape[0]
    text_length = np.asarray(text_length)
    text = np.asarray(text)
    S = int(text_length.max())

    targets = np.zeros((S + 1, nB), dtype=np.int32)
    start = 0
    for b in range(nB):
        L = int(text_length[b])
        targets[1:1 + L, b] = text[start:start + L] + 1
        start += L

    w_ih = jnp.concatenate([params["w_ih_f"], params["w_ih_e"]], axis=0)
    hidden = jnp.zeros((nB, H), jnp.float32)
    out_h = []
    for i in range(S):
        emb = params["char_emb"][targets[i]]                              # (nB, E)
        fp = feats.reshape(-1, nC) @ params["w_i2h"]                      # (nT*nB, H)
        php = hidden @ params["w_h2h"] + params["b_h2h"]                  # (nB, H)
        php_e = jnp.broadcast_to(php[None], (nT, nB, H)).reshape(-1, H)
        em = (jnp.tanh(fp + php_e) @ params["w_score"].T).reshape(nT, nB)
        alpha = jax.nn.softmax(em, axis=0)
        ctx = jnp.sum(feats * alpha[:, :, None], axis=0)                  # (nB, nC)
        x = jnp.concatenate([ctx, emb], axis=1)
        gx = x @ w_ih + params["b_ih"]
        gh = hidden @ params["w_hh"] + params["b_hh"]
        r = jax.nn.sigmoid(gx[:, :H] + gh[:, :H])
        z = jax.nn.sigmoid(gx[:, H:2 * H] + gh[:, H:2 * H])
        n = jnp.tanh(gx[:, 2 * H:] + r * gh[:, 2 * H:])
        hidden = (1.0 - z) * n + z * hidden
        out_h.append(hidden)
    out_h = jnp.stack(out_h)                                              # (S, nB, H)

    rows = []
    for b in range(nB):
        rows.append(out_h[:int(text_length[b]), b, :])
    new_h = jnp.concatenate(rows, axis=0)                                 # (num_labels, H)
    return new_h @ params["w_gen"] + params["b_gen"]


if __name__ == "__main__":
    nT, nB, nC = 8, 2, 32            # feature sequence length, batch, input_size (= nC)
    hidden_size, num_classes, num_embeddings = 32, 16, 128

    key = jax.random.PRNGKey(0)
    k_f, k_p = jax.random.split(key)
    feats = jax.random.normal(k_f, (nT, nB, nC), jnp.float32)
    text_length = np.array([3, 5], dtype=np.int32)
    num_labels = int(text_length.sum())
    text = (np.arange(num_labels, dtype=np.int32) % num_classes)
    params = init_params(k_p, nC, hidden_size, num_classes, num_embeddings)

    probs = attention_forward(feats, text_length, text, params)
    probs = jax.block_until_ready(probs)

    ref = _reference(feats, text_length, text, params)
    assert probs.shape == (num_labels, num_classes)
    assert jnp.allclose(probs, ref, atol=1e-3, rtol=1e-3)

    print("KERNEL_OK")
</pallas_src>

<mosaic_0001>
module attributes {stable_mosaic.version = 11 : i64} {
  func.func @_attention_kernel(%arg0: memref<8x2x32xf32, #tpu.memory_space<vmem>>, %arg1: memref<5x2x128xf32, #tpu.memory_space<vmem>>, %arg2: memref<32x32xf32, #tpu.memory_space<vmem>>, %arg3: memref<32x32xf32, #tpu.memory_space<vmem>>, %arg4: memref<1x32xf32, #tpu.memory_space<vmem>>, %arg5: memref<1x32xf32, #tpu.memory_space<vmem>>, %arg6: memref<32x96xf32, #tpu.memory_space<vmem>>, %arg7: memref<128x96xf32, #tpu.memory_space<vmem>>, %arg8: memref<1x96xf32, #tpu.memory_space<vmem>>, %arg9: memref<32x96xf32, #tpu.memory_space<vmem>>, %arg10: memref<1x96xf32, #tpu.memory_space<vmem>>, %arg11: memref<32x16xf32, #tpu.memory_space<vmem>>, %arg12: memref<1x16xf32, #tpu.memory_space<vmem>>, %arg13: memref<5x2x16xf32, #tpu.memory_space<vmem>>, %arg14: memref<8x2x32xf32, #tpu.memory_space<vmem>>, %arg15: memref<5x2x96xf32, #tpu.memory_space<vmem>>) attributes {dimension_semantics = [], scalar_prefetch = 0 : i64, scratch_operands = 2 : i64, tpu.core_type = #tpu.core_type<tc>} {
    %c0 = arith.constant 0 : index
    %c0_0 = arith.constant 0 : index
    %0 = vector.load %arg2[%c0, %c0_0] : memref<32x32xf32, #tpu.memory_space<vmem>>, vector<32x32xf32>
    %c0_1 = arith.constant 0 : index
    %c0_2 = arith.constant 0 : index
    %c0_3 = arith.constant 0 : index
    %1 = vector.load %arg0[%c0_1, %c0_2, %c0_3] : memref<8x2x32xf32, #tpu.memory_space<vmem>>, vector<1x2x32xf32>
    %2 = vector.shape_cast %1 : vector<1x2x32xf32> to vector<2x32xf32>
    %cst = arith.constant dense<0.000000e+00> : vector<2x32xf32>
    %3 = tpu.matmul %2, %0, %cst {dimension_numbers = #tpu.dot_dimension_numbers<[1], [0], [0], [1], [0, 0, 1, 1], [], []>} : vector<2x32xf32>, vector<32x32xf32>, vector<2x32xf32> -> vector<2x32xf32>
    %c0_4 = arith.constant 0 : index
    %c0_5 = arith.constant 0 : index
    %c0_6 = arith.constant 0 : index
    %4 = vector.load %arg14[%c0_4, %c0_5, %c0_6] : memref<8x2x32xf32, #tpu.memory_space<vmem>>, vector<1x2x32xf32>
    %5 = vector.shape_cast %4 : vector<1x2x32xf32> to vector<2x32xf32>
    %6 = vector.shape_cast %3 : vector<2x32xf32> to vector<1x2x32xf32>
    tpu.vector_store %arg14[%c0_4, %c0_5, %c0_6], %6 {strides = array<i32>} : memref<8x2x32xf32, #tpu.memory_space<vmem>>, vector<1x2x32xf32>,
    %c1 = arith.constant 1 : index
    %c0_7 = arith.constant 0 : index
    %c0_8 = arith.constant 0 : index
    %7 = vector.load %arg0[%c1, %c0_7, %c0_8] : memref<8x2x32xf32, #tpu.memory_space<vmem>>, vector<1x2x32xf32>
    %8 = vector.shape_cast %7 : vector<1x2x32xf32> to vector<2x32xf32>
    %cst_9 = arith.constant dense<0.000000e+00> : vector<2x32xf32>
    %9 = tpu.matmul %8, %0, %cst_9 {dimension_numbers = #tpu.dot_dimension_numbers<[1], [0], [0], [1], [0, 0, 1, 1], [], []>} : vector<2x32xf32>, vector<32x32xf32>, vector<2x32xf32> -> vector<2x32xf32>
    %c1_10 = arith.constant 1 : index
    %c0_11 = arith.constant 0 : index
    %c0_12 = arith.constant 0 : index
    %10 = vector.load %arg14[%c1_10, %c0_11, %c0_12] : memref<8x2x32xf32, #tpu.memory_space<vmem>>, vector<1x2x32xf32>
    %11 = vector.shape_cast %10 : vector<1x2x32xf32> to vector<2x32xf32>
    %12 = vector.shape_cast %9 : vector<2x32xf32> to vector<1x2x32xf32>
    tpu.vector_store %arg14[%c1_10, %c0_11, %c0_12], %12 {strides = array<i32>} : memref<8x2x32xf32, #tpu.memory_space<vmem>>, vector<1x2x32xf32>,
    %c2 = arith.constant 2 : index
    %c0_13 = arith.constant 0 : index
    %c0_14 = arith.constant 0 : index
    %13 = vector.load %arg0[%c2, %c0_13, %c0_14] : memref<8x2x32xf32, #tpu.memory_space<vmem>>, vector<1x2x32xf32>
    %14 = vector.shape_cast %13 : vector<1x2x32xf32> to vector<2x32xf32>
    %cst_15 = arith.constant dense<0.000000e+00> : vector<2x32xf32>
    %15 = tpu.matmul %14, %0, %cst_15 {dimension_numbers = #tpu.dot_dimension_numbers<[1], [0], [0], [1], [0, 0, 1, 1], [], []>} : vector<2x32xf32>, vector<32x32xf32>, vector<2x32xf32> -> vector<2x32xf32>
    %c2_16 = arith.constant 2 : index
    %c0_17 = arith.constant 0 : index
    %c0_18 = arith.constant 0 : index
    %16 = vector.load %arg14[%c2_16, %c0_17, %c0_18] : memref<8x2x32xf32, #tpu.memory_space<vmem>>, vector<1x2x32xf32>
    %17 = vector.shape_cast %16 : vector<1x2x32xf32> to vector<2x32xf32>
    %18 = vector.shape_cast %15 : vector<2x32xf32> to vector<1x2x32xf32>
    tpu.vector_store %arg14[%c2_16, %c0_17, %c0_18], %18 {strides = array<i32>} : memref<8x2x32xf32, #tpu.memory_space<vmem>>, vector<1x2x32xf32>,
    %c3 = arith.constant 3 : index
    %c0_19 = arith.constant 0 : index
    %c0_20 = arith.constant 0 : index
    %19 = vector.load %arg0[%c3, %c0_19, %c0_20] : memref<8x2x32xf32, #tpu.memory_space<vmem>>, vector<1x2x32xf32>
    %20 = vector.shape_cast %19 : vector<1x2x32xf32> to vector<2x32xf32>
    %cst_21 = arith.constant dense<0.000000e+00> : vector<2x32xf32>
    %21 = tpu.matmul %20, %0, %cst_21 {dimension_numbers = #tpu.dot_dimension_numbers<[1], [0], [0], [1], [0, 0, 1, 1], [], []>} : vector<2x32xf32>, vector<32x32xf32>, vector<2x32xf32> -> vector<2x32xf32>
    %c3_22 = arith.constant 3 : index
    %c0_23 = arith.constant 0 : index
    %c0_24 = arith.constant 0 : index
    %22 = vector.load %arg14[%c3_22, %c0_23, %c0_24] : memref<8x2x32xf32, #tpu.memory_space<vmem>>, vector<1x2x32xf32>
    %23 = vector.shape_cast %22 : vector<1x2x32xf32> to vector<2x32xf32>
    %24 = vector.shape_cast %21 : vector<2x32xf32> to vector<1x2x32xf32>
    tpu.vector_store %arg14[%c3_22, %c0_23, %c0_24], %24 {strides = array<i32>} : memref<8x2x32xf32, #tpu.memory_space<vmem>>, vector<1x2x32xf32>,
    %c4 = arith.constant 4 : index
    %c0_25 = arith.constant 0 : index
    %c0_26 = arith.constant 0 : index
    %25 = vector.load %arg0[%c4, %c0_25, %c0_26] : memref<8x2x32xf32, #tpu.memory_space<vmem>>, vector<1x2x32xf32>
    %26 = vector.shape_cast %25 : vector<1x2x32xf32> to vector<2x32xf32>
    %cst_27 = arith.constant dense<0.000000e+00> : vector<2x32xf32>
    %27 = tpu.matmul %26, %0, %cst_27 {dimension_numbers = #tpu.dot_dimension_numbers<[1], [0], [0], [1], [0, 0, 1, 1], [], []>} : vector<2x32xf32>, vector<32x32xf32>, vector<2x32xf32> -> vector<2x32xf32>
    %c4_28 = arith.constant 4 : index
    %c0_29 = arith.constant 0 : index
    %c0_30 = arith.constant 0 : index
    %28 = vector.load %arg14[%c4_28, %c0_29, %c0_30] : memref<8x2x32xf32, #tpu.memory_space<vmem>>, vector<1x2x32xf32>
    %29 = vector.shape_cast %28 : vector<1x2x32xf32> to vector<2x32xf32>
    %30 = vector.shape_cast %27 : vector<2x32xf32> to vector<1x2x32xf32>
    tpu.vector_store %arg14[%c4_28, %c0_29, %c0_30], %30 {strides = array<i32>} : memref<8x2x32xf32, #tpu.memory_space<vmem>>, vector<1x2x32xf32>,
    %c5 = arith.constant 5 : index
    %c0_31 = arith.constant 0 : index
    %c0_32 = arith.constant 0 : index
    %31 = vector.load %arg0[%c5, %c0_31, %c0_32] : memref<8x2x32xf32, #tpu.memory_space<vmem>>, vector<1x2x32xf32>
    %32 = vector.shape_cast %31 : vector<1x2x32xf32> to vector<2x32xf32>
    %cst_33 = arith.constant dense<0.000000e+00> : vector<2x32xf32>
    %33 = tpu.matmul %32, %0, %cst_33 {dimension_numbers = #tpu.dot_dimension_numbers<[1], [0], [0], [1], [0, 0, 1, 1], [], []>} : vector<2x32xf32>, vector<32x32xf32>, vector<2x32xf32> -> vector<2x32xf32>
    %c5_34 = arith.constant 5 : index
    %c0_35 = arith.constant 0 : index
    %c0_36 = arith.constant 0 : index
    %34 = vector.load %arg14[%c5_34, %c0_35, %c0_36] : memref<8x2x32xf32, #tpu.memory_space<vmem>>, vector<1x2x32xf32>
    %35 = vector.shape_cast %34 : vector<1x2x32xf32> to vector<2x32xf32>
    %36 = vector.shape_cast %33 : vector<2x32xf32> to vector<1x2x32xf32>
    tpu.vector_store %arg14[%c5_34, %c0_35, %c0_36], %36 {strides = array<i32>} : memref<8x2x32xf32, #tpu.memory_space<vmem>>, vector<1x2x32xf32>,
    %c6 = arith.constant 6 : index
    %c0_37 = arith.constant 0 : index
    %c0_38 = arith.constant 0 : index
    %37 = vector.load %arg0[%c6, %c0_37, %c0_38] : memref<8x2x32xf32, #tpu.memory_space<vmem>>, vector<1x2x32xf32>
    %38 = vector.shape_cast %37 : vector<1x2x32xf32> to vector<2x32xf32>
    %cst_39 = arith.constant dense<0.000000e+00> : vector<2x32xf32>
    %39 = tpu.matmul %38, %0, %cst_39 {dimension_numbers = #tpu.dot_dimension_numbers<[1], [0], [0], [1], [0, 0, 1, 1], [], []>} : vector<2x32xf32>, vector<32x32xf32>, vector<2x32xf32> -> vector<2x32xf32>
    %c6_40 = arith.constant 6 : index
    %c0_41 = arith.constant 0 : index
    %c0_42 = arith.constant 0 : index
    %40 = vector.load %arg14[%c6_40, %c0_41, %c0_42] : memref<8x2x32xf32, #tpu.memory_space<vmem>>, vector<1x2x32xf32>
    %41 = vector.shape_cast %40 : vector<1x2x32xf32> to vector<2x32xf32>
    %42 = vector.shape_cast %39 : vector<2x32xf32> to vector<1x2x32xf32>
    tpu.vector_store %arg14[%c6_40, %c0_41, %c0_42], %42 {strides = array<i32>} : memref<8x2x32xf32, #tpu.memory_space<vmem>>, vector<1x2x32xf32>,
    %c7 = arith.constant 7 : index
    %c0_43 = arith.constant 0 : index
    %c0_44 = arith.constant 0 : index
    %43 = vector.load %arg0[%c7, %c0_43, %c0_44] : memref<8x2x32xf32, #tpu.memory_space<vmem>>, vector<1x2x32xf32>
    %44 = vector.shape_cast %43 : vector<1x2x32xf32> to vector<2x32xf32>
    %cst_45 = arith.constant dense<0.000000e+00> : vector<2x32xf32>
    %45 = tpu.matmul %44, %0, %cst_45 {dimension_numbers = #tpu.dot_dimension_numbers<[1], [0], [0], [1], [0, 0, 1, 1], [], []>} : vector<2x32xf32>, vector<32x32xf32>, vector<2x32xf32> -> vector<2x32xf32>
    %c7_46 = arith.constant 7 : index
    %c0_47 = arith.constant 0 : index
    %c0_48 = arith.constant 0 : index
    %46 = vector.load %arg14[%c7_46, %c0_47, %c0_48] : memref<8x2x32xf32, #tpu.memory_space<vmem>>, vector<1x2x32xf32>
    %47 = vector.shape_cast %46 : vector<1x2x32xf32> to vector<2x32xf32>
    %48 = vector.shape_cast %45 : vector<2x32xf32> to vector<1x2x32xf32>
    tpu.vector_store %arg14[%c7_46, %c0_47, %c0_48], %48 {strides = array<i32>} : memref<8x2x32xf32, #tpu.memory_space<vmem>>, vector<1x2x32xf32>,
    %c0_49 = arith.constant 0 : index
    %c0_50 = arith.constant 0 : index
    %49 = vector.load %arg7[%c0_49, %c0_50] : memref<128x96xf32, #tpu.memory_space<vmem>>, vector<128x96xf32>
    %c0_51 = arith.constant 0 : index
    %c0_52 = arith.constant 0 : index
    %50 = vector.load %arg8[%c0_51, %c0_52] : memref<1x96xf32, #tpu.memory_space<vmem>>, vector<1x96xf32>
    %51 = vector.shape_cast %50 : vector<1x96xf32> to vector<1x96xf32>
    %52 = vector.broadcast %51 : vector<1x96xf32> to vector<2x96xf32>
    %c0_53 = arith.constant 0 : index
    %c0_54 = arith.constant 0 : index
    %c0_55 = arith.constant 0 : index
    %53 = vector.load %arg1[%c0_53, %c0_54, %c0_55] : memref<5x2x128xf32, #tpu.memory_space<vmem>>, vector<1x2x128xf32>
    %54 = vector.shape_cast %53 : vector<1x2x128xf32> to vector<2x128xf32>
    %cst_56 = arith.constant dense<0.000000e+00> : vector<2x96xf32>
    %55 = tpu.matmul %54, %49, %cst_56 {dimension_numbers = #tpu.dot_dimension_numbers<[1], [0], [0], [1], [0, 0, 1, 1], [], []>} : vector<2x128xf32>, vector<128x96xf32>, vector<2x96xf32> -> vector<2x96xf32>
    %56 = arith.addf %55, %52 : vector<2x96xf32>
    %c0_57 = arith.constant 0 : index
    %c0_58 = arith.constant 0 : index
    %c0_59 = arith.constant 0 : index
    %57 = vector.load %arg15[%c0_57, %c0_58, %c0_59] : memref<5x2x96xf32, #tpu.memory_space<vmem>>, vector<1x2x96xf32>
    %58 = vector.shape_cast %57 : vector<1x2x96xf32> to vector<2x96xf32>
    %59 = vector.shape_cast %56 : vector<2x96xf32> to vector<1x2x96xf32>
    tpu.vector_store %arg15[%c0_57, %c0_58, %c0_59], %59 {strides = array<i32>} : memref<5x2x96xf32, #tpu.memory_space<vmem>>, vector<1x2x96xf32>,
    %c1_60 = arith.constant 1 : index
    %c0_61 = arith.constant 0 : index
    %c0_62 = arith.constant 0 : index
    %60 = vector.load %arg1[%c1_60, %c0_61, %c0_62] : memref<5x2x128xf32, #tpu.memory_space<vmem>>, vector<1x2x128xf32>
    %61 = vector.shape_cast %60 : vector<1x2x128xf32> to vector<2x128xf32>
    %cst_63 = arith.constant dense<0.000000e+00> : vector<2x96xf32>
    %62 = tpu.matmul %61, %49, %cst_63 {dimension_numbers = #tpu.dot_dimension_numbers<[1], [0], [0], [1], [0, 0, 1, 1], [], []>} : vector<2x128xf32>, vector<128x96xf32>, vector<2x96xf32> -> vector<2x96xf32>
    %63 = arith.addf %62, %52 : vector<2x96xf32>
    %c1_64 = arith.constant 1 : index
    %c0_65 = arith.constant 0 : index
    %c0_66 = arith.constant 0 : index
    %64 = vector.load %arg15[%c1_64, %c0_65, %c0_66] : memref<5x2x96xf32, #tpu.memory_space<vmem>>, vector<1x2x96xf32>
    %65 = vector.shape_cast %64 : vector<1x2x96xf32> to vector<2x96xf32>
    %66 = vector.shape_cast %63 : vector<2x96xf32> to vector<1x2x96xf32>
    tpu.vector_store %arg15[%c1_64, %c0_65, %c0_66], %66 {strides = array<i32>} : memref<5x2x96xf32, #tpu.memory_space<vmem>>, vector<1x2x96xf32>,
    %c2_67 = arith.constant 2 : index
    %c0_68 = arith.constant 0 : index
    %c0_69 = arith.constant 0 : index
    %67 = vector.load %arg1[%c2_67, %c0_68, %c0_69] : memref<5x2x128xf32, #tpu.memory_space<vmem>>, vector<1x2x128xf32>
    %68 = vector.shape_cast %67 : vector<1x2x128xf32> to vector<2x128xf32>
    %cst_70 = arith.constant dense<0.000000e+00> : vector<2x96xf32>
    %69 = tpu.matmul %68, %49, %cst_70 {dimension_numbers = #tpu.dot_dimension_numbers<[1], [0], [0], [1], [0, 0, 1, 1], [], []>} : vector<2x128xf32>, vector<128x96xf32>, vector<2x96xf32> -> vector<2x96xf32>
    %70 = arith.addf %69, %52 : vector<2x96xf32>
    %c2_71 = arith.constant 2 : index
    %c0_72 = arith.constant 0 : index
    %c0_73 = arith.constant 0 : index
    %71 = vector.load %arg15[%c2_71, %c0_72, %c0_73] : memref<5x2x96xf32, #tpu.memory_space<vmem>>, vector<1x2x96xf32>
    %72 = vector.shape_cast %71 : vector<1x2x96xf32> to vector<2x96xf32>
    %73 = vector.shape_cast %70 : vector<2x96xf32> to vector<1x2x96xf32>
    tpu.vector_store %arg15[%c2_71, %c0_72, %c0_73], %73 {strides = array<i32>} : memref<5x2x96xf32, #tpu.memory_space<vmem>>, vector<1x2x96xf32>,
    %c3_74 = arith.constant 3 : index
    %c0_75 = arith.constant 0 : index
    %c0_76 = arith.constant 0 : index
    %74 = vector.load %arg1[%c3_74, %c0_75, %c0_76] : memref<5x2x128xf32, #tpu.memory_space<vmem>>, vector<1x2x128xf32>
    %75 = vector.shape_cast %74 : vector<1x2x128xf32> to vector<2x128xf32>
    %cst_77 = arith.constant dense<0.000000e+00> : vector<2x96xf32>
    %76 = tpu.matmul %75, %49, %cst_77 {dimension_numbers = #tpu.dot_dimension_numbers<[1], [0], [0], [1], [0, 0, 1, 1], [], []>} : vector<2x128xf32>, vector<128x96xf32>, vector<2x96xf32> -> vector<2x96xf32>
    %77 = arith.addf %76, %52 : vector<2x96xf32>
    %c3_78 = arith.constant 3 : index
    %c0_79 = arith.constant 0 : index
    %c0_80 = arith.constant 0 : index
    %78 = vector.load %arg15[%c3_78, %c0_79, %c0_80] : memref<5x2x96xf32, #tpu.memory_space<vmem>>, vector<1x2x96xf32>
    %79 = vector.shape_cast %78 : vector<1x2x96xf32> to vector<2x96xf32>
    %80 = vector.shape_cast %77 : vector<2x96xf32> to vector<1x2x96xf32>
    tpu.vector_store %arg15[%c3_78, %c0_79, %c0_80], %80 {strides = array<i32>} : memref<5x2x96xf32, #tpu.memory_space<vmem>>, vector<1x2x96xf32>,
    %c4_81 = arith.constant 4 : index
    %c0_82 = arith.constant 0 : index
    %c0_83 = arith.constant 0 : index
    %81 = vector.load %arg1[%c4_81, %c0_82, %c0_83] : memref<5x2x128xf32, #tpu.memory_space<vmem>>, vector<1x2x128xf32>
    %82 = vector.shape_cast %81 : vector<1x2x128xf32> to vector<2x128xf32>
    %cst_84 = arith.constant dense<0.000000e+00> : vector<2x96xf32>
    %83 = tpu.matmul %82, %49, %cst_84 {dimension_numbers = #tpu.dot_dimension_numbers<[1], [0], [0], [1], [0, 0, 1, 1], [], []>} : vector<2x128xf32>, vector<128x96xf32>, vector<2x96xf32> -> vector<2x96xf32>
    %84 = arith.addf %83, %52 : vector<2x96xf32>
    %c4_85 = arith.constant 4 : index
    %c0_86 = arith.constant 0 : index
    %c0_87 = arith.constant 0 : index
    %85 = vector.load %arg15[%c4_85, %c0_86, %c0_87] : memref<5x2x96xf32, #tpu.memory_space<vmem>>, vector<1x2x96xf32>
    %86 = vector.shape_cast %85 : vector<1x2x96xf32> to vector<2x96xf32>
    %87 = vector.shape_cast %84 : vector<2x96xf32> to vector<1x2x96xf32>
    tpu.vector_store %arg15[%c4_85, %c0_86, %c0_87], %87 {strides = array<i32>} : memref<5x2x96xf32, #tpu.memory_space<vmem>>, vector<1x2x96xf32>,
    %c0_88 = arith.constant 0 : index
    %c0_89 = arith.constant 0 : index
    %88 = vector.load %arg3[%c0_88, %c0_89] : memref<32x32xf32, #tpu.memory_space<vmem>>, vector<32x32xf32>
    %c0_90 = arith.constant 0 : index
    %c0_91 = arith.constant 0 : index
    %89 = vector.load %arg4[%c0_90, %c0_91] : memref<1x32xf32, #tpu.memory_space<vmem>>, vector<1x32xf32>
    %90 = vector.shape_cast %89 : vector<1x32xf32> to vector<1x32xf32>
    %91 = vector.broadcast %90 : vector<1x32xf32> to vector<2x32xf32>
    %c0_92 = arith.constant 0 : index
    %c0_93 = arith.constant 0 : index
    %92 = vector.load %arg5[%c0_92, %c0_93] : memref<1x32xf32, #tpu.memory_space<vmem>>, vector<1x32xf32>
    %93 = vector.shape_cast %92 : vector<1x32xf32> to vector<1x1x32xf32>
    %c0_94 = arith.constant 0 : index
    %c0_95 = arith.constant 0 : index
    %94 = vector.load %arg6[%c0_94, %c0_95] : memref<32x96xf32, #tpu.memory_space<vmem>>, vector<32x96xf32>
    %c0_96 = arith.constant 0 : index
    %c0_97 = arith.constant 0 : index
    %95 = vector.load %arg9[%c0_96, %c0_97] : memref<32x96xf32, #tpu.memory_space<vmem>>, vector<32x96xf32>
    %c0_98 = arith.constant 0 : index
    %c0_99 = arith.constant 0 : index
    %96 = vector.load %arg10[%c0_98, %c0_99] : memref<1x96xf32, #tpu.memory_space<vmem>>, vector<1x96xf32>
    %97 = vector.shape_cast %96 : vector<1x96xf32> to vector<1x96xf32>
    %98 = vector.broadcast %97 : vector<1x96xf32> to vector<2x96xf32>
    %c0_100 = arith.constant 0 : index
    %c0_101 = arith.constant 0 : index
    %99 = vector.load %arg11[%c0_100, %c0_101] : memref<32x16xf32, #tpu.memory_space<vmem>>, vector<32x16xf32>
    %c0_102 = arith.constant 0 : index
    %c0_103 = arith.constant 0 : index
    %100 = vector.load %arg12[%c0_102, %c0_103] : memref<1x16xf32, #tpu.memory_space<vmem>>, vector<1x16xf32>
    %101 = vector.shape_cast %100 : vector<1x16xf32> to vector<1x16xf32>
    %102 = vector.broadcast %101 : vector<1x16xf32> to vector<2x16xf32>
    %cst_104 = arith.constant 0.000000e+00 : f32
    %103 = vector.broadcast %cst_104 : f32 to vector<2x32xf32>
    %c0_i32 = arith.constant 0 : i32
    %cst_105 = arith.constant dense<0.000000e+00> : vector<2x32xf32>
    %104 = tpu.matmul %103, %88, %cst_105 {dimension_numbers = #tpu.dot_dimension_numbers<[1], [0], [0], [1], [0, 0, 1, 1], [], []>} : vector<2x32xf32>, vector<32x32xf32>, vector<2x32xf32> -> vector<2x32xf32>
    %105 = arith.addf %104, %91 : vector<2x32xf32>
    %c0_106 = arith.constant 0 : index
    %c0_107 = arith.constant 0 : index
    %c0_108 = arith.constant 0 : index
    %106 = vector.load %arg14[%c0_106, %c0_107, %c0_108] : memref<8x2x32xf32, #tpu.memory_space<vmem>>, vector<8x2x32xf32>
    %107 = vector.shape_cast %105 : vector<2x32xf32> to vector<1x2x32xf32>
    %108 = vector.broadcast %107 : vector<1x2x32xf32> to vector<8x2x32xf32>
    %109 = arith.addf %106, %108 : vector<8x2x32xf32>
    %110 = math.tanh %109 : vector<8x2x32xf32>
    %111 = vector.broadcast %93 : vector<1x1x32xf32> to vector<8x2x32xf32>
    %112 = arith.mulf %110, %111 : vector<8x2x32xf32>
    %cst_109 = arith.constant dense<0.000000e+00> : vector<8x2xf32>
    %113 = vector.multi_reduction <add>, %112, %cst_109 [2] : vector<8x2x32xf32> to vector<8x2xf32>
    %114 = vector.shape_cast %113 : vector<8x2xf32> to vector<8x2x1xf32>
    %cst_110 = arith.constant dense<0xFF800000> : vector<2x1xf32>
    %115 = vector.multi_reduction <maximumf>, %114, %cst_110 [0] : vector<8x2x1xf32> to vector<2x1xf32>
    %116 = vector.shape_cast %115 : vector<2x1xf32> to vector<1x2x1xf32>
    %117 = vector.broadcast %116 : vector<1x2x1xf32> to vector<8x2x1xf32>
    %118 = arith.subf %114, %117 : vector<8x2x1xf32>
    %119 = math.exp %118 : vector<8x2x1xf32>
    %cst_111 = arith.constant dense<0.000000e+00> : vector<2x1xf32>
    %120 = vector.multi_reduction <add>, %119, %cst_111 [0] : vector<8x2x1xf32> to vector<2x1xf32>
    %121 = vector.shape_cast %120 : vector<2x1xf32> to vector<1x2x1xf32>
    %122 = vector.broadcast %121 : vector<1x2x1xf32> to vector<8x2x1xf32>
    %123 = arith.divf %119, %122 : vector<8x2x1xf32>
    %c0_112 = arith.constant 0 : index
    %c0_113 = arith.constant 0 : index
    %c0_114 = arith.constant 0 : index
    %124 = vector.load %arg0[%c0_112, %c0_113, %c0_114] : memref<8x2x32xf32, #tpu.memory_space<vmem>>, vector<8x2x32xf32>
    %125 = vector.broadcast %123 : vector<8x2x1xf32> to vector<8x2x32xf32>
    %126 = arith.mulf %124, %125 : vector<8x2x32xf32>
    %cst_115 = arith.constant dense<0.000000e+00> : vector<2x32xf32>
    %127 = vector.multi_reduction <add>, %126, %cst_115 [0] : vector<8x2x32xf32> to vector<2x32xf32>
    %cst_116 = arith.constant dense<0.000000e+00> : vector<2x96xf32>
    %128 = tpu.matmul %127, %94, %cst_116 {dimension_numbers = #tpu.dot_dimension_numbers<[1], [0], [0], [1], [0, 0, 1, 1], [], []>} : vector<2x32xf32>, vector<32x96xf32>, vector<2x96xf32> -> vector<2x96xf32>
    %129 = arith.index_cast %c0_i32 : i32 to index
    %c0_117 = arith.constant 0 : index
    %c0_118 = arith.constant 0 : index
    %130 = vector.load %arg15[%129, %c0_117, %c0_118] : memref<5x2x96xf32, #tpu.memory_space<vmem>>, vector<1x2x96xf32>
    %131 = vector.shape_cast %130 : vector<1x2x96xf32> to vector<2x96xf32>
    %132 = arith.addf %128, %131 : vector<2x96xf32>
    %cst_119 = arith.constant dense<0.000000e+00> : vector<2x96xf32>
    %133 = tpu.matmul %103, %95, %cst_119 {dimension_numbers = #tpu.dot_dimension_numbers<[1], [0], [0], [1], [0, 0, 1, 1], [], []>} : vector<2x32xf32>, vector<32x96xf32>, vector<2x96xf32> -> vector<2x96xf32>
    %134 = arith.addf %133, %98 : vector<2x96xf32>
    %135 = vector.extract_strided_slice %132 {offsets = [0, 0], sizes = [2, 64], strides = [1, 1]} : vector<2x96xf32> to vector<2x64xf32>
    %136 = vector.extract_strided_slice %134 {offsets = [0, 0], sizes = [2, 64], strides = [1, 1]} : vector<2x96xf32> to vector<2x64xf32>
    %137 = arith.addf %135, %136 : vector<2x64xf32>
    %138 = arith.negf %137 : vector<2x64xf32>
    %139 = math.exp %138 : vector<2x64xf32>
    %cst_120 = arith.constant 1.000000e+00 : f32
    %140 = vector.broadcast %cst_120 : f32 to vector<2x64xf32>
    %141 = arith.addf %140, %139 : vector<2x64xf32>
    %142 = arith.divf %140, %141 : vector<2x64xf32>
    %143 = vector.extract_strided_slice %142 {offsets = [0, 0], sizes = [2, 32], strides = [1, 1]} : vector<2x64xf32> to vector<2x32xf32>
    %144 = vector.extract_strided_slice %142 {offsets = [0, 32], sizes = [2, 32], strides = [1, 1]} : vector<2x64xf32> to vector<2x32xf32>
    %145 = vector.extract_strided_slice %132 {offsets = [0, 64], sizes = [2, 32], strides = [1, 1]} : vector<2x96xf32> to vector<2x32xf32>
    %146 = vector.extract_strided_slice %134 {offsets = [0, 64], sizes = [2, 32], strides = [1, 1]} : vector<2x96xf32> to vector<2x32xf32>
    %147 = arith.mulf %143, %146 : vector<2x32xf32>
    %148 = arith.addf %145, %147 : vector<2x32xf32>
    %149 = math.tanh %148 : vector<2x32xf32>
    %cst_121 = arith.constant 1.000000e+00 : f32
    %150 = vector.broadcast %cst_121 : f32 to vector<2x32xf32>
    %151 = arith.subf %150, %144 : vector<2x32xf32>
    %152 = arith.mulf %151, %149 : vector<2x32xf32>
    %153 = arith.mulf %144, %103 : vector<2x32xf32>
    %154 = arith.addf %152, %153 : vector<2x32xf32>
    %cst_122 = arith.constant dense<0.000000e+00> : vector<2x16xf32>
    %155 = tpu.matmul %154, %99, %cst_122 {dimension_numbers = #tpu.dot_dimension_numbers<[1], [0], [0], [1], [0, 0, 1, 1], [], []>} : vector<2x32xf32>, vector<32x16xf32>, vector<2x16xf32> -> vector<2x16xf32>
    %156 = arith.addf %155, %102 : vector<2x16xf32>
    %157 = arith.index_cast %c0_i32 : i32 to index
    %c0_123 = arith.constant 0 : index
    %c0_124 = arith.constant 0 : index
    %158 = vector.load %arg13[%157, %c0_123, %c0_124] : memref<5x2x16xf32, #tpu.memory_space<vmem>>, vector<1x2x16xf32>
    %159 = vector.shape_cast %158 : vector<1x2x16xf32> to vector<2x16xf32>
    %160 = vector.shape_cast %156 : vector<2x16xf32> to vector<1x2x16xf32>
    tpu.vector_store %arg13[%157, %c0_123, %c0_124], %160 {strides = array<i32>} : memref<5x2x16xf32, #tpu.memory_space<vmem>>, vector<1x2x16xf32>,
    %c1_i32 = arith.constant 1 : i32
    %cst_125 = arith.constant dense<0.000000e+00> : vector<2x32xf32>
    %161 = tpu.matmul %154, %88, %cst_125 {dimension_numbers = #tpu.dot_dimension_numbers<[1], [0], [0], [1], [0, 0, 1, 1], [], []>} : vector<2x32xf32>, vector<32x32xf32>, vector<2x32xf32> -> vector<2x32xf32>
    %162 = arith.addf %161, %91 : vector<2x32xf32>
    %c0_126 = arith.constant 0 : index
    %c0_127 = arith.constant 0 : index
    %c0_128 = arith.constant 0 : index
    %163 = vector.load %arg14[%c0_126, %c0_127, %c0_128] : memref<8x2x32xf32, #tpu.memory_space<vmem>>, vector<8x2x32xf32>
    %164 = vector.shape_cast %162 : vector<2x32xf32> to vector<1x2x32xf32>
    %165 = vector.broadcast %164 : vector<1x2x32xf32> to vector<8x2x32xf32>
    %166 = arith.addf %163, %165 : vector<8x2x32xf32>
    %167 = math.tanh %166 : vector<8x2x32xf32>
    %168 = vector.broadcast %93 : vector<1x1x32xf32> to vector<8x2x32xf32>
    %169 = arith.mulf %167, %168 : vector<8x2x32xf32>
    %cst_129 = arith.constant dense<0.000000e+00> : vector<8x2xf32>
    %170 = vector.multi_reduction <add>, %169, %cst_129 [2] : vector<8x2x32xf32> to vector<8x2xf32>
    %171 = vector.shape_cast %170 : vector<8x2xf32> to vector<8x2x1xf32>
    %cst_130 = arith.constant dense<0xFF800000> : vector<2x1xf32>
    %172 = vector.multi_reduction <maximumf>, %171, %cst_130 [0] : vector<8x2x1xf32> to vector<2x1xf32>
    %173 = vector.shape_cast %172 : vector<2x1xf32> to vector<1x2x1xf32>
    %174 = vector.broadcast %173 : vector<1x2x1xf32> to vector<8x2x1xf32>
    %175 = arith.subf %171, %174 : vector<8x2x1xf32>
    %176 = math.exp %175 : vector<8x2x1xf32>
    %cst_131 = arith.constant dense<0.000000e+00> : vector<2x1xf32>
    %177 = vector.multi_reduction <add>, %176, %cst_131 [0] : vector<8x2x1xf32> to vector<2x1xf32>
    %178 = vector.shape_cast %177 : vector<2x1xf32> to vector<1x2x1xf32>
    %179 = vector.broadcast %178 : vector<1x2x1xf32> to vector<8x2x1xf32>
    %180 = arith.divf %176, %179 : vector<8x2x1xf32>
    %c0_132 = arith.constant 0 : index
    %c0_133 = arith.constant 0 : index
    %c0_134 = arith.constant 0 : index
    %181 = vector.load %arg0[%c0_132, %c0_133, %c0_134] : memref<8x2x32xf32, #tpu.memory_space<vmem>>, vector<8x2x32xf32>
    %182 = vector.broadcast %180 : vector<8x2x1xf32> to vector<8x2x32xf32>
    %183 = arith.mulf %181, %182 : vector<8x2x32xf32>
    %cst_135 = arith.constant dense<0.000000e+00> : vector<2x32xf32>
    %184 = vector.multi_reduction <add>, %183, %cst_135 [0] : vector<8x2x32xf32> to vector<2x32xf32>
    %cst_136 = arith.constant dense<0.000000e+00> : vector<2x96xf32>
    %185 = tpu.matmul %184, %94, %cst_136 {dimension_numbers = #tpu.dot_dimension_numbers<[1], [0], [0], [1], [0, 0, 1, 1], [], []>} : vector<2x32xf32>, vector<32x96xf32>, vector<2x96xf32> -> vector<2x96xf32>
    %186 = arith.index_cast %c1_i32 : i32 to index
    %c0_137 = arith.constant 0 : index
    %c0_138 = arith.constant 0 : index
    %187 = vector.load %arg15[%186, %c0_137, %c0_138] : memref<5x2x96xf32, #tpu.memory_space<vmem>>, vector<1x2x96xf32>
    %188 = vector.shape_cast %187 : vector<1x2x96xf32> to vector<2x96xf32>
    %189 = arith.addf %185, %188 : vector<2x96xf32>
    %cst_139 = arith.constant dense<0.000000e+00> : vector<2x96xf32>
    %190 = tpu.matmul %154, %95, %cst_139 {dimension_numbers = #tpu.dot_dimension_numbers<[1], [0], [0], [1], [0, 0, 1, 1], [], []>} : vector<2x32xf32>, vector<32x96xf32>, vector<2x96xf32> -> vector<2x96xf32>
    %191 = arith.addf %190, %98 : vector<2x96xf32>
    %192 = vector.extract_strided_slice %189 {offsets = [0, 0], sizes = [2, 64], strides = [1, 1]} : vector<2x96xf32> to vector<2x64xf32>
    %193 = vector.extract_strided_slice %191 {offsets = [0, 0], sizes = [2, 64], strides = [1, 1]} : vector<2x96xf32> to vector<2x64xf32>
    %194 = arith.addf %192, %193 : vector<2x64xf32>
    %195 = arith.negf %194 : vector<2x64xf32>
    %196 = math.exp %195 : vector<2x64xf32>
    %cst_140 = arith.constant 1.000000e+00 : f32
    %197 = vector.broadcast %cst_140 : f32 to vector<2x64xf32>
    %198 = arith.addf %197, %196 : vector<2x64xf32>
    %199 = arith.divf %197, %198 : vector<2x64xf32>
    %200 = vector.extract_strided_slice %199 {offsets = [0, 0], sizes = [2, 32], strides = [1, 1]} : vector<2x64xf32> to vector<2x32xf32>
    %201 = vector.extract_strided_slice %199 {offsets = [0, 32], sizes = [2, 32], strides = [1, 1]} : vector<2x64xf32> to vector<2x32xf32>
    %202 = vector.extract_strided_slice %189 {offsets = [0, 64], sizes = [2, 32], strides = [1, 1]} : vector<2x96xf32> to vector<2x32xf32>
    %203 = vector.extract_strided_slice %191 {offsets = [0, 64], sizes = [2, 32], strides = [1, 1]} : vector<2x96xf32> to vector<2x32xf32>
    %204 = arith.mulf %200, %203 : vector<2x32xf32>
    %205 = arith.addf %202, %204 : vector<2x32xf32>
    %206 = math.tanh %205 : vector<2x32xf32>
    %cst_141 = arith.constant 1.000000e+00 : f32
    %207 = vector.broadcast %cst_141 : f32 to vector<2x32xf32>
    %208 = arith.subf %207, %201 : vector<2x32xf32>
    %209 = arith.mulf %208, %206 : vector<2x32xf32>
    %210 = arith.mulf %201, %154 : vector<2x32xf32>
    %211 = arith.addf %209, %210 : vector<2x32xf32>
    %cst_142 = arith.constant dense<0.000000e+00> : vector<2x16xf32>
    %212 = tpu.matmul %211, %99, %cst_142 {dimension_numbers = #tpu.dot_dimension_numbers<[1], [0], [0], [1], [0, 0, 1, 1], [], []>} : vector<2x32xf32>, vector<32x16xf32>, vector<2x16xf32> -> vector<2x16xf32>
    %213 = arith.addf %212, %102 : vector<2x16xf32>
    %214 = arith.index_cast %c1_i32 : i32 to index
    %c0_143 = arith.constant 0 : index
    %c0_144 = arith.constant 0 : index
    %215 = vector.load %arg13[%214, %c0_143, %c0_144] : memref<5x2x16xf32, #tpu.memory_space<vmem>>, vector<1x2x16xf32>
    %216 = vector.shape_cast %215 : vector<1x2x16xf32> to vector<2x16xf32>
    %217 = vector.shape_cast %213 : vector<2x16xf32> to vector<1x2x16xf32>
    tpu.vector_store %arg13[%214, %c0_143, %c0_144], %217 {strides = array<i32>} : memref<5x2x16xf32, #tpu.memory_space<vmem>>, vector<1x2x16xf32>,
    %c2_i32 = arith.constant 2 : i32
    %cst_145 = arith.constant dense<0.000000e+00> : vector<2x32xf32>
    %218 = tpu.matmul %211, %88, %cst_145 {dimension_numbers = #tpu.dot_dimension_numbers<[1], [0], [0], [1], [0, 0, 1, 1], [], []>} : vector<2x32xf32>, vector<32x32xf32>, vector<2x32xf32> -> vector<2x32xf32>
    %219 = arith.addf %218, %91 : vector<2x32xf32>
    %c0_146 = arith.constant 0 : index
    %c0_147 = arith.constant 0 : index
    %c0_148 = arith.constant 0 : index
    %220 = vector.load %arg14[%c0_146, %c0_147, %c0_148] : memref<8x2x32xf32, #tpu.memory_space<vmem>>, vector<8x2x32xf32>
    %221 = vector.shape_cast %219 : vector<2x32xf32> to vector<1x2x32xf32>
    %222 = vector.broadcast %221 : vector<1x2x32xf32> to vector<8x2x32xf32>
    %223 = arith.addf %220, %222 : vector<8x2x32xf32>
    %224 = math.tanh %223 : vector<8x2x32xf32>
    %225 = vector.broadcast %93 : vector<1x1x32xf32> to vector<8x2x32xf32>
    %226 = arith.mulf %224, %225 : vector<8x2x32xf32>
    %cst_149 = arith.constant dense<0.000000e+00> : vector<8x2xf32>
    %227 = vector.multi_reduction <add>, %226, %cst_149 [2] : vector<8x2x32xf32> to vector<8x2xf32>
    %228 = vector.shape_cast %227 : vector<8x2xf32> to vector<8x2x1xf32>
    %cst_150 = arith.constant dense<0xFF800000> : vector<2x1xf32>
    %229 = vector.multi_reduction <maximumf>, %228, %cst_150 [0] : vector<8x2x1xf32> to vector<2x1xf32>
    %230 = vector.shape_cast %229 : vector<2x1xf32> to vector<1x2x1xf32>
    %231 = vector.broadcast %230 : vector<1x2x1xf32> to vector<8x2x1xf32>
    %232 = arith.subf %228, %231 : vector<8x2x1xf32>
    %233 = math.exp %232 : vector<8x2x1xf32>
    %cst_151 = arith.constant dense<0.000000e+00> : vector<2x1xf32>
    %234 = vector.multi_reduction <add>, %233, %cst_151 [0] : vector<8x2x1xf32> to vector<2x1xf32>
    %235 = vector.shape_cast %234 : vector<2x1xf32> to vector<1x2x1xf32>
    %236 = vector.broadcast %235 : vector<1x2x1xf32> to vector<8x2x1xf32>
    %237 = arith.divf %233, %236 : vector<8x2x1xf32>
    %c0_152 = arith.constant 0 : index
    %c0_153 = arith.constant 0 : index
    %c0_154 = arith.constant 0 : index
    %238 = vector.load %arg0[%c0_152, %c0_153, %c0_154] : memref<8x2x32xf32, #tpu.memory_space<vmem>>, vector<8x2x32xf32>
    %239 = vector.broadcast %237 : vector<8x2x1xf32> to vector<8x2x32xf32>
    %240 = arith.mulf %238, %239 : vector<8x2x32xf32>
    %cst_155 = arith.constant dense<0.000000e+00> : vector<2x32xf32>
    %241 = vector.multi_reduction <add>, %240, %cst_155 [0] : vector<8x2x32xf32> to vector<2x32xf32>
    %cst_156 = arith.constant dense<0.000000e+00> : vector<2x96xf32>
    %242 = tpu.matmul %241, %94, %cst_156 {dimension_numbers = #tpu.dot_dimension_numbers<[1], [0], [0], [1], [0, 0, 1, 1], [], []>} : vector<2x32xf32>, vector<32x96xf32>, vector<2x96xf32> -> vector<2x96xf32>
    %243 = arith.index_cast %c2_i32 : i32 to index
    %c0_157 = arith.constant 0 : index
    %c0_158 = arith.constant 0 : index
    %244 = vector.load %arg15[%243, %c0_157, %c0_158] : memref<5x2x96xf32, #tpu.memory_space<vmem>>, vector<1x2x96xf32>
    %245 = vector.shape_cast %244 : vector<1x2x96xf32> to vector<2x96xf32>
    %246 = arith.addf %242, %245 : vector<2x96xf32>
    %cst_159 = arith.constant dense<0.000000e+00> : vector<2x96xf32>
    %247 = tpu.matmul %211, %95, %cst_159 {dimension_numbers = #tpu.dot_dimension_numbers<[1], [0], [0], [1], [0, 0, 1, 1], [], []>} : vector<2x32xf32>, vector<32x96xf32>, vector<2x96xf32> -> vector<2x96xf32>
    %248 = arith.addf %247, %98 : vector<2x96xf32>
    %249 = vector.extract_strided_slice %246 {offsets = [0, 0], sizes = [2, 64], strides = [1, 1]} : vector<2x96xf32> to vector<2x64xf32>
    %250 = vector.extract_strided_slice %248 {offsets = [0, 0], sizes = [2, 64], strides = [1, 1]} : vector<2x96xf32> to vector<2x64xf32>
    %251 = arith.addf %249, %250 : vector<2x64xf32>
    %252 = arith.negf %251 : vector<2x64xf32>
    %253 = math.exp %252 : vector<2x64xf32>
    %cst_160 = arith.constant 1.000000e+00 : f32
    %254 = vector.broadcast %cst_160 : f32 to vector<2x64xf32>
    %255 = arith.addf %254, %253 : vector<2x64xf32>
    %256 = arith.divf %254, %255 : vector<2x64xf32>
    %257 = vector.extract_strided_slice %256 {offsets = [0, 0], sizes = [2, 32], strides = [1, 1]} : vector<2x64xf32> to vector<2x32xf32>
    %258 = vector.extract_strided_slice %256 {offsets = [0, 32], sizes = [2, 32], strides = [1, 1]} : vector<2x64xf32> to vector<2x32xf32>
    %259 = vector.extract_strided_slice %246 {offsets = [0, 64], sizes = [2, 32], strides = [1, 1]} : vector<2x96xf32> to vector<2x32xf32>
    %260 = vector.extract_strided_slice %248 {offsets = [0, 64], sizes = [2, 32], strides = [1, 1]} : vector<2x96xf32> to vector<2x32xf32>
    %261 = arith.mulf %257, %260 : vector<2x32xf32>
    %262 = arith.addf %259, %261 : vector<2x32xf32>
    %263 = math.tanh %262 : vector<2x32xf32>
    %cst_161 = arith.constant 1.000000e+00 : f32
    %264 = vector.broadcast %cst_161 : f32 to vector<2x32xf32>
    %265 = arith.subf %264, %258 : vector<2x32xf32>
    %266 = arith.mulf %265, %263 : vector<2x32xf32>
    %267 = arith.mulf %258, %211 : vector<2x32xf32>
    %268 = arith.addf %266, %267 : vector<2x32xf32>
    %cst_162 = arith.constant dense<0.000000e+00> : vector<2x16xf32>
    %269 = tpu.matmul %268, %99, %cst_162 {dimension_numbers = #tpu.dot_dimension_numbers<[1], [0], [0], [1], [0, 0, 1, 1], [], []>} : vector<2x32xf32>, vector<32x16xf32>, vector<2x16xf32> -> vector<2x16xf32>
    %270 = arith.addf %269, %102 : vector<2x16xf32>
    %271 = arith.index_cast %c2_i32 : i32 to index
    %c0_163 = arith.constant 0 : index
    %c0_164 = arith.constant 0 : index
    %272 = vector.load %arg13[%271, %c0_163, %c0_164] : memref<5x2x16xf32, #tpu.memory_space<vmem>>, vector<1x2x16xf32>
    %273 = vector.shape_cast %272 : vector<1x2x16xf32> to vector<2x16xf32>
    %274 = vector.shape_cast %270 : vector<2x16xf32> to vector<1x2x16xf32>
    tpu.vector_store %arg13[%271, %c0_163, %c0_164], %274 {strides = array<i32>} : memref<5x2x16xf32, #tpu.memory_space<vmem>>, vector<1x2x16xf32>,
    %c3_i32 = arith.constant 3 : i32
    %cst_165 = arith.constant dense<0.000000e+00> : vector<2x32xf32>
    %275 = tpu.matmul %268, %88, %cst_165 {dimension_numbers = #tpu.dot_dimension_numbers<[1], [0], [0], [1], [0, 0, 1, 1], [], []>} : vector<2x32xf32>, vector<32x32xf32>, vector<2x32xf32> -> vector<2x32xf32>
    %276 = arith.addf %275, %91 : vector<2x32xf32>
    %c0_166 = arith.constant 0 : index
    %c0_167 = arith.constant 0 : index
    %c0_168 = arith.constant 0 : index
    %277 = vector.load %arg14[%c0_166, %c0_167, %c0_168] : memref<8x2x32xf32, #tpu.memory_space<vmem>>, vector<8x2x32xf32>
    %278 = vector.shape_cast %276 : vector<2x32xf32> to vector<1x2x32xf32>
    %279 = vector.broadcast %278 : vector<1x2x32xf32> to vector<8x2x32xf32>
    %280 = arith.addf %277, %279 : vector<8x2x32xf32>
    %281 = math.tanh %280 : vector<8x2x32xf32>
    %282 = vector.broadcast %93 : vector<1x1x32xf32> to vector<8x2x32xf32>
    %283 = arith.mulf %281, %282 : vector<8x2x32xf32>
    %cst_169 = arith.constant dense<0.000000e+00> : vector<8x2xf32>
    %284 = vector.multi_reduction <add>, %283, %cst_169 [2] : vector<8x2x32xf32> to vector<8x2xf32>
    %285 = vector.shape_cast %284 : vector<8x2xf32> to vector<8x2x1xf32>
    %cst_170 = arith.constant dense<0xFF800000> : vector<2x1xf32>
    %286 = vector.multi_reduction <maximumf>, %285, %cst_170 [0] : vector<8x2x1xf32> to vector<2x1xf32>
    %287 = vector.shape_cast %286 : vector<2x1xf32> to vector<1x2x1xf32>
    %288 = vector.broadcast %287 : vector<1x2x1xf32> to vector<8x2x1xf32>
    %289 = arith.subf %285, %288 : vector<8x2x1xf32>
    %290 = math.exp %289 : vector<8x2x1xf32>
    %cst_171 = arith.constant dense<0.000000e+00> : vector<2x1xf32>
    %291 = vector.multi_reduction <add>, %290, %cst_171 [0] : vector<8x2x1xf32> to vector<2x1xf32>
    %292 = vector.shape_cast %291 : vector<2x1xf32> to vector<1x2x1xf32>
    %293 = vector.broadcast %292 : vector<1x2x1xf32> to vector<8x2x1xf32>
    %294 = arith.divf %290, %293 : vector<8x2x1xf32>
    %c0_172 = arith.constant 0 : index
    %c0_173 = arith.constant 0 : index
    %c0_174 = arith.constant 0 : index
    %295 = vector.load %arg0[%c0_172, %c0_173, %c0_174] : memref<8x2x32xf32, #tpu.memory_space<vmem>>, vector<8x2x32xf32>
    %296 = vector.broadcast %294 : vector<8x2x1xf32> to vector<8x2x32xf32>
    %297 = arith.mulf %295, %296 : vector<8x2x32xf32>
    %cst_175 = arith.constant dense<0.000000e+00> : vector<2x32xf32>
    %298 = vector.multi_reduction <add>, %297, %cst_175 [0] : vector<8x2x32xf32> to vector<2x32xf32>
    %cst_176 = arith.constant dense<0.000000e+00> : vector<2x96xf32>
    %299 = tpu.matmul %298, %94, %cst_176 {dimension_numbers = #tpu.dot_dimension_numbers<[1], [0], [0], [1], [0, 0, 1, 1], [], []>} : vector<2x32xf32>, vector<32x96xf32>, vector<2x96xf32> -> vector<2x96xf32>
    %300 = arith.index_cast %c3_i32 : i32 to index
    %c0_177 = arith.constant 0 : index
    %c0_178 = arith.constant 0 : index
    %301 = vector.load %arg15[%300, %c0_177, %c0_178] : memref<5x2x96xf32, #tpu.memory_space<vmem>>, vector<1x2x96xf32>
    %302 = vector.shape_cast %301 : vector<1x2x96xf32> to vector<2x96xf32>
    %303 = arith.addf %299, %302 : vector<2x96xf32>
    %cst_179 = arith.constant dense<0.000000e+00> : vector<2x96xf32>
    %304 = tpu.matmul %268, %95, %cst_179 {dimension_numbers = #tpu.dot_dimension_numbers<[1], [0], [0], [1], [0, 0, 1, 1], [], []>} : vector<2x32xf32>, vector<32x96xf32>, vector<2x96xf32> -> vector<2x96xf32>
    %305 = arith.addf %304, %98 : vector<2x96xf32>
    %306 = vector.extract_strided_slice %303 {offsets = [0, 0], sizes = [2, 64], strides = [1, 1]} : vector<2x96xf32> to vector<2x64xf32>
    %307 = vector.extract_strided_slice %305 {offsets = [0, 0], sizes = [2, 64], strides = [1, 1]} : vector<2x96xf32> to vector<2x64xf32>
    %308 = arith.addf %306, %307 : vector<2x64xf32>
    %309 = arith.negf %308 : vector<2x64xf32>
    %310 = math.exp %309 : vector<2x64xf32>
    %cst_180 = arith.constant 1.000000e+00 : f32
    %311 = vector.broadcast %cst_180 : f32 to vector<2x64xf32>
    %312 = arith.addf %311, %310 : vector<2x64xf32>
    %313 = arith.divf %311, %312 : vector<2x64xf32>
    %314 = vector.extract_strided_slice %313 {offsets = [0, 0], sizes = [2, 32], strides = [1, 1]} : vector<2x64xf32> to vector<2x32xf32>
    %315 = vector.extract_strided_slice %313 {offsets = [0, 32], sizes = [2, 32], strides = [1, 1]} : vector<2x64xf32> to vector<2x32xf32>
    %316 = vector.extract_strided_slice %303 {offsets = [0, 64], sizes = [2, 32], strides = [1, 1]} : vector<2x96xf32> to vector<2x32xf32>
    %317 = vector.extract_strided_slice %305 {offsets = [0, 64], sizes = [2, 32], strides = [1, 1]} : vector<2x96xf32> to vector<2x32xf32>
    %318 = arith.mulf %314, %317 : vector<2x32xf32>
    %319 = arith.addf %316, %318 : vector<2x32xf32>
    %320 = math.tanh %319 : vector<2x32xf32>
    %cst_181 = arith.constant 1.000000e+00 : f32
    %321 = vector.broadcast %cst_181 : f32 to vector<2x32xf32>
    %322 = arith.subf %321, %315 : vector<2x32xf32>
    %323 = arith.mulf %322, %320 : vector<2x32xf32>
    %324 = arith.mulf %315, %268 : vector<2x32xf32>
    %325 = arith.addf %323, %324 : vector<2x32xf32>
    %cst_182 = arith.constant dense<0.000000e+00> : vector<2x16xf32>
    %326 = tpu.matmul %325, %99, %cst_182 {dimension_numbers = #tpu.dot_dimension_numbers<[1], [0], [0], [1], [0, 0, 1, 1], [], []>} : vector<2x32xf32>, vector<32x16xf32>, vector<2x16xf32> -> vector<2x16xf32>
    %327 = arith.addf %326, %102 : vector<2x16xf32>
    %328 = arith.index_cast %c3_i32 : i32 to index
    %c0_183 = arith.constant 0 : index
    %c0_184 = arith.constant 0 : index
    %329 = vector.load %arg13[%328, %c0_183, %c0_184] : memref<5x2x16xf32, #tpu.memory_space<vmem>>, vector<1x2x16xf32>
    %330 = vector.shape_cast %329 : vector<1x2x16xf32> to vector<2x16xf32>
    %331 = vector.shape_cast %327 : vector<2x16xf32> to vector<1x2x16xf32>
    tpu.vector_store %arg13[%328, %c0_183, %c0_184], %331 {strides = array<i32>} : memref<5x2x16xf32, #tpu.memory_space<vmem>>, vector<1x2x16xf32>,
    %c4_i32 = arith.constant 4 : i32
    %cst_185 = arith.constant dense<0.000000e+00> : vector<2x32xf32>
    %332 = tpu.matmul %325, %88, %cst_185 {dimension_numbers = #tpu.dot_dimension_numbers<[1], [0], [0], [1], [0, 0, 1, 1], [], []>} : vector<2x32xf32>, vector<32x32xf32>, vector<2x32xf32> -> vector<2x32xf32>
    %333 = arith.addf %332, %91 : vector<2x32xf32>
    %c0_186 = arith.constant 0 : index
    %c0_187 = arith.constant 0 : index
    %c0_188 = arith.constant 0 : index
    %334 = vector.load %arg14[%c0_186, %c0_187, %c0_188] : memref<8x2x32xf32, #tpu.memory_space<vmem>>, vector<8x2x32xf32>
    %335 = vector.shape_cast %333 : vector<2x32xf32> to vector<1x2x32xf32>
    %336 = vector.broadcast %335 : vector<1x2x32xf32> to vector<8x2x32xf32>
    %337 = arith.addf %334, %336 : vector<8x2x32xf32>
    %338 = math.tanh %337 : vector<8x2x32xf32>
    %339 = vector.broadcast %93 : vector<1x1x32xf32> to vector<8x2x32xf32>
    %340 = arith.mulf %338, %339 : vector<8x2x32xf32>
    %cst_189 = arith.constant dense<0.000000e+00> : vector<8x2xf32>
    %341 = vector.multi_reduction <add>, %340, %cst_189 [2] : vector<8x2x32xf32> to vector<8x2xf32>
    %342 = vector.shape_cast %341 : vector<8x2xf32> to vector<8x2x1xf32>
    %cst_190 = arith.constant dense<0xFF800000> : vector<2x1xf32>
    %343 = vector.multi_reduction <maximumf>, %342, %cst_190 [0] : vector<8x2x1xf32> to vector<2x1xf32>
    %344 = vector.shape_cast %343 : vector<2x1xf32> to vector<1x2x1xf32>
    %345 = vector.broadcast %344 : vector<1x2x1xf32> to vector<8x2x1xf32>
    %346 = arith.subf %342, %345 : vector<8x2x1xf32>
    %347 = math.exp %346 : vector<8x2x1xf32>
    %cst_191 = arith.constant dense<0.000000e+00> : vector<2x1xf32>
    %348 = vector.multi_reduction <add>, %347, %cst_191 [0] : vector<8x2x1xf32> to vector<2x1xf32>
    %349 = vector.shape_cast %348 : vector<2x1xf32> to vector<1x2x1xf32>
    %350 = vector.broadcast %349 : vector<1x2x1xf32> to vector<8x2x1xf32>
    %351 = arith.divf %347, %350 : vector<8x2x1xf32>
    %c0_192 = arith.constant 0 : index
    %c0_193 = arith.constant 0 : index
    %c0_194 = arith.constant 0 : index
    %352 = vector.load %arg0[%c0_192, %c0_193, %c0_194] : memref<8x2x32xf32, #tpu.memory_space<vmem>>, vector<8x2x32xf32>
    %353 = vector.broadcast %351 : vector<8x2x1xf32> to vector<8x2x32xf32>
    %354 = arith.mulf %352, %353 : vector<8x2x32xf32>
    %cst_195 = arith.constant dense<0.000000e+00> : vector<2x32xf32>
    %355 = vector.multi_reduction <add>, %354, %cst_195 [0] : vector<8x2x32xf32> to vector<2x32xf32>
    %cst_196 = arith.constant dense<0.000000e+00> : vector<2x96xf32>
    %356 = tpu.matmul %355, %94, %cst_196 {dimension_numbers = #tpu.dot_dimension_numbers<[1], [0], [0], [1], [0, 0, 1, 1], [], []>} : vector<2x32xf32>, vector<32x96xf32>, vector<2x96xf32> -> vector<2x96xf32>
    %357 = arith.index_cast %c4_i32 : i32 to index
    %c0_197 = arith.constant 0 : index
    %c0_198 = arith.constant 0 : index
    %358 = vector.load %arg15[%357, %c0_197, %c0_198] : memref<5x2x96xf32, #tpu.memory_space<vmem>>, vector<1x2x96xf32>
    %359 = vector.shape_cast %358 : vector<1x2x96xf32> to vector<2x96xf32>
    %360 = arith.addf %356, %359 : vector<2x96xf32>
    %cst_199 = arith.constant dense<0.000000e+00> : vector<2x96xf32>
    %361 = tpu.matmul %325, %95, %cst_199 {dimension_numbers = #tpu.dot_dimension_numbers<[1], [0], [0], [1], [0, 0, 1, 1], [], []>} : vector<2x32xf32>, vector<32x96xf32>, vector<2x96xf32> -> vector<2x96xf32>
    %362 = arith.addf %361, %98 : vector<2x96xf32>
    %363 = vector.extract_strided_slice %360 {offsets = [0, 0], sizes = [2, 64], strides = [1, 1]} : vector<2x96xf32> to vector<2x64xf32>
    %364 = vector.extract_strided_slice %362 {offsets = [0, 0], sizes = [2, 64], strides = [1, 1]} : vector<2x96xf32> to vector<2x64xf32>
    %365 = arith.addf %363, %364 : vector<2x64xf32>
    %366 = arith.negf %365 : vector<2x64xf32>
    %367 = math.exp %366 : vector<2x64xf32>
    %cst_200 = arith.constant 1.000000e+00 : f32
    %368 = vector.broadcast %cst_200 : f32 to vector<2x64xf32>
    %369 = arith.addf %368, %367 : vector<2x64xf32>
    %370 = arith.divf %368, %369 : vector<2x64xf32>
    %371 = vector.extract_strided_slice %370 {offsets = [0, 0], sizes = [2, 32], strides = [1, 1]} : vector<2x64xf32> to vector<2x32xf32>
    %372 = vector.extract_strided_slice %370 {offsets = [0, 32], sizes = [2, 32], strides = [1, 1]} : vector<2x64xf32> to vector<2x32xf32>
    %373 = vector.extract_strided_slice %360 {offsets = [0, 64], sizes = [2, 32], strides = [1, 1]} : vector<2x96xf32> to vector<2x32xf32>
    %374 = vector.extract_strided_slice %362 {offsets = [0, 64], sizes = [2, 32], strides = [1, 1]} : vector<2x96xf32> to vector<2x32xf32>
    %375 = arith.mulf %371, %374 : vector<2x32xf32>
    %376 = arith.addf %373, %375 : vector<2x32xf32>
    %377 = math.tanh %376 : vector<2x32xf32>
    %cst_201 = arith.constant 1.000000e+00 : f32
    %378 = vector.broadcast %cst_201 : f32 to vector<2x32xf32>
    %379 = arith.subf %378, %372 : vector<2x32xf32>
    %380 = arith.mulf %379, %377 : vector<2x32xf32>
    %381 = arith.mulf %372, %325 : vector<2x32xf32>
    %382 = arith.addf %380, %381 : vector<2x32xf32>
    %cst_202 = arith.constant dense<0.000000e+00> : vector<2x16xf32>
    %383 = tpu.matmul %382, %99, %cst_202 {dimension_numbers = #tpu.dot_dimension_numbers<[1], [0], [0], [1], [0, 0, 1, 1], [], []>} : vector<2x32xf32>, vector<32x16xf32>, vector<2x16xf32> -> vector<2x16xf32>
    %384 = arith.addf %383, %102 : vector<2x16xf32>
    %385 = arith.index_cast %c4_i32 : i32 to index
    %c0_203 = arith.constant 0 : index
    %c0_204 = arith.constant 0 : index
    %386 = vector.load %arg13[%385, %c0_203, %c0_204] : memref<5x2x16xf32, #tpu.memory_space<vmem>>, vector<1x2x16xf32>
    %387 = vector.shape_cast %386 : vector<1x2x16xf32> to vector<2x16xf32>
    %388 = vector.shape_cast %384 : vector<2x16xf32> to vector<1x2x16xf32>
    tpu.vector_store %arg13[%385, %c0_203, %c0_204], %388 {strides = array<i32>} : memref<5x2x16xf32, #tpu.memory_space<vmem>>, vector<1x2x16xf32>,
    %c5_i32 = arith.constant 5 : i32
    return
  }
}

</mosaic_0001>

<llo_original>
// kernel: tpu_custom_call.1
$region0: #{tpu_custom_call.1}
  #allocation0 [shape = 'u32[]', space=smem, size = 0x4, offset = 0x4, fixed_abs, tag = 'smem constant byte address 0x4 - core index']
  #allocation1 [shape = 'u32[144,128]{1,0:T(1,128)}', space=vmem, size = 0x12000, scoped, tag = 'internal scratch']
  #allocation2 [shape = 'f32[8,2,32]{2,1,0:T(2,128)}', space=vmem, size = 0x2000, scoped, tag = 'scratch operand']
  #allocation3 [shape = 'f32[5,2,96]{2,1,0:T(2,128)}', space=vmem, size = 0x1400, scoped, tag = 'scratch operand']
  %s0 = inlined_call_operand.vmem [shape: f32[8,2,32], index: 0, kind: input, shape index: {}]
  %s1 = inlined_call_operand.vmem [shape: f32[5,2,128], index: 1, kind: input, shape index: {}]
  %s2 = inlined_call_operand.vmem [shape: f32[32,32], index: 2, kind: input, shape index: {}]
  %s3 = inlined_call_operand.vmem [shape: f32[32,32], index: 3, kind: input, shape index: {}]
  %s4 = inlined_call_operand.vmem [shape: f32[1,32], index: 4, kind: input, shape index: {}]
  %s5 = inlined_call_operand.vmem [shape: f32[1,32], index: 5, kind: input, shape index: {}]
  %s6 = inlined_call_operand.vmem [shape: f32[32,96], index: 6, kind: input, shape index: {}]
  %s7 = inlined_call_operand.vmem [shape: f32[128,96], index: 7, kind: input, shape index: {}]
  %s8 = inlined_call_operand.vmem [shape: f32[1,96], index: 8, kind: input, shape index: {}]
  %s9 = inlined_call_operand.vmem [shape: f32[32,96], index: 9, kind: input, shape index: {}]
  %s10 = inlined_call_operand.vmem [shape: f32[1,96], index: 10, kind: input, shape index: {}]
  %s11 = inlined_call_operand.vmem [shape: f32[32,16], index: 11, kind: input, shape index: {}]
  %s12 = inlined_call_operand.vmem [shape: f32[1,16], index: 12, kind: input, shape index: {}]
  %s13 = inlined_call_operand.hbm [shape: f32[5,2,16], index: 13, kind: output, shape index: {}]
  %s14 = sld [smem:[#allocation0]]
  $region62: #{tpu_custom_call.1} parent=0
    _
  %s16 = ssub.s32 1, %s14
  %s17 = scalar_select 0, %s16, %s14
  $region1: #{tpu_custom_call.1} parent=0
    #allocation4 [shape = 'u8[5120]{0}', space=vmem, size = 0x1400, scoped, tag = 'output window, operand 0, single buffered']
    #allocation5 [shape = 's32[1]{0}', space=sflag, size = 0x4, scoped, tag = 'scoped memory for tpu_custom_call.1']
    %18 = vsyncpa [#allocation5], 0
    // Predicated region
    $region2: #{tpu_custom_call.1} parent=1 // pred_check
      _
    $region3: #{tpu_custom_call.1} parent=1 // pred_check_branch
      %20 = sbr.rel (0) target = $region5
    $region4: #{tpu_custom_call.1} parent=1 // pred_region
      _
    $region5: #{tpu_custom_call.1} parent=1 // pred_fallthru
      _
    // Predicated region
    $region6: #{tpu_custom_call.1} parent=1 // pred_check
      _
    $region7: #{tpu_custom_call.1} parent=1 // pred_check_branch
      %22 = sbr.rel (0) target = $region9
    $region8: #{tpu_custom_call.1} parent=1 // pred_region
      _
    $region9: #{tpu_custom_call.1} parent=1 // pred_fallthru
      _
    // Predicated region
    $region10: #{tpu_custom_call.1} parent=1 // pred_check
      _
    $region11: #{tpu_custom_call.1} parent=1 // pred_check_branch
      %24 = sbr.rel (0) target = $region13
    $region12: #{tpu_custom_call.1} parent=1 // pred_region
      _
    $region13: #{tpu_custom_call.1} parent=1 // pred_fallthru
      _
    // Predicated region
    $region14: #{tpu_custom_call.1} parent=1 // pred_check
      _
    $region15: #{tpu_custom_call.1} parent=1 // pred_check_branch
      %26 = sbr.rel (0) target = $region17
    $region16: #{tpu_custom_call.1} parent=1 // pred_region
      _
    $region17: #{tpu_custom_call.1} parent=1 // pred_fallthru
      _
    // Predicated region
    $region18: #{tpu_custom_call.1} parent=1 // pred_check
      _
    $region19: #{tpu_custom_call.1} parent=1 // pred_check_branch
      %28 = sbr.rel (0) target = $region21
    $region20: #{tpu_custom_call.1} parent=1 // pred_region
      _
    $region21: #{tpu_custom_call.1} parent=1 // pred_fallthru
      _
    // Predicated region
    $region22: #{tpu_custom_call.1} parent=1 // pred_check
      _
    $region23: #{tpu_custom_call.1} parent=1 // pred_check_branch
      %30 = sbr.rel (0) target = $region25
    $region24: #{tpu_custom_call.1} parent=1 // pred_region
      _
    $region25: #{tpu_custom_call.1} parent=1 // pred_fallthru
      _
    // Predicated region
    $region26: #{tpu_custom_call.1} parent=1 // pred_check
      _
    $region27: #{tpu_custom_call.1} parent=1 // pred_check_branch
      %32 = sbr.rel (0) target = $region29
    $region28: #{tpu_custom_call.1} parent=1 // pred_region
      _
    $region29: #{tpu_custom_call.1} parent=1 // pred_fallthru
      _
    // Predicated region
    $region30: #{tpu_custom_call.1} parent=1 // pred_check
      _
    $region31: #{tpu_custom_call.1} parent=1 // pred_check_branch
      %34 = sbr.rel (0) target = $region33
    $region32: #{tpu_custom_call.1} parent=1 // pred_region
      _
    $region33: #{tpu_custom_call.1} parent=1 // pred_fallthru
      _
    // Predicated region
    $region34: #{tpu_custom_call.1} parent=1 // pred_check
      _
    $region35: #{tpu_custom_call.1} parent=1 // pred_check_branch
      %36 = sbr.rel (0) target = $region37
    $region36: #{tpu_custom_call.1} parent=1 // pred_region
      _
    $region37: #{tpu_custom_call.1} parent=1 // pred_fallthru
      _
    // Predicated region
    $region38: #{tpu_custom_call.1} parent=1 // pred_check
      _
    $region39: #{tpu_custom_call.1} parent=1 // pred_check_branch
      %38 = sbr.rel (0) target = $region41
    $region40: #{tpu_custom_call.1} parent=1 // pred_region
      _
    $region41: #{tpu_custom_call.1} parent=1 // pred_fallthru
      _
    // Predicated region
    $region42: #{tpu_custom_call.1} parent=1 // pred_check
      _
    $region43: #{tpu_custom_call.1} parent=1 // pred_check_branch
      %40 = sbr.rel (0) target = $region45
    $region44: #{tpu_custom_call.1} parent=1 // pred_region
      _
    $region45: #{tpu_custom_call.1} parent=1 // pred_fallthru
      _
    // Predicated region
    $region46: #{tpu_custom_call.1} parent=1 // pred_check
      _
    $region47: #{tpu_custom_call.1} parent=1 // pred_check_branch
      %42 = sbr.rel (0) target = $region49
    $region48: #{tpu_custom_call.1} parent=1 // pred_region
      _
    $region49: #{tpu_custom_call.1} parent=1 // pred_fallthru
      _
    // Predicated region
    $region50: #{tpu_custom_call.1} parent=1 // pred_check
      _
    $region51: #{tpu_custom_call.1} parent=1 // pred_check_branch
      %44 = sbr.rel (0) target = $region53
    $region52: #{tpu_custom_call.1} parent=1 // pred_region
      _
    $region53: #{tpu_custom_call.1} parent=1 // pred_fallthru
      _
    %v45 = vld [vmem:[%s2] sm:$0xff]
    %v46 = vld [vmem:[%s2 + $0x8] sm:$0xff]
    %v47 = vld [vmem:[%s2 + $0x10] sm:$0xff]
    %v48 = vld [vmem:[%s2 + $0x18] sm:$0xff]
    %v49 = vld [vmem:[%s0] sm:$0x3]
    %vm50 = vcmask 261120
    %v52 = vsel %vm50, %v49, 0
    %54 = vmatprep.subr.mxu0 0.0
    %55 = vmatpush1.msra.mxu0 0.0
    %56 = vmatprep.subr.mxu0 0.0
    %57 = vmatpush1.msra.mxu0 0.0
    %58 = vmatprep.subr.mxu0 0.0
    %59 = vmatpush1.msra.mxu0 0.0
    %60 = vmatprep.subr.mxu0 0.0
    %61 = vmatpush1.msra.mxu0 0.0
    %62 = vmatprep.subr.mxu0 0.0
    %63 = vmatpush1.msra.mxu0 0.0
    %64 = vmatprep.subr.mxu0 0.0
    %65 = vmatpush1.msra.mxu0 0.0
    %66 = vmatprep.subr.mxu0 0.0
    %67 = vmatpush1.msra.mxu0 0.0
    %68 = vmatprep.subr.mxu0 0.0
    %69 = vmatpush1.msra.mxu0 0.0
    %70 = vmatprep.subr.mxu0 0.0
    %71 = vmatpush1.msra.mxu0 0.0
    %72 = vmatprep.subr.mxu0 0.0
    %73 = vmatpush1.msra.mxu0 0.0
    %74 = vmatprep.subr.mxu0 0.0
    %75 = vmatpush1.msra.mxu0 0.0
    %76 = vmatprep.subr.mxu0 0.0
    %77 = vmatpush1.msra.mxu0 0.0
    %78 = vmatprep.subr.mxu0 0.0
    %79 = vmatpush1.msra.mxu0 %v48
    %80 = vmatprep.subr.mxu0 0.0
    %81 = vmatpush1.msra.mxu0 %v47
    %82 = vmatprep.subr.mxu0 0.0
    %83 = vmatpush1.msra.mxu0 %v46
    %84 = vmatprep.subr.mxu0 0.0
    %85 = vmatpush1.msra.mxu0 %v45
    %86 = vmatprep.subr.mxu0 0.0
    %87 = vmatpush2.msra.mxu0 0.0
    %88 = vmatprep.subr.mxu0 0.0
    %89 = vmatpush2.msra.mxu0 0.0
    %90 = vmatprep.subr.mxu0 0.0
    %91 = vmatpush2.msra.mxu0 0.0
    %92 = vmatprep.subr.mxu0 0.0
    %93 = vmatpush2.msra.mxu0 0.0
    %94 = vmatprep.subr.mxu0 0.0
    %95 = vmatpush2.msra.mxu0 0.0
    %96 = vmatprep.subr.mxu0 0.0
    %97 = vmatpush2.msra.mxu0 0.0
    %98 = vmatprep.subr.mxu0 0.0
    %99 = vmatpush2.msra.mxu0 0.0
    %100 = vmatprep.subr.mxu0 0.0
    %101 = vmatpush2.msra.mxu0 0.0
    %102 = vmatprep.subr.mxu0 0.0
    %103 = vmatpush2.msra.mxu0 0.0
    %104 = vmatprep.subr.mxu0 0.0
    %105 = vmatpush2.msra.mxu0 0.0
    %106 = vmatprep.subr.mxu0 0.0
    %107 = vmatpush2.msra.mxu0 0.0
    %108 = vmatprep.subr.mxu0 0.0
    %109 = vmatpush2.msra.mxu0 0.0
    %110 = vmatprep.subr.mxu0 0.0
    %111 = vmatpush2.msra.mxu0 0.0
    %112 = vmatprep.subr.mxu0 0.0
    %113 = vmatpush2.msra.mxu0 0.0
    %114 = vmatprep.subr.mxu0 0.0
    %115 = vmatpush2.msra.mxu0 0.0
    %116 = vmatprep.subr.mxu0 0.0
    %117 = vmatpush2.msra.mxu0 0.0
    %118 = vmatprep.mubr.f32.mxu0 0.0
    %119 = vmatmul.mubr.f32.gmra.mxu0 %v52
    %v120 = vpop.f32.mrf.mxu0
    %v121 = vadd.f32 0.0, %v120
    %v122 = vpop.f32.mrf.mxu0
    %123 = vdwg.mxu0
    %vm124 = vcmask 254976
    %125 = vst.msk [vmem:[#allocation2] sm:$0x3] %vm124, %v121
    %s126 = scalar_lea.vmem %s0, 2
    %v127 = vld [vmem:[%s126] sm:$0x3]
    %v129 = vsel %vm50, %v127, 0
    %131 = vmatprep.subr.mxu0 0.0
    %132 = vmatpush1.msra.mxu0 0.0
    %133 = vmatprep.subr.mxu0 0.0
    %134 = vmatpush1.msra.mxu0 0.0
    %135 = vmatprep.subr.mxu0 0.0
    %136 = vmatpush1.msra.mxu0 0.0
    %137 = vmatprep.subr.mxu0 0.0
    %138 = vmatpush1.msra.mxu0 0.0
    %139 = vmatprep.subr.mxu0 0.0
    %140 = vmatpush1.msra.mxu0 0.0
    %141 = vmatprep.subr.mxu0 0.0
    %142 = vmatpush1.msra.mxu0 0.0
    %143 = vmatprep.subr.mxu0 0.0
    %144 = vmatpush1.msra.mxu0 0.0
    %145 = vmatprep.subr.mxu0 0.0
    %146 = vmatpush1.msra.mxu0 0.0
    %147 = vmatprep.subr.mxu0 0.0
    %148 = vmatpush1.msra.mxu0 0.0
    %149 = vmatprep.subr.mxu0 0.0
    %150 = vmatpush1.msra.mxu0 0.0
    %151 = vmatprep.subr.mxu0 0.0
    %152 = vmatpush1.msra.mxu0 0.0
    %153 = vmatprep.subr.mxu0 0.0
    %154 = vmatpush1.msra.mxu0 0.0
    %155 = vmatprep.subr.mxu0 0.0
    %156 = vmatpush1.msra.mxu0 %v48
    %157 = vmatprep.subr.mxu0 0.0
    %158 = vmatpush1.msra.mxu0 %v47
    %159 = vmatprep.subr.mxu0 0.0
    %160 = vmatpush1.msra.mxu0 %v46
    %161 = vmatprep.subr.mxu0 0.0
    %162 = vmatpush1.msra.mxu0 %v45
    %163 = vmatprep.subr.mxu0 0.0
    %164 = vmatpush2.msra.mxu0 0.0
    %165 = vmatprep.subr.mxu0 0.0
    %166 = vmatpush2.msra.mxu0 0.0
    %167 = vmatprep.subr.mxu0 0.0
    %168 = vmatpush2.msra.mxu0 0.0
    %169 = vmatprep.subr.mxu0 0.0
    %170 = vmatpush2.msra.mxu0 0.0
    %171 = vmatprep.subr.mxu0 0.0
    %172 = vmatpush2.msra.mxu0 0.0
    %173 = vmatprep.subr.mxu0 0.0
    %174 = vmatpush2.msra.mxu0 0.0
    %175 = vmatprep.subr.mxu0 0.0
    %176 = vmatpush2.msra.mxu0 0.0
    %177 = vmatprep.subr.mxu0 0.0
    %178 = vmatpush2.msra.mxu0 0.0
    %179 = vmatprep.subr.mxu0 0.0
    %180 = vmatpush2.msra.mxu0 0.0
    %181 = vmatprep.subr.mxu0 0.0
    %182 = vmatpush2.msra.mxu0 0.0
    %183 = vmatprep.subr.mxu0 0.0
    %184 = vmatpush2.msra.mxu0 0.0
    %185 = vmatprep.subr.mxu0 0.0
    %186 = vmatpush2.msra.mxu0 0.0
    %187 = vmatprep.subr.mxu0 0.0
    %188 = vmatpush2.msra.mxu0 0.0
    %189 = vmatprep.subr.mxu0 0.0
    %190 = vmatpush2.msra.mxu0 0.0
    %191 = vmatprep.subr.mxu0 0.0
    %192 = vmatpush2.msra.mxu0 0.0
    %193 = vmatprep.subr.mxu0 0.0
    %194 = vmatpush2.msra.mxu0 0.0
    %195 = vmatprep.mubr.f32.mxu0 0.0
    %196 = vmatmul.mubr.f32.gmra.mxu0 %v129
    %v197 = vpop.f32.mrf.mxu0
    %v198 = vadd.f32 0.0, %v197
    %v199 = vpop.f32.mrf.mxu0
    %200 = vdwg.mxu0
    %s201 = scalar_lea.vmem [#allocation2], 2
    %202 = vst.msk [vmem:[%s201] sm:$0x3] %vm124, %v198
    %s203 = scalar_lea.vmem %s0, 4
    %v204 = vld [vmem:[%s203] sm:$0x3]
    %v206 = vsel %vm50, %v204, 0
    %208 = vmatprep.subr.mxu0 0.0
    %209 = vmatpush1.msra.mxu0 0.0
    %210 = vmatprep.subr.mxu0 0.0
    %211 = vmatpush1.msra.mxu0 0.0
    %212 = vmatprep.subr.mxu0 0.0
    %213 = vmatpush1.msra.mxu0 0.0
    %214 = vmatprep.subr.mxu0 0.0
    %215 = vmatpush1.msra.mxu0 0.0
    %216 = vmatprep.subr.mxu0 0.0
    %217 = vmatpush1.msra.mxu0 0.0
    %218 = vmatprep.subr.mxu0 0.0
    %219 = vmatpush1.msra.mxu0 0.0
    %220 = vmatprep.subr.mxu0 0.0
    %221 = vmatpush1.msra.mxu0 0.0
    %222 = vmatprep.subr.mxu0 0.0
    %223 = vmatpush1.msra.mxu0 0.0
    %224 = vmatprep.subr.mxu0 0.0
    %225 = vmatpush1.msra.mxu0 0.0
    %226 = vmatprep.subr.mxu0 0.0
    %227 = vmatpush1.msra.mxu0 0.0
    %228 = vmatprep.subr.mxu0 0.0
    %229 = vmatpush1.msra.mxu0 0.0
    %230 = vmatprep.subr.mxu0 0.0
    %231 = vmatpush1.msra.mxu0 0.0
    %232 = vmatprep.subr.mxu0 0.0
    %233 = vmatpush1.msra.mxu0 %v48
    %234 = vmatprep.subr.mxu0 0.0
    %235 = vmatpush1.msra.mxu0 %v47
    %236 = vmatprep.subr.mxu0 0.0
    %237 = vmatpush1.msra.mxu0 %v46
    %238 = vmatprep.subr.mxu0 0.0
    %239 = vmatpush1.msra.mxu0 %v45
    %240 = vmatprep.subr.mxu0 0.0
    %241 = vmatpush2.msra.mxu0 0.0
    %242 = vmatprep.subr.mxu0 0.0
    %243 = vmatpush2.msra.mxu0 0.0
    %244 = vmatprep.subr.mxu0 0.0
    %245 = vmatpush2.msra.mxu0 0.0
    %246 = vmatprep.subr.mxu0 0.0
    %247 = vmatpush2.msra.mxu0 0.0
    %248 = vmatprep.subr.mxu0 0.0
    %249 = vmatpush2.msra.mxu0 0.0
    %250 = vmatprep.subr.mxu0 0.0
    %251 = vmatpush2.msra.mxu0 0.0
    %252 = vmatprep.subr.mxu0 0.0
    %253 = vmatpush2.msra.mxu0 0.0
    %254 = vmatprep.subr.mxu0 0.0
    %255 = vmatpush2.msra.mxu0 0.0
    %256 = vmatprep.subr.mxu0 0.0
    %257 = vmatpush2.msra.mxu0 0.0
    %258 = vmatprep.subr.mxu0 0.0
    %259 = vmatpush2.msra.mxu0 0.0
    %260 = vmatprep.subr.mxu0 0.0
    %261 = vmatpush2.msra.mxu0 0.0
    %262 = vmatprep.subr.mxu0 0.0
    %263 = vmatpush2.msra.mxu0 0.0
    %264 = vmatprep.subr.mxu0 0.0
    %265 = vmatpush2.msra.mxu0 0.0
    %266 = vmatprep.subr.mxu0 0.0
    %267 = vmatpush2.msra.mxu0 0.0
    %268 = vmatprep.subr.mxu0 0.0
    %269 = vmatpush2.msra.mxu0 0.0
    %270 = vmatprep.subr.mxu0 0.0
    %271 = vmatpush2.msra.mxu0 0.0
    %272 = vmatprep.mubr.f32.mxu0 0.0
    %273 = vmatmul.mubr.f32.gmra.mxu0 %v206
    %v274 = vpop.f32.mrf.mxu0
    %v275 = vadd.f32 0.0, %v274
    %v276 = vpop.f32.mrf.mxu0
    %277 = vdwg.mxu0
    %s278 = scalar_lea.vmem [#allocation2], 4
    %279 = vst.msk [vmem:[%s278] sm:$0x3] %vm124, %v275
    %s280 = scalar_lea.vmem %s0, 6
    %v281 = vld [vmem:[%s280] sm:$0x3]
    %v283 = vsel %vm50, %v281, 0
    %285 = vmatprep.subr.mxu0 0.0
    %286 = vmatpush1.msra.mxu0 0.0
    %287 = vmatprep.subr.mxu0 0.0
    %288 = vmatpush1.msra.mxu0 0.0
    %289 = vmatprep.subr.mxu0 0.0
    %290 = vmatpush1.msra.mxu0 0.0
    %291 = vmatprep.subr.mxu0 0.0
    %292 = vmatpush1.msra.mxu0 0.0
    %293 = vmatprep.subr.mxu0 0.0
    %294 = vmatpush1.msra.mxu0 0.0
    %295 = vmatprep.subr.mxu0 0.0
    %296 = vmatpush1.msra.mxu0 0.0
    %297 = vmatprep.subr.mxu0 0.0
    %298 = vmatpush1.msra.mxu0 0.0
    %299 = vmatprep.subr.mxu0 0.0
    %300 = vmatpush1.msra.mxu0 0.0
    %301 = vmatprep.subr.mxu0 0.0
    %302 = vmatpush1.msra.mxu0 0.0
    %303 = vmatprep.subr.mxu0 0.0
    %304 = vmatpush1.msra.mxu0 0.0
    %305 = vmatprep.subr.mxu0 0.0
    %306 = vmatpush1.msra.mxu0 0.0
    %307 = vmatprep.subr.mxu0 0.0
    %308 = vmatpush1.msra.mxu0 0.0
    %309 = vmatprep.subr.mxu0 0.0
    %310 = vmatpush1.msra.mxu0 %v48
    %311 = vmatprep.subr.mxu0 0.0
    %312 = vmatpush1.msra.mxu0 %v47
    %313 = vmatprep.subr.mxu0 0.0
    %314 = vmatpush1.msra.mxu0 %v46
    %315 = vmatprep.subr.mxu0 0.0
    %316 = vmatpush1.msra.mxu0 %v45
    %317 = vmatprep.subr.mxu0 0.0
    %318 = vmatpush2.msra.mxu0 0.0
    %319 = vmatprep.subr.mxu0 0.0
    %320 = vmatpush2.msra.mxu0 0.0
    %321 = vmatprep.subr.mxu0 0.0
    %322 = vmatpush2.msra.mxu0 0.0
    %323 = vmatprep.subr.mxu0 0.0
    %324 = vmatpush2.msra.mxu0 0.0
    %325 = vmatprep.subr.mxu0 0.0
    %326 = vmatpush2.msra.mxu0 0.0
    %327 = vmatprep.subr.mxu0 0.0
    %328 = vmatpush2.msra.mxu0 0.0
    %329 = vmatprep.subr.mxu0 0.0
    %330 = vmatpush2.msra.mxu0 0.0
    %331 = vmatprep.subr.mxu0 0.0
    %332 = vmatpush2.msra.mxu0 0.0
    %333 = vmatprep.subr.mxu0 0.0
    %334 = vmatpush2.msra.mxu0 0.0
    %335 = vmatprep.subr.mxu0 0.0
    %336 = vmatpush2.msra.mxu0 0.0
    %337 = vmatprep.subr.mxu0 0.0
    %338 = vmatpush2.msra.mxu0 0.0
    %339 = vmatprep.subr.mxu0 0.0
    %340 = vmatpush2.msra.mxu0 0.0
    %341 = vmatprep.subr.mxu0 0.0
    %342 = vmatpush2.msra.mxu0 0.0
    %343 = vmatprep.subr.mxu0 0.0
    %344 = vmatpush2.msra.mxu0 0.0
    %345 = vmatprep.subr.mxu0 0.0
    %346 = vmatpush2.msra.mxu0 0.0
    %347 = vmatprep.subr.mxu0 0.0
    %348 = vmatpush2.msra.mxu0 0.0
    %349 = vmatprep.mubr.f32.mxu0 0.0
    %350 = vmatmul.mubr.f32.gmra.mxu0 %v283
    %v351 = vpop.f32.mrf.mxu0
    %v352 = vadd.f32 0.0, %v351
    %v353 = vpop.f32.mrf.mxu0
    %354 = vdwg.mxu0
    %s355 = scalar_lea.vmem [#allocation2], 6
    %356 = vst.msk [vmem:[%s355] sm:$0x3] %vm124, %v352
    %s357 = scalar_lea.vmem %s0, 8
    %v358 = vld [vmem:[%s357] sm:$0x3]
    %v360 = vsel %vm50, %v358, 0
    %362 = vmatprep.subr.mxu0 0.0
    %363 = vmatpush1.msra.mxu0 0.0
    %364 = vmatprep.subr.mxu0 0.0
    %365 = vmatpush1.msra.mxu0 0.0
    %366 = vmatprep.subr.mxu0 0.0
    %367 = vmatpush1.msra.mxu0 0.0
    %368 = vmatprep.subr.mxu0 0.0
    %369 = vmatpush1.msra.mxu0 0.0
    %370 = vmatprep.subr.mxu0 0.0
    %371 = vmatpush1.msra.mxu0 0.0
    %372 = vmatprep.subr.mxu0 0.0
    %373 = vmatpush1.msra.mxu0 0.0
    %374 = vmatprep.subr.mxu0 0.0
    %375 = vmatpush1.msra.mxu0 0.0
    %376 = vmatprep.subr.mxu0 0.0
    %377 = vmatpush1.msra.mxu0 0.0
    %378 = vmatprep.subr.mxu0 0.0
    %379 = vmatpush1.msra.mxu0 0.0
    %380 = vmatprep.subr.mxu0 0.0
    %381 = vmatpush1.msra.mxu0 0.0
    %382 = vmatprep.subr.mxu0 0.0
    %383 = vmatpush1.msra.mxu0 0.0
    %384 = vmatprep.subr.mxu0 0.0
    %385 = vmatpush1.msra.mxu0 0.0
    %386 = vmatprep.subr.mxu0 0.0
    %387 = vmatpush1.msra.mxu0 %v48
    %388 = vmatprep.subr.mxu0 0.0
    %389 = vmatpush1.msra.mxu0 %v47
    %390 = vmatprep.subr.mxu0 0.0
    %391 = vmatpush1.msra.mxu0 %v46
    %392 = vmatprep.subr.mxu0 0.0
    %393 = vmatpush1.msra.mxu0 %v45
    %394 = vmatprep.subr.mxu0 0.0
    %395 = vmatpush2.msra.mxu0 0.0
    %396 = vmatprep.subr.mxu0 0.0
    %397 = vmatpush2.msra.mxu0 0.0
    %398 = vmatprep.subr.mxu0 0.0
    %399 = vmatpush2.msra.mxu0 0.0
    %400 = vmatprep.subr.mxu0 0.0
    %401 = vmatpush2.msra.mxu0 0.0
    %402 = vmatprep.subr.mxu0 0.0
    %403 = vmatpush2.msra.mxu0 0.0
    %404 = vmatprep.subr.mxu0 0.0
    %405 = vmatpush2.msra.mxu0 0.0
    %406 = vmatprep.subr.mxu0 0.0
    %407 = vmatpush2.msra.mxu0 0.0
    %408 = vmatprep.subr.mxu0 0.0
    %409 = vmatpush2.msra.mxu0 0.0
    %410 = vmatprep.subr.mxu0 0.0
    %411 = vmatpush2.msra.mxu0 0.0
    %412 = vmatprep.subr.mxu0 0.0
    %413 = vmatpush2.msra.mxu0 0.0
    %414 = vmatprep.subr.mxu0 0.0
    %415 = vmatpush2.msra.mxu0 0.0
    %416 = vmatprep.subr.mxu0 0.0
    %417 = vmatpush2.msra.mxu0 0.0
    %418 = vmatprep.subr.mxu0 0.0
    %419 = vmatpush2.msra.mxu0 0.0
    %420 = vmatprep.subr.mxu0 0.0
    %421 = vmatpush2.msra.mxu0 0.0
    %422 = vmatprep.subr.mxu0 0.0
    %423 = vmatpush2.msra.mxu0 0.0
    %424 = vmatprep.subr.mxu0 0.0
    %425 = vmatpush2.msra.mxu0 0.0
    %426 = vmatprep.mubr.f32.mxu0 0.0
    %427 = vmatmul.mubr.f32.gmra.mxu0 %v360
    %v428 = vpop.f32.mrf.mxu0
    %v429 = vadd.f32 0.0, %v428
    %v430 = vpop.f32.mrf.mxu0
    %431 = vdwg.mxu0
    %s432 = scalar_lea.vmem [#allocation2], 8
    %433 = vst.msk [vmem:[%s432] sm:$0x3] %vm124, %v429
    %s434 = scalar_lea.vmem %s0, 10
    %v435 = vld [vmem:[%s434] sm:$0x3]
    %v437 = vsel %vm50, %v435, 0
    %439 = vmatprep.subr.mxu0 0.0
    %440 = vmatpush1.msra.mxu0 0.0
    %441 = vmatprep.subr.mxu0 0.0
    %442 = vmatpush1.msra.mxu0 0.0
    %443 = vmatprep.subr.mxu0 0.0
    %444 = vmatpush1.msra.mxu0 0.0
    %445 = vmatprep.subr.mxu0 0.0
    %446 = vmatpush1.msra.mxu0 0.0
    %447 = vmatprep.subr.mxu0 0.0
    %448 = vmatpush1.msra.mxu0 0.0
    %449 = vmatprep.subr.mxu0 0.0
    %450 = vmatpush1.msra.mxu0 0.0
    %451 = vmatprep.subr.mxu0 0.0
    %452 = vmatpush1.msra.mxu0 0.0
    %453 = vmatprep.subr.mxu0 0.0
    %454 = vmatpush1.msra.mxu0 0.0
    %455 = vmatprep.subr.mxu0 0.0
    %456 = vmatpush1.msra.mxu0 0.0
    %457 = vmatprep.subr.mxu0 0.0
    %458 = vmatpush1.msra.mxu0 0.0
    %459 = vmatprep.subr.mxu0 0.0
    %460 = vmatpush1.msra.mxu0 0.0
    %461 = vmatprep.subr.mxu0 0.0
    %462 = vmatpush1.msra.mxu0 0.0
    %463 = vmatprep.subr.mxu0 0.0
    %464 = vmatpush1.msra.mxu0 %v48
    %465 = vmatprep.subr.mxu0 0.0
    %466 = vmatpush1.msra.mxu0 %v47
    %467 = vmatprep.subr.mxu0 0.0
    %468 = vmatpush1.msra.mxu0 %v46
    %469 = vmatprep.subr.mxu0 0.0
    %470 = vmatpush1.msra.mxu0 %v45
    %471 = vmatprep.subr.mxu0 0.0
    %472 = vmatpush2.msra.mxu0 0.0
    %473 = vmatprep.subr.mxu0 0.0
    %474 = vmatpush2.msra.mxu0 0.0
    %475 = vmatprep.subr.mxu0 0.0
    %476 = vmatpush2.msra.mxu0 0.0
    %477 = vmatprep.subr.mxu0 0.0
    %478 = vmatpush2.msra.mxu0 0.0
    %479 = vmatprep.subr.mxu0 0.0
    %480 = vmatpush2.msra.mxu0 0.0
    %481 = vmatprep.subr.mxu0 0.0
    %482 = vmatpush2.msra.mxu0 0.0
    %483 = vmatprep.subr.mxu0 0.0
    %484 = vmatpush2.msra.mxu0 0.0
    %485 = vmatprep.subr.mxu0 0.0
    %486 = vmatpush2.msra.mxu0 0.0
    %487 = vmatprep.subr.mxu0 0.0
    %488 = vmatpush2.msra.mxu0 0.0
    %489 = vmatprep.subr.mxu0 0.0
    %490 = vmatpush2.msra.mxu0 0.0
    %491 = vmatprep.subr.mxu0 0.0
    %492 = vmatpush2.msra.mxu0 0.0
    %493 = vmatprep.subr.mxu0 0.0
    %494 = vmatpush2.msra.mxu0 0.0
    %495 = vmatprep.subr.mxu0 0.0
    %496 = vmatpush2.msra.mxu0 0.0
    %497 = vmatprep.subr.mxu0 0.0
    %498 = vmatpush2.msra.mxu0 0.0
    %499 = vmatprep.subr.mxu0 0.0
    %500 = vmatpush2.msra.mxu0 0.0
    %501 = vmatprep.subr.mxu0 0.0
    %502 = vmatpush2.msra.mxu0 0.0
    %503 = vmatprep.mubr.f32.mxu0 0.0
    %504 = vmatmul.mubr.f32.gmra.mxu0 %v437
    %v505 = vpop.f32.mrf.mxu0
    %v506 = vadd.f32 0.0, %v505
    %v507 = vpop.f32.mrf.mxu0
    %508 = vdwg.mxu0
    %s509 = scalar_lea.vmem [#allocation2], 10
    %510 = vst.msk [vmem:[%s509] sm:$0x3] %vm124, %v506
    %s511 = scalar_lea.vmem %s0, 12
    %v512 = vld [vmem:[%s511] sm:$0x3]
    %v514 = vsel %vm50, %v512, 0
    %516 = vmatprep.subr.mxu0 0.0
    %517 = vmatpush1.msra.mxu0 0.0
    %518 = vmatprep.subr.mxu0 0.0
    %519 = vmatpush1.msra.mxu0 0.0
    %520 = vmatprep.subr.mxu0 0.0
    %521 = vmatpush1.msra.mxu0 0.0
    %522 = vmatprep.subr.mxu0 0.0
    %523 = vmatpush1.msra.mxu0 0.0
    %524 = vmatprep.subr.mxu0 0.0
    %525 = vmatpush1.msra.mxu0 0.0
    %526 = vmatprep.subr.mxu0 0.0
    %527 = vmatpush1.msra.mxu0 0.0
    %528 = vmatprep.subr.mxu0 0.0
    %529 = vmatpush1.msra.mxu0 0.0
    %530 = vmatprep.subr.mxu0 0.0
    %531 = vmatpush1.msra.mxu0 0.0
    %532 = vmatprep.subr.mxu0 0.0
    %533 = vmatpush1.msra.mxu0 0.0
    %534 = vmatprep.subr.mxu0 0.0
    %535 = vmatpush1.msra.mxu0 0.0
    %536 = vmatprep.subr.mxu0 0.0
    %537 = vmatpush1.msra.mxu0 0.0
    %538 = vmatprep.subr.mxu0 0.0
    %539 = vmatpush1.msra.mxu0 0.0
    %540 = vmatprep.subr.mxu0 0.0
    %541 = vmatpush1.msra.mxu0 %v48
    %542 = vmatprep.subr.mxu0 0.0
    %543 = vmatpush1.msra.mxu0 %v47
    %544 = vmatprep.subr.mxu0 0.0
    %545 = vmatpush1.msra.mxu0 %v46
    %546 = vmatprep.subr.mxu0 0.0
    %547 = vmatpush1.msra.mxu0 %v45
    %548 = vmatprep.subr.mxu0 0.0
    %549 = vmatpush2.msra.mxu0 0.0
    %550 = vmatprep.subr.mxu0 0.0
    %551 = vmatpush2.msra.mxu0 0.0
    %552 = vmatprep.subr.mxu0 0.0
    %553 = vmatpush2.msra.mxu0 0.0
    %554 = vmatprep.subr.mxu0 0.0
    %555 = vmatpush2.msra.mxu0 0.0
    %556 = vmatprep.subr.mxu0 0.0
    %557 = vmatpush2.msra.mxu0 0.0
    %558 = vmatprep.subr.mxu0 0.0
    %559 = vmatpush2.msra.mxu0 0.0
    %560 = vmatprep.subr.mxu0 0.0
    %561 = vmatpush2.msra.mxu0 0.0
    %562 = vmatprep.subr.mxu0 0.0
    %563 = vmatpush2.msra.mxu0 0.0
    %564 = vmatprep.subr.mxu0 0.0
    %565 = vmatpush2.msra.mxu0 0.0
    %566 = vmatprep.subr.mxu0 0.0
    %567 = vmatpush2.msra.mxu0 0.0
    %568 = vmatprep.subr.mxu0 0.0
    %569 = vmatpush2.msra.mxu0 0.0
    %570 = vmatprep.subr.mxu0 0.0
    %571 = vmatpush2.msra.mxu0 0.0
    %572 = vmatprep.subr.mxu0 0.0
    %573 = vmatpush2.msra.mxu0 0.0
    %574 = vmatprep.subr.mxu0 0.0
    %575 = vmatpush2.msra.mxu0 0.0
    %576 = vmatprep.subr.mxu0 0.0
    %577 = vmatpush2.msra.mxu0 0.0
    %578 = vmatprep.subr.mxu0 0.0
    %579 = vmatpush2.msra.mxu0 0.0
    %580 = vmatprep.mubr.f32.mxu0 0.0
    %581 = vmatmul.mubr.f32.gmra.mxu0 %v514
    %v582 = vpop.f32.mrf.mxu0
    %v583 = vadd.f32 0.0, %v582
    %v584 = vpop.f32.mrf.mxu0
    %585 = vdwg.mxu0
    %s586 = scalar_lea.vmem [#allocation2], 12
    %587 = vst.msk [vmem:[%s586] sm:$0x3] %vm124, %v583
    %s588 = scalar_lea.vmem %s0, 14
    %v589 = vld [vmem:[%s588] sm:$0x3]
    %v591 = vsel %vm50, %v589, 0
    %593 = vmatprep.subr.mxu0 0.0
    %594 = vmatpush1.msra.mxu0 0.0
    %595 = vmatprep.subr.mxu0 0.0
    %596 = vmatpush1.msra.mxu0 0.0
    %597 = vmatprep.subr.mxu0 0.0
    %598 = vmatpush1.msra.mxu0 0.0
    %599 = vmatprep.subr.mxu0 0.0
    %600 = vmatpush1.msra.mxu0 0.0
    %601 = vmatprep.subr.mxu0 0.0
    %602 = vmatpush1.msra.mxu0 0.0
    %603 = vmatprep.subr.mxu0 0.0
    %604 = vmatpush1.msra.mxu0 0.0
    %605 = vmatprep.subr.mxu0 0.0
    %606 = vmatpush1.msra.mxu0 0.0
    %607 = vmatprep.subr.mxu0 0.0
    %608 = vmatpush1.msra.mxu0 0.0
    %609 = vmatprep.subr.mxu0 0.0
    %610 = vmatpush1.msra.mxu0 0.0
    %611 = vmatprep.subr.mxu0 0.0
    %612 = vmatpush1.msra.mxu0 0.0
    %613 = vmatprep.subr.mxu0 0.0
    %614 = vmatpush1.msra.mxu0 0.0
    %615 = vmatprep.subr.mxu0 0.0
    %616 = vmatpush1.msra.mxu0 0.0
    %617 = vmatprep.subr.mxu0 0.0
    %618 = vmatpush1.msra.mxu0 %v48
    %619 = vmatprep.subr.mxu0 0.0
    %620 = vmatpush1.msra.mxu0 %v47
    %621 = vmatprep.subr.mxu0 0.0
    %622 = vmatpush1.msra.mxu0 %v46
    %623 = vmatprep.subr.mxu0 0.0
    %624 = vmatpush1.msra.mxu0 %v45
    %625 = vmatprep.subr.mxu0 0.0
    %626 = vmatpush2.msra.mxu0 0.0
    %627 = vmatprep.subr.mxu0 0.0
    %628 = vmatpush2.msra.mxu0 0.0
    %629 = vmatprep.subr.mxu0 0.0
    %630 = vmatpush2.msra.mxu0 0.0
    %631 = vmatprep.subr.mxu0 0.0
    %632 = vmatpush2.msra.mxu0 0.0
    %633 = vmatprep.subr.mxu0 0.0
    %634 = vmatpush2.msra.mxu0 0.0
    %635 = vmatprep.subr.mxu0 0.0
    %636 = vmatpush2.msra.mxu0 0.0
    %637 = vmatprep.subr.mxu0 0.0
    %638 = vmatpush2.msra.mxu0 0.0
    %639 = vmatprep.subr.mxu0 0.0
    %640 = vmatpush2.msra.mxu0 0.0
    %641 = vmatprep.subr.mxu0 0.0
    %642 = vmatpush2.msra.mxu0 0.0
    %643 = vmatprep.subr.mxu0 0.0
    %644 = vmatpush2.msra.mxu0 0.0
    %645 = vmatprep.subr.mxu0 0.0
    %646 = vmatpush2.msra.mxu0 0.0
    %647 = vmatprep.subr.mxu0 0.0
    %648 = vmatpush2.msra.mxu0 0.0
    %649 = vmatprep.subr.mxu0 0.0
    %650 = vmatpush2.msra.mxu0 0.0
    %651 = vmatprep.subr.mxu0 0.0
    %652 = vmatpush2.msra.mxu0 0.0
    %653 = vmatprep.subr.mxu0 0.0
    %654 = vmatpush2.msra.mxu0 0.0
    %655 = vmatprep.subr.mxu0 0.0
    %656 = vmatpush2.msra.mxu0 0.0
    %657 = vmatprep.mubr.f32.mxu0 0.0
    %658 = vmatmul.mubr.f32.gmra.mxu0 %v591
    %v659 = vpop.f32.mrf.mxu0
    %v660 = vadd.f32 0.0, %v659
    %v661 = vpop.f32.mrf.mxu0
    %662 = vdwg.mxu0
    %s663 = scalar_lea.vmem [#allocation2], 14
    %664 = vst.msk [vmem:[%s663] sm:$0x3] %vm124, %v660
    %v665 = vld [vmem:[%s7] sm:$0xff]
    %v666 = vld [vmem:[%s7 + $0x8] sm:$0xff]
    %v667 = vld [vmem:[%s7 + $0x10] sm:$0xff]
    %v668 = vld [vmem:[%s7 + $0x18] sm:$0xff]
    %v669 = vld [vmem:[%s7 + $0x20] sm:$0xff]
    %v670 = vld [vmem:[%s7 + $0x28] sm:$0xff]
    %v671 = vld [vmem:[%s7 + $0x30] sm:$0xff]
    %v672 = vld [vmem:[%s7 + $0x38] sm:$0xff]
    %v673 = vld [vmem:[%s7 + $0x40] sm:$0xff]
    %v674 = vld [vmem:[%s7 + $0x48] sm:$0xff]
    %v675 = vld [vmem:[%s7 + $0x50] sm:$0xff]
    %v676 = vld [vmem:[%s7 + $0x58] sm:$0xff]
    %v677 = vld [vmem:[%s7 + $0x60] sm:$0xff]
    %v678 = vld [vmem:[%s7 + $0x68] sm:$0xff]
    %v679 = vld [vmem:[%s7 + $0x70] sm:$0xff]
    %v680 = vld [vmem:[%s7 + $0x78] sm:$0xff]
    %v681 = vld [vmem:[%s8] sm:$0x1]
    %v683 = vlaneseq
    %v684 = vshrl.u32 %v683, 7
    %v685 = vsub.s32 0, %v684
    %v686 = vrot.slane %v681, %v685
    %v688 = vld [vmem:[%s1] sm:$0x3]
    %689 = vmatprep.subr.mxu0 0.0
    %690 = vmatpush1.msra.mxu0 %v680
    %691 = vmatprep.subr.mxu0 0.0
    %692 = vmatpush1.msra.mxu0 %v679
    %693 = vmatprep.subr.mxu0 0.0
    %694 = vmatpush1.msra.mxu0 %v678
    %695 = vmatprep.subr.mxu0 0.0
    %696 = vmatpush1.msra.mxu0 %v677
    %697 = vmatprep.subr.mxu0 0.0
    %698 = vmatpush1.msra.mxu0 %v676
    %699 = vmatprep.subr.mxu0 0.0
    %700 = vmatpush1.msra.mxu0 %v675
    %701 = vmatprep.subr.mxu0 0.0
    %702 = vmatpush1.msra.mxu0 %v674
    %703 = vmatprep.subr.mxu0 0.0
    %704 = vmatpush1.msra.mxu0 %v673
    %705 = vmatprep.subr.mxu0 0.0
    %706 = vmatpush1.msra.mxu0 %v672
    %707 = vmatprep.subr.mxu0 0.0
    %708 = vmatpush1.msra.mxu0 %v671
    %709 = vmatprep.subr.mxu0 0.0
    %710 = vmatpush1.msra.mxu0 %v670
    %711 = vmatprep.subr.mxu0 0.0
    %712 = vmatpush1.msra.mxu0 %v669
    %713 = vmatprep.subr.mxu0 0.0
    %714 = vmatpush1.msra.mxu0 %v668
    %715 = vmatprep.subr.mxu0 0.0
    %716 = vmatpush1.msra.mxu0 %v667
    %717 = vmatprep.subr.mxu0 0.0
    %718 = vmatpush1.msra.mxu0 %v666
    %719 = vmatprep.subr.mxu0 0.0
    %720 = vmatpush1.msra.mxu0 %v665
    %721 = vmatprep.subr.mxu0 0.0
    %722 = vmatpush2.msra.mxu0 0.0
    %723 = vmatprep.subr.mxu0 0.0
    %724 = vmatpush2.msra.mxu0 0.0
    %725 = vmatprep.subr.mxu0 0.0
    %726 = vmatpush2.msra.mxu0 0.0
    %727 = vmatprep.subr.mxu0 0.0
    %728 = vmatpush2.msra.mxu0 0.0
    %729 = vmatprep.subr.mxu0 0.0
    %730 = vmatpush2.msra.mxu0 0.0
    %731 = vmatprep.subr.mxu0 0.0
    %732 = vmatpush2.msra.mxu0 0.0
    %733 = vmatprep.subr.mxu0 0.0
    %734 = vmatpush2.msra.mxu0 0.0
    %735 = vmatprep.subr.mxu0 0.0
    %736 = vmatpush2.msra.mxu0 0.0
    %737 = vmatprep.subr.mxu0 0.0
    %738 = vmatpush2.msra.mxu0 0.0
    %739 = vmatprep.subr.mxu0 0.0
    %740 = vmatpush2.msra.mxu0 0.0
    %741 = vmatprep.subr.mxu0 0.0
    %742 = vmatpush2.msra.mxu0 0.0
    %743 = vmatprep.subr.mxu0 0.0
    %744 = vmatpush2.msra.mxu0 0.0
    %745 = vmatprep.subr.mxu0 0.0
    %746 = vmatpush2.msra.mxu0 0.0
    %747 = vmatprep.subr.mxu0 0.0
    %748 = vmatpush2.msra.mxu0 0.0
    %749 = vmatprep.subr.mxu0 0.0
    %750 = vmatpush2.msra.mxu0 0.0
    %751 = vmatprep.subr.mxu0 0.0
    %752 = vmatpush2.msra.mxu0 0.0
    %753 = vmatprep.mubr.f32.mxu0 0.0
    %754 = vmatmul.mubr.f32.gmra.mxu0 %v688
    %v755 = vpop.f32.mrf.mxu0
    %v756 = vadd.f32 %v686, %v755
    %v757 = vpop.f32.mrf.mxu0
    %758 = vdwg.mxu0
    %vm759 = vcmask 779264
    %760 = vst.msk [vmem:[#allocation3] sm:$0x3] %vm759, %v756
    %s761 = scalar_lea.vmem %s1, 2
    %v762 = vld [vmem:[%s761] sm:$0x3]
    %763 = vmatprep.subr.mxu0 0.0
    %764 = vmatpush1.msra.mxu0 %v680
    %765 = vmatprep.subr.mxu0 0.0
    %766 = vmatpush1.msra.mxu0 %v679
    %767 = vmatprep.subr.mxu0 0.0
    %768 = vmatpush1.msra.mxu0 %v678
    %769 = vmatprep.subr.mxu0 0.0
    %770 = vmatpush1.msra.mxu0 %v677
    %771 = vmatprep.subr.mxu0 0.0
    %772 = vmatpush1.msra.mxu0 %v676
    %773 = vmatprep.subr.mxu0 0.0
    %774 = vmatpush1.msra.mxu0 %v675
    %775 = vmatprep.subr.mxu0 0.0
    %776 = vmatpush1.msra.mxu0 %v674
    %777 = vmatprep.subr.mxu0 0.0
    %778 = vmatpush1.msra.mxu0 %v673
    %779 = vmatprep.subr.mxu0 0.0
    %780 = vmatpush1.msra.mxu0 %v672
    %781 = vmatprep.subr.mxu0 0.0
    %782 = vmatpush1.msra.mxu0 %v671
    %783 = vmatprep.subr.mxu0 0.0
    %784 = vmatpush1.msra.mxu0 %v670
    %785 = vmatprep.subr.mxu0 0.0
    %786 = vmatpush1.msra.mxu0 %v669
    %787 = vmatprep.subr.mxu0 0.0
    %788 = vmatpush1.msra.mxu0 %v668
    %789 = vmatprep.subr.mxu0 0.0
    %790 = vmatpush1.msra.mxu0 %v667
    %791 = vmatprep.subr.mxu0 0.0
    %792 = vmatpush1.msra.mxu0 %v666
    %793 = vmatprep.subr.mxu0 0.0
    %794 = vmatpush1.msra.mxu0 %v665
    %795 = vmatprep.subr.mxu0 0.0
    %796 = vmatpush2.msra.mxu0 0.0
    %797 = vmatprep.subr.mxu0 0.0
    %798 = vmatpush2.msra.mxu0 0.0
    %799 = vmatprep.subr.mxu0 0.0
    %800 = vmatpush2.msra.mxu0 0.0
    %801 = vmatprep.subr.mxu0 0.0
    %802 = vmatpush2.msra.mxu0 0.0
    %803 = vmatprep.subr.mxu0 0.0
    %804 = vmatpush2.msra.mxu0 0.0
    %805 = vmatprep.subr.mxu0 0.0
    %806 = vmatpush2.msra.mxu0 0.0
    %807 = vmatprep.subr.mxu0 0.0
    %808 = vmatpush2.msra.mxu0 0.0
    %809 = vmatprep.subr.mxu0 0.0
    %810 = vmatpush2.msra.mxu0 0.0
    %811 = vmatprep.subr.mxu0 0.0
    %812 = vmatpush2.msra.mxu0 0.0
    %813 = vmatprep.subr.mxu0 0.0
    %814 = vmatpush2.msra.mxu0 0.0
    %815 = vmatprep.subr.mxu0 0.0
    %816 = vmatpush2.msra.mxu0 0.0
    %817 = vmatprep.subr.mxu0 0.0
    %818 = vmatpush2.msra.mxu0 0.0
    %819 = vmatprep.subr.mxu0 0.0
    %820 = vmatpush2.msra.mxu0 0.0
    %821 = vmatprep.subr.mxu0 0.0
    %822 = vmatpush2.msra.mxu0 0.0
    %823 = vmatprep.subr.mxu0 0.0
    %824 = vmatpush2.msra.mxu0 0.0
    %825 = vmatprep.subr.mxu0 0.0
    %826 = vmatpush2.msra.mxu0 0.0
    %827 = vmatprep.mubr.f32.mxu0 0.0
    %828 = vmatmul.mubr.f32.gmra.mxu0 %v762
    %v829 = vpop.f32.mrf.mxu0
    %v830 = vadd.f32 %v686, %v829
    %v831 = vpop.f32.mrf.mxu0
    %832 = vdwg.mxu0
    %s833 = scalar_lea.vmem [#allocation3], 2
    %834 = vst.msk [vmem:[%s833] sm:$0x3] %vm759, %v830
    %s835 = scalar_lea.vmem %s1, 4
    %v836 = vld [vmem:[%s835] sm:$0x3]
    %837 = vmatprep.subr.mxu0 0.0
    %838 = vmatpush1.msra.mxu0 %v680
    %839 = vmatprep.subr.mxu0 0.0
    %840 = vmatpush1.msra.mxu0 %v679
    %841 = vmatprep.subr.mxu0 0.0
    %842 = vmatpush1.msra.mxu0 %v678
    %843 = vmatprep.subr.mxu0 0.0
    %844 = vmatpush1.msra.mxu0 %v677
    %845 = vmatprep.subr.mxu0 0.0
    %846 = vmatpush1.msra.mxu0 %v676
    %847 = vmatprep.subr.mxu0 0.0
    %848 = vmatpush1.msra.mxu0 %v675
    %849 = vmatprep.subr.mxu0 0.0
    %850 = vmatpush1.msra.mxu0 %v674
    %851 = vmatprep.subr.mxu0 0.0
    %852 = vmatpush1.msra.mxu0 %v673
    %853 = vmatprep.subr.mxu0 0.0
    %854 = vmatpush1.msra.mxu0 %v672
    %855 = vmatprep.subr.mxu0 0.0
    %856 = vmatpush1.msra.mxu0 %v671
    %857 = vmatprep.subr.mxu0 0.0
    %858 = vmatpush1.msra.mxu0 %v670
    %859 = vmatprep.subr.mxu0 0.0
    %860 = vmatpush1.msra.mxu0 %v669
    %861 = vmatprep.subr.mxu0 0.0
    %862 = vmatpush1.msra.mxu0 %v668
    %863 = vmatprep.subr.mxu0 0.0
    %864 = vmatpush1.msra.mxu0 %v667
    %865 = vmatprep.subr.mxu0 0.0
    %866 = vmatpush1.msra.mxu0 %v666
    %867 = vmatprep.subr.mxu0 0.0
    %868 = vmatpush1.msra.mxu0 %v665
    %869 = vmatprep.subr.mxu0 0.0
    %870 = vmatpush2.msra.mxu0 0.0
    %871 = vmatprep.subr.mxu0 0.0
    %872 = vmatpush2.msra.mxu0 0.0
    %873 = vmatprep.subr.mxu0 0.0
    %874 = vmatpush2.msra.mxu0 0.0
    %875 = vmatprep.subr.mxu0 0.0
    %876 = vmatpush2.msra.mxu0 0.0
    %877 = vmatprep.subr.mxu0 0.0
    %878 = vmatpush2.msra.mxu0 0.0
    %879 = vmatprep.subr.mxu0 0.0
    %880 = vmatpush2.msra.mxu0 0.0
    %881 = vmatprep.subr.mxu0 0.0
    %882 = vmatpush2.msra.mxu0 0.0
    %883 = vmatprep.subr.mxu0 0.0
    %884 = vmatpush2.msra.mxu0 0.0
    %885 = vmatprep.subr.mxu0 0.0
    %886 = vmatpush2.msra.mxu0 0.0
    %887 = vmatprep.subr.mxu0 0.0
    %888 = vmatpush2.msra.mxu0 0.0
    %889 = vmatprep.subr.mxu0 0.0
    %890 = vmatpush2.msra.mxu0 0.0
    %891 = vmatprep.subr.mxu0 0.0
    %892 = vmatpush2.msra.mxu0 0.0
    %893 = vmatprep.subr.mxu0 0.0
    %894 = vmatpush2.msra.mxu0 0.0
    %895 = vmatprep.subr.mxu0 0.0
    %896 = vmatpush2.msra.mxu0 0.0
    %897 = vmatprep.subr.mxu0 0.0
    %898 = vmatpush2.msra.mxu0 0.0
    %899 = vmatprep.subr.mxu0 0.0
    %900 = vmatpush2.msra.mxu0 0.0
    %901 = vmatprep.mubr.f32.mxu0 0.0
    %902 = vmatmul.mubr.f32.gmra.mxu0 %v836
    %v903 = vpop.f32.mrf.mxu0
    %v904 = vadd.f32 %v686, %v903
    %v905 = vpop.f32.mrf.mxu0
    %906 = vdwg.mxu0
    %s907 = scalar_lea.vmem [#allocation3], 4
    %908 = vst.msk [vmem:[%s907] sm:$0x3] %vm759, %v904
    %s909 = scalar_lea.vmem %s1, 6
    %v910 = vld [vmem:[%s909] sm:$0x3]
    %911 = vmatprep.subr.mxu0 0.0
    %912 = vmatpush1.msra.mxu0 %v680
    %913 = vmatprep.subr.mxu0 0.0
    %914 = vmatpush1.msra.mxu0 %v679
    %915 = vmatprep.subr.mxu0 0.0
    %916 = vmatpush1.msra.mxu0 %v678
    %917 = vmatprep.subr.mxu0 0.0
    %918 = vmatpush1.msra.mxu0 %v677
    %919 = vmatprep.subr.mxu0 0.0
    %920 = vmatpush1.msra.mxu0 %v676
    %921 = vmatprep.subr.mxu0 0.0
    %922 = vmatpush1.msra.mxu0 %v675
    %923 = vmatprep.subr.mxu0 0.0
    %924 = vmatpush1.msra.mxu0 %v674
    %925 = vmatprep.subr.mxu0 0.0
    %926 = vmatpush1.msra.mxu0 %v673
    %927 = vmatprep.subr.mxu0 0.0
    %928 = vmatpush1.msra.mxu0 %v672
    %929 = vmatprep.subr.mxu0 0.0
    %930 = vmatpush1.msra.mxu0 %v671
    %931 = vmatprep.subr.mxu0 0.0
    %932 = vmatpush1.msra.mxu0 %v670
    %933 = vmatprep.subr.mxu0 0.0
    %934 = vmatpush1.msra.mxu0 %v669
    %935 = vmatprep.subr.mxu0 0.0
    %936 = vmatpush1.msra.mxu0 %v668
    %937 = vmatprep.subr.mxu0 0.0
    %938 = vmatpush1.msra.mxu0 %v667
    %939 = vmatprep.subr.mxu0 0.0
    %940 = vmatpush1.msra.mxu0 %v666
    %941 = vmatprep.subr.mxu0 0.0
    %942 = vmatpush1.msra.mxu0 %v665
    %943 = vmatprep.subr.mxu0 0.0
    %944 = vmatpush2.msra.mxu0 0.0
    %945 = vmatprep.subr.mxu0 0.0
    %946 = vmatpush2.msra.mxu0 0.0
    %947 = vmatprep.subr.mxu0 0.0
    %948 = vmatpush2.msra.mxu0 0.0
    %949 = vmatprep.subr.mxu0 0.0
    %950 = vmatpush2.msra.mxu0 0.0
    %951 = vmatprep.subr.mxu0 0.0
    %952 = vmatpush2.msra.mxu0 0.0
    %953 = vmatprep.subr.mxu0 0.0
    %954 = vmatpush2.msra.mxu0 0.0
    %955 = vmatprep.subr.mxu0 0.0
    %956 = vmatpush2.msra.mxu0 0.0
    %957 = vmatprep.subr.mxu0 0.0
    %958 = vmatpush2.msra.mxu0 0.0
    %959 = vmatprep.subr.mxu0 0.0
    %960 = vmatpush2.msra.mxu0 0.0
    %961 = vmatprep.subr.mxu0 0.0
    %962 = vmatpush2.msra.mxu0 0.0
    %963 = vmatprep.subr.mxu0 0.0
    %964 = vmatpush2.msra.mxu0 0.0
    %965 = vmatprep.subr.mxu0 0.0
    %966 = vmatpush2.msra.mxu0 0.0
    %967 = vmatprep.subr.mxu0 0.0
    %968 = vmatpush2.msra.mxu0 0.0
    %969 = vmatprep.subr.mxu0 0.0
    %970 = vmatpush2.msra.mxu0 0.0
    %971 = vmatprep.subr.mxu0 0.0
    %972 = vmatpush2.msra.mxu0 0.0
    %973 = vmatprep.subr.mxu0 0.0
    %974 = vmatpush2.msra.mxu0 0.0
    %975 = vmatprep.mubr.f32.mxu0 0.0
    %976 = vmatmul.mubr.f32.gmra.mxu0 %v910
    %v977 = vpop.f32.mrf.mxu0
    %v978 = vadd.f32 %v686, %v977
    %v979 = vpop.f32.mrf.mxu0
    %980 = vdwg.mxu0
    %s981 = scalar_lea.vmem [#allocation3], 6
    %982 = vst.msk [vmem:[%s981] sm:$0x3] %vm759, %v978
    %s983 = scalar_lea.vmem %s1, 8
    %v984 = vld [vmem:[%s983] sm:$0x3]
    %985 = vmatprep.subr.mxu0 0.0
    %986 = vmatpush1.msra.mxu0 %v680
    %987 = vmatprep.subr.mxu0 0.0
    %988 = vmatpush1.msra.mxu0 %v679
    %989 = vmatprep.subr.mxu0 0.0
    %990 = vmatpush1.msra.mxu0 %v678
    %991 = vmatprep.subr.mxu0 0.0
    %992 = vmatpush1.msra.mxu0 %v677
    %993 = vmatprep.subr.mxu0 0.0
    %994 = vmatpush1.msra.mxu0 %v676
    %995 = vmatprep.subr.mxu0 0.0
    %996 = vmatpush1.msra.mxu0 %v675
    %997 = vmatprep.subr.mxu0 0.0
    %998 = vmatpush1.msra.mxu0 %v674
    %999 = vmatprep.subr.mxu0 0.0
    %1000 = vmatpush1.msra.mxu0 %v673
    %1001 = vmatprep.subr.mxu0 0.0
    %1002 = vmatpush1.msra.mxu0 %v672
    %1003 = vmatprep.subr.mxu0 0.0
    %1004 = vmatpush1.msra.mxu0 %v671
    %1005 = vmatprep.subr.mxu0 0.0
    %1006 = vmatpush1.msra.mxu0 %v670
    %1007 = vmatprep.subr.mxu0 0.0
    %1008 = vmatpush1.msra.mxu0 %v669
    %1009 = vmatprep.subr.mxu0 0.0
    %1010 = vmatpush1.msra.mxu0 %v668
    %1011 = vmatprep.subr.mxu0 0.0
    %1012 = vmatpush1.msra.mxu0 %v667
    %1013 = vmatprep.subr.mxu0 0.0
    %1014 = vmatpush1.msra.mxu0 %v666
    %1015 = vmatprep.subr.mxu0 0.0
    %1016 = vmatpush1.msra.mxu0 %v665
    %1017 = vmatprep.subr.mxu0 0.0
    %1018 = vmatpush2.msra.mxu0 0.0
    %1019 = vmatprep.subr.mxu0 0.0
    %1020 = vmatpush2.msra.mxu0 0.0
    %1021 = vmatprep.subr.mxu0 0.0
    %1022 = vmatpush2.msra.mxu0 0.0
    %1023 = vmatprep.subr.mxu0 0.0
    %1024 = vmatpush2.msra.mxu0 0.0
    %1025 = vmatprep.subr.mxu0 0.0
    %1026 = vmatpush2.msra.mxu0 0.0
    %1027 = vmatprep.subr.mxu0 0.0
    %1028 = vmatpush2.msra.mxu0 0.0
    %1029 = vmatprep.subr.mxu0 0.0
    %1030 = vmatpush2.msra.mxu0 0.0
    %1031 = vmatprep.subr.mxu0 0.0
    %1032 = vmatpush2.msra.mxu0 0.0
    %1033 = vmatprep.subr.mxu0 0.0
    %1034 = vmatpush2.msra.mxu0 0.0
    %1035 = vmatprep.subr.mxu0 0.0
    %1036 = vmatpush2.msra.mxu0 0.0
    %1037 = vmatprep.subr.mxu0 0.0
    %1038 = vmatpush2.msra.mxu0 0.0
    %1039 = vmatprep.subr.mxu0 0.0
    %1040 = vmatpush2.msra.mxu0 0.0
    %1041 = vmatprep.subr.mxu0 0.0
    %1042 = vmatpush2.msra.mxu0 0.0
    %1043 = vmatprep.subr.mxu0 0.0
    %1044 = vmatpush2.msra.mxu0 0.0
    %1045 = vmatprep.subr.mxu0 0.0
    %1046 = vmatpush2.msra.mxu0 0.0
    %1047 = vmatprep.subr.mxu0 0.0
    %1048 = vmatpush2.msra.mxu0 0.0
    %1049 = vmatprep.mubr.f32.mxu0 0.0
    %1050 = vmatmul.mubr.f32.gmra.mxu0 %v984
    %v1051 = vpop.f32.mrf.mxu0
    %v1052 = vadd.f32 %v686, %v1051
    %v1053 = vpop.f32.mrf.mxu0
    %1054 = vdwg.mxu0
    %s1055 = scalar_lea.vmem [#allocation3], 8
    %1056 = vst.msk [vmem:[%s1055] sm:$0x3] %vm759, %v1052
    %v1057 = vld [vmem:[%s3] sm:$0xff]
    %v1058 = vld [vmem:[%s3 + $0x8] sm:$0xff]
    %v1059 = vld [vmem:[%s3 + $0x10] sm:$0xff]
    %v1060 = vld [vmem:[%s3 + $0x18] sm:$0xff]
    %v1061 = vld [vmem:[%s4] sm:$0x1]
    %v1063 = vlaneseq
    %v1064 = vshrl.u32 %v1063, 7
    %v1065 = vsub.s32 0, %v1064
    %v1066 = vrot.slane %v1061, %v1065
    %v1068 = vld [vmem:[%s5] sm:$0x1]
    %v1069 = vld [vmem:[%s6] sm:$0xff]
    %v1070 = vld [vmem:[%s6 + $0x8] sm:$0xff]
    %v1071 = vld [vmem:[%s6 + $0x10] sm:$0xff]
    %v1072 = vld [vmem:[%s6 + $0x18] sm:$0xff]
    %v1073 = vld [vmem:[%s9] sm:$0xff]
    %v1074 = vld [vmem:[%s9 + $0x8] sm:$0xff]
    %v1075 = vld [vmem:[%s9 + $0x10] sm:$0xff]
    %v1076 = vld [vmem:[%s9 + $0x18] sm:$0xff]
    %v1077 = vld [vmem:[%s10] sm:$0x1]
    %v1079 = vlaneseq
    %v1080 = vshrl.u32 %v1079, 7
    %v1081 = vsub.s32 0, %v1080
    %v1082 = vrot.slane %v1077, %v1081
    %v1084 = vld [vmem:[%s11] sm:$0xff]
    %v1085 = vld [vmem:[%s11 + $0x8] sm:$0xff]
    %v1086 = vld [vmem:[%s11 + $0x10] sm:$0xff]
    %v1087 = vld [vmem:[%s11 + $0x18] sm:$0xff]
    %v1088 = vld [vmem:[%s12] sm:$0x1]
    %v1090 = vlaneseq
    %v1091 = vshrl.u32 %v1090, 7
    %v1092 = vsub.s32 0, %v1091
    %v1093 = vrot.slane %v1088, %v1092
    %v1096 = vsel %vm50, 0.0, 0
    %1098 = vmatprep.subr.mxu0 0.0
    %1099 = vmatpush1.msra.mxu0 0.0
    %1100 = vmatprep.subr.mxu0 0.0
    %1101 = vmatpush1.msra.mxu0 0.0
    %1102 = vmatprep.subr.mxu0 0.0
    %1103 = vmatpush1.msra.mxu0 0.0
    %1104 = vmatprep.subr.mxu0 0.0
    %1105 = vmatpush1.msra.mxu0 0.0
    %1106 = vmatprep.subr.mxu0 0.0
    %1107 = vmatpush1.msra.mxu0 0.0
    %1108 = vmatprep.subr.mxu0 0.0
    %1109 = vmatpush1.msra.mxu0 0.0
    %1110 = vmatprep.subr.mxu0 0.0
    %1111 = vmatpush1.msra.mxu0 0.0
    %1112 = vmatprep.subr.mxu0 0.0
    %1113 = vmatpush1.msra.mxu0 0.0
    %1114 = vmatprep.subr.mxu0 0.0
    %1115 = vmatpush1.msra.mxu0 0.0
    %1116 = vmatprep.subr.mxu0 0.0
    %1117 = vmatpush1.msra.mxu0 0.0
    %1118 = vmatprep.subr.mxu0 0.0
    %1119 = vmatpush1.msra.mxu0 0.0
    %1120 = vmatprep.subr.mxu0 0.0
    %1121 = vmatpush1.msra.mxu0 0.0
    %1122 = vmatprep.subr.mxu0 0.0
    %1123 = vmatpush1.msra.mxu0 %v1060
    %1124 = vmatprep.subr.mxu0 0.0
    %1125 = vmatpush1.msra.mxu0 %v1059
    %1126 = vmatprep.subr.mxu0 0.0
    %1127 = vmatpush1.msra.mxu0 %v1058
    %1128 = vmatprep.subr.mxu0 0.0
    %1129 = vmatpush1.msra.mxu0 %v1057
    %1130 = vmatprep.subr.mxu0 0.0
    %1131 = vmatpush2.msra.mxu0 0.0
    %1132 = vmatprep.subr.mxu0 0.0
    %1133 = vmatpush2.msra.mxu0 0.0
    %1134 = vmatprep.subr.mxu0 0.0
    %1135 = vmatpush2.msra.mxu0 0.0
    %1136 = vmatprep.subr.mxu0 0.0
    %1137 = vmatpush2.msra.mxu0 0.0
    %1138 = vmatprep.subr.mxu0 0.0
    %1139 = vmatpush2.msra.mxu0 0.0
    %1140 = vmatprep.subr.mxu0 0.0
    %1141 = vmatpush2.msra.mxu0 0.0
    %1142 = vmatprep.subr.mxu0 0.0
    %1143 = vmatpush2.msra.mxu0 0.0
    %1144 = vmatprep.subr.mxu0 0.0
    %1145 = vmatpush2.msra.mxu0 0.0
    %1146 = vmatprep.subr.mxu0 0.0
    %1147 = vmatpush2.msra.mxu0 0.0
    %1148 = vmatprep.subr.mxu0 0.0
    %1149 = vmatpush2.msra.mxu0 0.0
    %1150 = vmatprep.subr.mxu0 0.0
    %1151 = vmatpush2.msra.mxu0 0.0
    %1152 = vmatprep.subr.mxu0 0.0
    %1153 = vmatpush2.msra.mxu0 0.0
    %1154 = vmatprep.subr.mxu0 0.0
    %1155 = vmatpush2.msra.mxu0 0.0
    %1156 = vmatprep.subr.mxu0 0.0
    %1157 = vmatpush2.msra.mxu0 0.0
    %1158 = vmatprep.subr.mxu0 0.0
    %1159 = vmatpush2.msra.mxu0 0.0
    %1160 = vmatprep.subr.mxu0 0.0
    %1161 = vmatpush2.msra.mxu0 0.0
    %1162 = vmatprep.mubr.f32.mxu0 0.0
    %1163 = vmatmul.mubr.f32.gmra.mxu0 %v1096
    %v1164 = vpop.f32.mrf.mxu0
    %v1165 = vadd.f32 %v1066, %v1164
    %v1166 = vpop.f32.mrf.mxu0
    %1167 = vdwg.mxu0
    %v1168 = vld [vmem:[#allocation2] sm:$0x3]
    %v1169 = vld [vmem:[#allocation2 + $0x2] sm:$0x3]
    %v1170 = vld [vmem:[#allocation2 + $0x4] sm:$0x3]
    %v1171 = vld [vmem:[#allocation2 + $0x6] sm:$0x3]
    %v1172 = vld [vmem:[#allocation2 + $0x8] sm:$0x3]
    %v1173 = vld [vmem:[#allocation2 + $0xa] sm:$0x3]
    %v1174 = vld [vmem:[#allocation2 + $0xc] sm:$0x3]
    %v1175 = vld [vmem:[#allocation2 + $0xe] sm:$0x3]
    %v1176 = vadd.f32 %v1168, %v1165
    %v1177 = vadd.f32 %v1169, %v1165
    %v1178 = vadd.f32 %v1170, %v1165
    %v1179 = vadd.f32 %v1171, %v1165
    %v1180 = vadd.f32 %v1172, %v1165
    %v1181 = vadd.f32 %v1173, %v1165
    %v1182 = vadd.f32 %v1174, %v1165
    %v1183 = vadd.f32 %v1175, %v1165
    %v1184 = vtanh.pop %v1176
    %v1185 = vtanh.pop %v1177
    %v1186 = vtanh.pop %v1178
    %v1187 = vtanh.pop %v1179
    %v1188 = vtanh.pop %v1180
    %v1189 = vtanh.pop %v1181
    %v1190 = vtanh.pop %v1182
    %v1191 = vtanh.pop %v1183
    %v1193 = vlaneseq
    %v1194 = vshrl.u32 %v1193, 7
    %v1195 = vsub.s32 0, %v1194
    %v1196 = vrot.slane %v1068, %v1195
    %v1198 = vmul.f32 %v1184, %v1196
    %v1199 = vmul.f32 %v1185, %v1196
    %v1200 = vmul.f32 %v1186, %v1196
    %v1201 = vmul.f32 %v1187, %v1196
    %v1202 = vmul.f32 %v1188, %v1196
    %v1203 = vmul.f32 %v1189, %v1196
    %v1204 = vmul.f32 %v1190, %v1196
    %v1205 = vmul.f32 %v1191, %v1196
    %v1206 = vsel %vm124, %v1198, 0.0
    %1207 = vadd.xlane.f32.xlu0 %v1206
    %v1208 = vpop.xlane.xlu0 %1207
    %v1209 = vsel %vm124, %v1199, 0.0
    %1210 = vadd.xlane.f32.xlu0 %v1209
    %v1211 = vpop.xlane.xlu0 %1210
    %v1212 = vsel %vm124, %v1200, 0.0
    %1213 = vadd.xlane.f32.xlu0 %v1212
    %v1214 = vpop.xlane.xlu0 %1213
    %v1215 = vsel %vm124, %v1201, 0.0
    %1216 = vadd.xlane.f32.xlu0 %v1215
    %v1217 = vpop.xlane.xlu0 %1216
    %v1218 = vsel %vm124, %v1202, 0.0
    %1219 = vadd.xlane.f32.xlu0 %v1218
    %v1220 = vpop.xlane.xlu0 %1219
    %v1221 = vsel %vm124, %v1203, 0.0
    %1222 = vadd.xlane.f32.xlu0 %v1221
    %v1223 = vpop.xlane.xlu0 %1222
    %v1224 = vsel %vm124, %v1204, 0.0
    %1225 = vadd.xlane.f32.xlu0 %v1224
    %v1226 = vpop.xlane.xlu0 %1225
    %v1227 = vsel %vm124, %v1205, 0.0
    %1228 = vadd.xlane.f32.xlu0 %v1227
    %v1229 = vpop.xlane.xlu0 %1228
    %vm1230 = vcmask 1041408
    %v1231 = vsel %vm1230, %v1208, -inf
    %v1232 = vsel %vm1230, %v1211, -inf
    %v1233 = vsel %vm1230, %v1214, -inf
    %v1234 = vsel %vm1230, %v1217, -inf
    %v1235 = vsel %vm1230, %v1220, -inf
    %v1236 = vmax.f32 %v1231, %v1235
    %v1237 = vsel %vm1230, %v1223, -inf
    %v1238 = vmax.f32 %v1232, %v1237
    %v1239 = vsel %vm1230, %v1226, -inf
    %v1240 = vmax.f32 %v1233, %v1239
    %v1241 = vsel %vm1230, %v1229, -inf
    %v1242 = vmax.f32 %v1234, %v1241
    %v1243 = vmax.f32 %v1236, %v1238
    %v1244 = vmax.f32 %v1240, %v1242
    %v1245 = vmax.f32 %v1243, %v1244
    %v1246 = vsub.f32 %v1208, %v1245
    %v1247 = vsub.f32 %v1211, %v1245
    %v1248 = vsub.f32 %v1214, %v1245
    %v1249 = vsub.f32 %v1217, %v1245
    %v1250 = vsub.f32 %v1220, %v1245
    %v1251 = vsub.f32 %v1223, %v1245
    %v1252 = vsub.f32 %v1226, %v1245
    %v1253 = vsub.f32 %v1229, %v1245
    %v1254 = vmul.f32 %v1246, 1.442695
    %v1255 = vpow.pop %v1254
    %v1256 = vmul.f32 %v1247, 1.442695
    %v1257 = vpow.pop %v1256
    %v1258 = vmul.f32 %v1248, 1.442695
    %v1259 = vpow.pop %v1258
    %v1260 = vmul.f32 %v1249, 1.442695
    %v1261 = vpow.pop %v1260
    %v1262 = vmul.f32 %v1250, 1.442695
    %v1263 = vpow.pop %v1262
    %v1264 = vmul.f32 %v1251, 1.442695
    %v1265 = vpow.pop %v1264
    %v1266 = vmul.f32 %v1252, 1.442695
    %v1267 = vpow.pop %v1266
    %v1268 = vmul.f32 %v1253, 1.442695
    %v1269 = vpow.pop %v1268
    %v1270 = vsel %vm1230, %v1255, 0.0
    %v1271 = vsel %vm1230, %v1257, 0.0
    %v1272 = vadd.f32 %v1270, %v1271
    %v1273 = vsel %vm1230, %v1259, 0.0
    %v1274 = vadd.f32 %v1272, %v1273
    %v1275 = vsel %vm1230, %v1261, 0.0
    %v1276 = vadd.f32 %v1274, %v1275
    %v1277 = vsel %vm1230, %v1263, 0.0
    %v1278 = vadd.f32 %v1276, %v1277
    %v1279 = vsel %vm1230, %v1265, 0.0
    %v1280 = vadd.f32 %v1278, %v1279
    %v1281 = vsel %vm1230, %v1267, 0.0
    %v1282 = vadd.f32 %v1280, %v1281
    %v1283 = vsel %vm1230, %v1269, 0.0
    %v1284 = vadd.f32 %v1282, %v1283
    %v1285 = vrcp.pop %v1284
    %v1286 = vmul.f32 %v1255, %v1285
    %v1287 = vmul.f32 %v1257, %v1285
    %v1288 = vmul.f32 %v1259, %v1285
    %v1289 = vmul.f32 %v1261, %v1285
    %v1290 = vmul.f32 %v1263, %v1285
    %v1291 = vmul.f32 %v1265, %v1285
    %v1292 = vmul.f32 %v1267, %v1285
    %v1293 = vmul.f32 %v1269, %v1285
    %v1294 = vld [vmem:[%s0] sm:$0x3]
    %v1295 = vld [vmem:[%s0 + $0x2] sm:$0x3]
    %v1296 = vld [vmem:[%s0 + $0x4] sm:$0x3]
    %v1297 = vld [vmem:[%s0 + $0x6] sm:$0x3]
    %v1298 = vld [vmem:[%s0 + $0x8] sm:$0x3]
    %v1299 = vld [vmem:[%s0 + $0xa] sm:$0x3]
    %v1300 = vld [vmem:[%s0 + $0xc] sm:$0x3]
    %v1301 = vld [vmem:[%s0 + $0xe] sm:$0x3]
    %v1302 = vmul.f32 %v1294, %v1286
    %v1303 = vmul.f32 %v1295, %v1287
    %v1304 = vmul.f32 %v1296, %v1288
    %v1305 = vmul.f32 %v1297, %v1289
    %v1306 = vmul.f32 %v1298, %v1290
    %v1307 = vmul.f32 %v1299, %v1291
    %v1308 = vmul.f32 %v1300, %v1292
    %v1309 = vmul.f32 %v1301, %v1293
    %v1310 = vsel %vm124, %v1302, 0.0
    %v1311 = vsel %vm124, %v1303, 0.0
    %v1312 = vadd.f32 %v1310, %v1311
    %v1313 = vsel %vm124, %v1304, 0.0
    %v1314 = vadd.f32 %v1312, %v1313
    %v1315 = vsel %vm124, %v1305, 0.0
    %v1316 = vadd.f32 %v1314, %v1315
    %v1317 = vsel %vm124, %v1306, 0.0
    %v1318 = vadd.f32 %v1316, %v1317
    %v1319 = vsel %vm124, %v1307, 0.0
    %v1320 = vadd.f32 %v1318, %v1319
    %v1321 = vsel %vm124, %v1308, 0.0
    %v1322 = vadd.f32 %v1320, %v1321
    %v1323 = vsel %vm124, %v1309, 0.0
    %v1324 = vadd.f32 %v1322, %v1323
    %v1325 = vld [vmem:[#allocation3] sm:$0x3]
    %v1327 = vsel %vm50, %v1324, 0
    %1329 = vmatprep.subr.mxu0 0.0
    %1330 = vmatpush1.msra.mxu0 0.0
    %1331 = vmatprep.subr.mxu0 0.0
    %1332 = vmatpush1.msra.mxu0 0.0
    %1333 = vmatprep.subr.mxu0 0.0
    %1334 = vmatpush1.msra.mxu0 0.0
    %1335 = vmatprep.subr.mxu0 0.0
    %1336 = vmatpush1.msra.mxu0 0.0
    %1337 = vmatprep.subr.mxu0 0.0
    %1338 = vmatpush1.msra.mxu0 0.0
    %1339 = vmatprep.subr.mxu0 0.0
    %1340 = vmatpush1.msra.mxu0 0.0
    %1341 = vmatprep.subr.mxu0 0.0
    %1342 = vmatpush1.msra.mxu0 0.0
    %1343 = vmatprep.subr.mxu0 0.0
    %1344 = vmatpush1.msra.mxu0 0.0
    %1345 = vmatprep.subr.mxu0 0.0
    %1346 = vmatpush1.msra.mxu0 0.0
    %1347 = vmatprep.subr.mxu0 0.0
    %1348 = vmatpush1.msra.mxu0 0.0
    %1349 = vmatprep.subr.mxu0 0.0
    %1350 = vmatpush1.msra.mxu0 0.0
    %1351 = vmatprep.subr.mxu0 0.0
    %1352 = vmatpush1.msra.mxu0 0.0
    %1353 = vmatprep.subr.mxu0 0.0
    %1354 = vmatpush1.msra.mxu0 %v1072
    %1355 = vmatprep.subr.mxu0 0.0
    %1356 = vmatpush1.msra.mxu0 %v1071
    %1357 = vmatprep.subr.mxu0 0.0
    %1358 = vmatpush1.msra.mxu0 %v1070
    %1359 = vmatprep.subr.mxu0 0.0
    %1360 = vmatpush1.msra.mxu0 %v1069
    %1361 = vmatprep.subr.mxu0 0.0
    %1362 = vmatpush2.msra.mxu0 0.0
    %1363 = vmatprep.subr.mxu0 0.0
    %1364 = vmatpush2.msra.mxu0 0.0
    %1365 = vmatprep.subr.mxu0 0.0
    %1366 = vmatpush2.msra.mxu0 0.0
    %1367 = vmatprep.subr.mxu0 0.0
    %1368 = vmatpush2.msra.mxu0 0.0
    %1369 = vmatprep.subr.mxu0 0.0
    %1370 = vmatpush2.msra.mxu0 0.0
    %1371 = vmatprep.subr.mxu0 0.0
    %1372 = vmatpush2.msra.mxu0 0.0
    %1373 = vmatprep.subr.mxu0 0.0
    %1374 = vmatpush2.msra.mxu0 0.0
    %1375 = vmatprep.subr.mxu0 0.0
    %1376 = vmatpush2.msra.mxu0 0.0
    %1377 = vmatprep.subr.mxu0 0.0
    %1378 = vmatpush2.msra.mxu0 0.0
    %1379 = vmatprep.subr.mxu0 0.0
    %1380 = vmatpush2.msra.mxu0 0.0
    %1381 = vmatprep.subr.mxu0 0.0
    %1382 = vmatpush2.msra.mxu0 0.0
    %1383 = vmatprep.subr.mxu0 0.0
    %1384 = vmatpush2.msra.mxu0 0.0
    %1385 = vmatprep.subr.mxu0 0.0
    %1386 = vmatpush2.msra.mxu0 0.0
    %1387 = vmatprep.subr.mxu0 0.0
    %1388 = vmatpush2.msra.mxu0 0.0
    %1389 = vmatprep.subr.mxu0 0.0
    %1390 = vmatpush2.msra.mxu0 0.0
    %1391 = vmatprep.subr.mxu0 0.0
    %1392 = vmatpush2.msra.mxu0 0.0
    %1393 = vmatprep.mubr.f32.mxu0 0.0
    %1394 = vmatmul.mubr.f32.gmra.mxu0 %v1327
    %v1395 = vpop.f32.mrf.mxu0
    %v1396 = vadd.f32 %v1325, %v1395
    %v1397 = vpop.f32.mrf.mxu0
    %1398 = vdwg.mxu0
    %1399 = vmatprep.subr.mxu0 0.0
    %1400 = vmatpush1.msra.mxu0 0.0
    %1401 = vmatprep.subr.mxu0 0.0
    %1402 = vmatpush1.msra.mxu0 0.0
    %1403 = vmatprep.subr.mxu0 0.0
    %1404 = vmatpush1.msra.mxu0 0.0
    %1405 = vmatprep.subr.mxu0 0.0
    %1406 = vmatpush1.msra.mxu0 0.0
    %1407 = vmatprep.subr.mxu0 0.0
    %1408 = vmatpush1.msra.mxu0 0.0
    %1409 = vmatprep.subr.mxu0 0.0
    %1410 = vmatpush1.msra.mxu0 0.0
    %1411 = vmatprep.subr.mxu0 0.0
    %1412 = vmatpush1.msra.mxu0 0.0
    %1413 = vmatprep.subr.mxu0 0.0
    %1414 = vmatpush1.msra.mxu0 0.0
    %1415 = vmatprep.subr.mxu0 0.0
    %1416 = vmatpush1.msra.mxu0 0.0
    %1417 = vmatprep.subr.mxu0 0.0
    %1418 = vmatpush1.msra.mxu0 0.0
    %1419 = vmatprep.subr.mxu0 0.0
    %1420 = vmatpush1.msra.mxu0 0.0
    %1421 = vmatprep.subr.mxu0 0.0
    %1422 = vmatpush1.msra.mxu0 0.0
    %1423 = vmatprep.subr.mxu0 0.0
    %1424 = vmatpush1.msra.mxu0 %v1076
    %1425 = vmatprep.subr.mxu0 0.0
    %1426 = vmatpush1.msra.mxu0 %v1075
    %1427 = vmatprep.subr.mxu0 0.0
    %1428 = vmatpush1.msra.mxu0 %v1074
    %1429 = vmatprep.subr.mxu0 0.0
    %1430 = vmatpush1.msra.mxu0 %v1073
    %1431 = vmatprep.subr.mxu0 0.0
    %1432 = vmatpush2.msra.mxu0 0.0
    %1433 = vmatprep.subr.mxu0 0.0
    %1434 = vmatpush2.msra.mxu0 0.0
    %1435 = vmatprep.subr.mxu0 0.0
    %1436 = vmatpush2.msra.mxu0 0.0
    %1437 = vmatprep.subr.mxu0 0.0
    %1438 = vmatpush2.msra.mxu0 0.0
    %1439 = vmatprep.subr.mxu0 0.0
    %1440 = vmatpush2.msra.mxu0 0.0
    %1441 = vmatprep.subr.mxu0 0.0
    %1442 = vmatpush2.msra.mxu0 0.0
    %1443 = vmatprep.subr.mxu0 0.0
    %1444 = vmatpush2.msra.mxu0 0.0
    %1445 = vmatprep.subr.mxu0 0.0
    %1446 = vmatpush2.msra.mxu0 0.0
    %1447 = vmatprep.subr.mxu0 0.0
    %1448 = vmatpush2.msra.mxu0 0.0
    %1449 = vmatprep.subr.mxu0 0.0
    %1450 = vmatpush2.msra.mxu0 0.0
    %1451 = vmatprep.subr.mxu0 0.0
    %1452 = vmatpush2.msra.mxu0 0.0
    %1453 = vmatprep.subr.mxu0 0.0
    %1454 = vmatpush2.msra.mxu0 0.0
    %1455 = vmatprep.subr.mxu0 0.0
    %1456 = vmatpush2.msra.mxu0 0.0
    %1457 = vmatprep.subr.mxu0 0.0
    %1458 = vmatpush2.msra.mxu0 0.0
    %1459 = vmatprep.subr.mxu0 0.0
    %1460 = vmatpush2.msra.mxu0 0.0
    %1461 = vmatprep.subr.mxu0 0.0
    %1462 = vmatpush2.msra.mxu0 0.0
    %1463 = vmatprep.mubr.f32.mxu0 0.0
    %1464 = vmatmul.mubr.f32.gmra.mxu0 %v1096
    %v1465 = vpop.f32.mrf.mxu0
    %v1466 = vadd.f32 %v1082, %v1465
    %v1467 = vpop.f32.mrf.mxu0
    %1468 = vdwg.mxu0
    %v1469 = vadd.f32 %v1396, %v1466
    %v1470 = vxor.u32 %v1469, 2147483648
    %v1471 = vmul.f32 %v1470, 1.442695
    %v1472 = vpow.pop %v1471
    %v1473 = vadd.f32 %v1472, 1.0
    %v1474 = vrcp.pop %v1473
    %v1475 = vmul.f32 1.0, %v1474
    %1477 = vrot.lane.b32.xlu0 %v1466, 64
    %v1478 = vpop.permute.xlu0 %1477
    %v1480 = vmul.f32 %v1475, %v1478
    %1482 = vrot.lane.b32.xlu0 %v1480, 64
    %v1483 = vpop.permute.xlu0 %1482
    %v1485 = vadd.f32 %v1396, %v1483
    %v1486 = vtanh.pop %v1485
    %v1487 = vsub.f32 1.0, %v1475
    %1489 = vrot.lane.b32.xlu0 %v1486, 96
    %v1490 = vpop.permute.xlu0 %1489
    %v1492 = vmul.f32 %v1487, %v1490
    %v1493 = vmul.f32 %v1475, 0.0
    %v1494 = vadd.f32 %v1492, %v1493
    %1496 = vrot.lane.b32.xlu0 %v1494, 96
    %v1497 = vpop.permute.xlu0 %1496
    %v1498 = vsel %vm50, %v1497, 0
    %1500 = vmatprep.subr.mxu0 0.0
    %1501 = vmatpush1.msra.mxu0 0.0
    %1502 = vmatprep.subr.mxu0 0.0
    %1503 = vmatpush1.msra.mxu0 0.0
    %1504 = vmatprep.subr.mxu0 0.0
    %1505 = vmatpush1.msra.mxu0 0.0
    %1506 = vmatprep.subr.mxu0 0.0
    %1507 = vmatpush1.msra.mxu0 0.0
    %1508 = vmatprep.subr.mxu0 0.0
    %1509 = vmatpush1.msra.mxu0 0.0
    %1510 = vmatprep.subr.mxu0 0.0
    %1511 = vmatpush1.msra.mxu0 0.0
    %1512 = vmatprep.subr.mxu0 0.0
    %1513 = vmatpush1.msra.mxu0 0.0
    %1514 = vmatprep.subr.mxu0 0.0
    %1515 = vmatpush1.msra.mxu0 0.0
    %1516 = vmatprep.subr.mxu0 0.0
    %1517 = vmatpush1.msra.mxu0 0.0
    %1518 = vmatprep.subr.mxu0 0.0
    %1519 = vmatpush1.msra.mxu0 0.0
    %1520 = vmatprep.subr.mxu0 0.0
    %1521 = vmatpush1.msra.mxu0 0.0
    %1522 = vmatprep.subr.mxu0 0.0
    %1523 = vmatpush1.msra.mxu0 0.0
    %1524 = vmatprep.subr.mxu0 0.0
    %1525 = vmatpush1.msra.mxu0 %v1087
    %1526 = vmatprep.subr.mxu0 0.0
    %1527 = vmatpush1.msra.mxu0 %v1086
    %1528 = vmatprep.subr.mxu0 0.0
    %1529 = vmatpush1.msra.mxu0 %v1085
    %1530 = vmatprep.subr.mxu0 0.0
    %1531 = vmatpush1.msra.mxu0 %v1084
    %1532 = vmatprep.subr.mxu0 0.0
    %1533 = vmatpush2.msra.mxu0 0.0
    %1534 = vmatprep.subr.mxu0 0.0
    %1535 = vmatpush2.msra.mxu0 0.0
    %1536 = vmatprep.subr.mxu0 0.0
    %1537 = vmatpush2.msra.mxu0 0.0
    %1538 = vmatprep.subr.mxu0 0.0
    %1539 = vmatpush2.msra.mxu0 0.0
    %1540 = vmatprep.subr.mxu0 0.0
    %1541 = vmatpush2.msra.mxu0 0.0
    %1542 = vmatprep.subr.mxu0 0.0
    %1543 = vmatpush2.msra.mxu0 0.0
    %1544 = vmatprep.subr.mxu0 0.0
    %1545 = vmatpush2.msra.mxu0 0.0
    %1546 = vmatprep.subr.mxu0 0.0
    %1547 = vmatpush2.msra.mxu0 0.0
    %1548 = vmatprep.subr.mxu0 0.0
    %1549 = vmatpush2.msra.mxu0 0.0
    %1550 = vmatprep.subr.mxu0 0.0
    %1551 = vmatpush2.msra.mxu0 0.0
    %1552 = vmatprep.subr.mxu0 0.0
    %1553 = vmatpush2.msra.mxu0 0.0
    %1554 = vmatprep.subr.mxu0 0.0
    %1555 = vmatpush2.msra.mxu0 0.0
    %1556 = vmatprep.subr.mxu0 0.0
    %1557 = vmatpush2.msra.mxu0 0.0
    %1558 = vmatprep.subr.mxu0 0.0
    %1559 = vmatpush2.msra.mxu0 0.0
    %1560 = vmatprep.subr.mxu0 0.0
    %1561 = vmatpush2.msra.mxu0 0.0
    %1562 = vmatprep.subr.mxu0 0.0
    %1563 = vmatpush2.msra.mxu0 0.0
    %1564 = vmatprep.mubr.f32.mxu0 0.0
    %1565 = vmatmul.mubr.f32.gmra.mxu0 %v1498
    %v1566 = vpop.f32.mrf.mxu0
    %v1567 = vadd.f32 %v1093, %v1566
    %v1568 = vpop.f32.mrf.mxu0
    %1569 = vdwg.mxu0
    %vm1570 = vcmask 123904
    %1571 = vst.msk [vmem:[#allocation4] sm:$0x3] %vm1570, %v1567
    %1572 = vmatprep.subr.mxu0 0.0
    %1573 = vmatpush1.msra.mxu0 0.0
    %1574 = vmatprep.subr.mxu0 0.0
    %1575 = vmatpush1.msra.mxu0 0.0
    %1576 = vmatprep.subr.mxu0 0.0
    %1577 = vmatpush1.msra.mxu0 0.0
    %1578 = vmatprep.subr.mxu0 0.0
    %1579 = vmatpush1.msra.mxu0 0.0
    %1580 = vmatprep.subr.mxu0 0.0
    %1581 = vmatpush1.msra.mxu0 0.0
    %1582 = vmatprep.subr.mxu0 0.0
    %1583 = vmatpush1.msra.mxu0 0.0
    %1584 = vmatprep.subr.mxu0 0.0
    %1585 = vmatpush1.msra.mxu0 0.0
    %1586 = vmatprep.subr.mxu0 0.0
    %1587 = vmatpush1.msra.mxu0 0.0
    %1588 = vmatprep.subr.mxu0 0.0
    %1589 = vmatpush1.msra.mxu0 0.0
    %1590 = vmatprep.subr.mxu0 0.0
    %1591 = vmatpush1.msra.mxu0 0.0
    %1592 = vmatprep.subr.mxu0 0.0
    %1593 = vmatpush1.msra.mxu0 0.0
    %1594 = vmatprep.subr.mxu0 0.0
    %1595 = vmatpush1.msra.mxu0 0.0
    %1596 = vmatprep.subr.mxu0 0.0
    %1597 = vmatpush1.msra.mxu0 %v1060
    %1598 = vmatprep.subr.mxu0 0.0
    %1599 = vmatpush1.msra.mxu0 %v1059
    %1600 = vmatprep.subr.mxu0 0.0
    %1601 = vmatpush1.msra.mxu0 %v1058
    %1602 = vmatprep.subr.mxu0 0.0
    %1603 = vmatpush1.msra.mxu0 %v1057
    %1604 = vmatprep.subr.mxu0 0.0
    %1605 = vmatpush2.msra.mxu0 0.0
    %1606 = vmatprep.subr.mxu0 0.0
    %1607 = vmatpush2.msra.mxu0 0.0
    %1608 = vmatprep.subr.mxu0 0.0
    %1609 = vmatpush2.msra.mxu0 0.0
    %1610 = vmatprep.subr.mxu0 0.0
    %1611 = vmatpush2.msra.mxu0 0.0
    %1612 = vmatprep.subr.mxu0 0.0
    %1613 = vmatpush2.msra.mxu0 0.0
    %1614 = vmatprep.subr.mxu0 0.0
    %1615 = vmatpush2.msra.mxu0 0.0
    %1616 = vmatprep.subr.mxu0 0.0
    %1617 = vmatpush2.msra.mxu0 0.0
    %1618 = vmatprep.subr.mxu0 0.0
    %1619 = vmatpush2.msra.mxu0 0.0
    %1620 = vmatprep.subr.mxu0 0.0
    %1621 = vmatpush2.msra.mxu0 0.0
    %1622 = vmatprep.subr.mxu0 0.0
    %1623 = vmatpush2.msra.mxu0 0.0
    %1624 = vmatprep.subr.mxu0 0.0
    %1625 = vmatpush2.msra.mxu0 0.0
    %1626 = vmatprep.subr.mxu0 0.0
    %1627 = vmatpush2.msra.mxu0 0.0
    %1628 = vmatprep.subr.mxu0 0.0
    %1629 = vmatpush2.msra.mxu0 0.0
    %1630 = vmatprep.subr.mxu0 0.0
    %1631 = vmatpush2.msra.mxu0 0.0
    %1632 = vmatprep.subr.mxu0 0.0
    %1633 = vmatpush2.msra.mxu0 0.0
    %1634 = vmatprep.subr.mxu0 0.0
    %1635 = vmatpush2.msra.mxu0 0.0
    %1636 = vmatprep.mubr.f32.mxu0 0.0
    %1637 = vmatmul.mubr.f32.gmra.mxu0 %v1498
    %v1638 = vpop.f32.mrf.mxu0
    %v1639 = vadd.f32 %v1066, %v1638
    %v1640 = vpop.f32.mrf.mxu0
    %1641 = vdwg.mxu0
    %v1642 = vld [vmem:[#allocation2] sm:$0x3]
    %v1643 = vld [vmem:[#allocation2 + $0x2] sm:$0x3]
    %v1644 = vld [vmem:[#allocation2 + $0x4] sm:$0x3]
    %v1645 = vld [vmem:[#allocation2 + $0x6] sm:$0x3]
    %v1646 = vld [vmem:[#allocation2 + $0x8] sm:$0x3]
    %v1647 = vld [vmem:[#allocation2 + $0xa] sm:$0x3]
    %v1648 = vld [vmem:[#allocation2 + $0xc] sm:$0x3]
    %v1649 = vld [vmem:[#allocation2 + $0xe] sm:$0x3]
    %v1650 = vadd.f32 %v1642, %v1639
    %v1651 = vadd.f32 %v1643, %v1639
    %v1652 = vadd.f32 %v1644, %v1639
    %v1653 = vadd.f32 %v1645, %v1639
    %v1654 = vadd.f32 %v1646, %v1639
    %v1655 = vadd.f32 %v1647, %v1639
    %v1656 = vadd.f32 %v1648, %v1639
    %v1657 = vadd.f32 %v1649, %v1639
    %v1658 = vtanh.pop %v1650
    %v1659 = vtanh.pop %v1651
    %v1660 = vtanh.pop %v1652
    %v1661 = vtanh.pop %v1653
    %v1662 = vtanh.pop %v1654
    %v1663 = vtanh.pop %v1655
    %v1664 = vtanh.pop %v1656
    %v1665 = vtanh.pop %v1657
    %v1666 = vmul.f32 %v1658, %v1196
    %v1667 = vmul.f32 %v1659, %v1196
    %v1668 = vmul.f32 %v1660, %v1196
    %v1669 = vmul.f32 %v1661, %v1196
    %v1670 = vmul.f32 %v1662, %v1196
    %v1671 = vmul.f32 %v1663, %v1196
    %v1672 = vmul.f32 %v1664, %v1196
    %v1673 = vmul.f32 %v1665, %v1196
    %v1674 = vsel %vm124, %v1666, 0.0
    %1675 = vadd.xlane.f32.xlu0 %v1674
    %v1676 = vpop.xlane.xlu0 %1675
    %v1677 = vsel %vm124, %v1667, 0.0
    %1678 = vadd.xlane.f32.xlu0 %v1677
    %v1679 = vpop.xlane.xlu0 %1678
    %v1680 = vsel %vm124, %v1668, 0.0
    %1681 = vadd.xlane.f32.xlu0 %v1680
    %v1682 = vpop.xlane.xlu0 %1681
    %v1683 = vsel %vm124, %v1669, 0.0
    %1684 = vadd.xlane.f32.xlu0 %v1683
    %v1685 = vpop.xlane.xlu0 %1684
    %v1686 = vsel %vm124, %v1670, 0.0
    %1687 = vadd.xlane.f32.xlu0 %v1686
    %v1688 = vpop.xlane.xlu0 %1687
    %v1689 = vsel %vm124, %v1671, 0.0
    %1690 = vadd.xlane.f32.xlu0 %v1689
    %v1691 = vpop.xlane.xlu0 %1690
    %v1692 = vsel %vm124, %v1672, 0.0
    %1693 = vadd.xlane.f32.xlu0 %v1692
    %v1694 = vpop.xlane.xlu0 %1693
    %v1695 = vsel %vm124, %v1673, 0.0
    %1696 = vadd.xlane.f32.xlu0 %v1695
    %v1697 = vpop.xlane.xlu0 %1696
    %v1698 = vsel %vm1230, %v1676, -inf
    %v1699 = vsel %vm1230, %v1679, -inf
    %v1700 = vsel %vm1230, %v1682, -inf
    %v1701 = vsel %vm1230, %v1685, -inf
    %v1702 = vsel %vm1230, %v1688, -inf
    %v1703 = vmax.f32 %v1698, %v1702
    %v1704 = vsel %vm1230, %v1691, -inf
    %v1705 = vmax.f32 %v1699, %v1704
    %v1706 = vsel %vm1230, %v1694, -inf
    %v1707 = vmax.f32 %v1700, %v1706
    %v1708 = vsel %vm1230, %v1697, -inf
    %v1709 = vmax.f32 %v1701, %v1708
    %v1710 = vmax.f32 %v1703, %v1705
    %v1711 = vmax.f32 %v1707, %v1709
    %v1712 = vmax.f32 %v1710, %v1711
    %v1713 = vsub.f32 %v1676, %v1712
    %v1714 = vsub.f32 %v1679, %v1712
    %v1715 = vsub.f32 %v1682, %v1712
    %v1716 = vsub.f32 %v1685, %v1712
    %v1717 = vsub.f32 %v1688, %v1712
    %v1718 = vsub.f32 %v1691, %v1712
    %v1719 = vsub.f32 %v1694, %v1712
    %v1720 = vsub.f32 %v1697, %v1712
    %v1721 = vmul.f32 %v1713, 1.442695
    %v1722 = vpow.pop %v1721
    %v1723 = vmul.f32 %v1714, 1.442695
    %v1724 = vpow.pop %v1723
    %v1725 = vmul.f32 %v1715, 1.442695
    %v1726 = vpow.pop %v1725
    %v1727 = vmul.f32 %v1716, 1.442695
    %v1728 = vpow.pop %v1727
    %v1729 = vmul.f32 %v1717, 1.442695
    %v1730 = vpow.pop %v1729
    %v1731 = vmul.f32 %v1718, 1.442695
    %v1732 = vpow.pop %v1731
    %v1733 = vmul.f32 %v1719, 1.442695
    %v1734 = vpow.pop %v1733
    %v1735 = vmul.f32 %v1720, 1.442695
    %v1736 = vpow.pop %v1735
    %v1737 = vsel %vm1230, %v1722, 0.0
    %v1738 = vsel %vm1230, %v1724, 0.0
    %v1739 = vadd.f32 %v1737, %v1738
    %v1740 = vsel %vm1230, %v1726, 0.0
    %v1741 = vadd.f32 %v1739, %v1740
    %v1742 = vsel %vm1230, %v1728, 0.0
    %v1743 = vadd.f32 %v1741, %v1742
    %v1744 = vsel %vm1230, %v1730, 0.0
    %v1745 = vadd.f32 %v1743, %v1744
    %v1746 = vsel %vm1230, %v1732, 0.0
    %v1747 = vadd.f32 %v1745, %v1746
    %v1748 = vsel %vm1230, %v1734, 0.0
    %v1749 = vadd.f32 %v1747, %v1748
    %v1750 = vsel %vm1230, %v1736, 0.0
    %v1751 = vadd.f32 %v1749, %v1750
    %v1752 = vrcp.pop %v1751
    %v1753 = vmul.f32 %v1722, %v1752
    %v1754 = vmul.f32 %v1724, %v1752
    %v1755 = vmul.f32 %v1726, %v1752
    %v1756 = vmul.f32 %v1728, %v1752
    %v1757 = vmul.f32 %v1730, %v1752
    %v1758 = vmul.f32 %v1732, %v1752
    %v1759 = vmul.f32 %v1734, %v1752
    %v1760 = vmul.f32 %v1736, %v1752
    %v1761 = vld [vmem:[%s0] sm:$0x3]
    %v1762 = vld [vmem:[%s0 + $0x2] sm:$0x3]
    %v1763 = vld [vmem:[%s0 + $0x4] sm:$0x3]
    %v1764 = vld [vmem:[%s0 + $0x6] sm:$0x3]
    %v1765 = vld [vmem:[%s0 + $0x8] sm:$0x3]
    %v1766 = vld [vmem:[%s0 + $0xa] sm:$0x3]
    %v1767 = vld [vmem:[%s0 + $0xc] sm:$0x3]
    %v1768 = vld [vmem:[%s0 + $0xe] sm:$0x3]
    %v1769 = vmul.f32 %v1761, %v1753
    %v1770 = vmul.f32 %v1762, %v1754
    %v1771 = vmul.f32 %v1763, %v1755
    %v1772 = vmul.f32 %v1764, %v1756
    %v1773 = vmul.f32 %v1765, %v1757
    %v1774 = vmul.f32 %v1766, %v1758
    %v1775 = vmul.f32 %v1767, %v1759
    %v1776 = vmul.f32 %v1768, %v1760
    %v1777 = vsel %vm124, %v1769, 0.0
    %v1778 = vsel %vm124, %v1770, 0.0
    %v1779 = vadd.f32 %v1777, %v1778
    %v1780 = vsel %vm124, %v1771, 0.0
    %v1781 = vadd.f32 %v1779, %v1780
    %v1782 = vsel %vm124, %v1772, 0.0
    %v1783 = vadd.f32 %v1781, %v1782
    %v1784 = vsel %vm124, %v1773, 0.0
    %v1785 = vadd.f32 %v1783, %v1784
    %v1786 = vsel %vm124, %v1774, 0.0
    %v1787 = vadd.f32 %v1785, %v1786
    %v1788 = vsel %vm124, %v1775, 0.0
    %v1789 = vadd.f32 %v1787, %v1788
    %v1790 = vsel %vm124, %v1776, 0.0
    %v1791 = vadd.f32 %v1789, %v1790
    %v1792 = vld [vmem:[%s833] sm:$0x3]
    %v1794 = vsel %vm50, %v1791, 0
    %1796 = vmatprep.subr.mxu0 0.0
    %1797 = vmatpush1.msra.mxu0 0.0
    %1798 = vmatprep.subr.mxu0 0.0
    %1799 = vmatpush1.msra.mxu0 0.0
    %1800 = vmatprep.subr.mxu0 0.0
    %1801 = vmatpush1.msra.mxu0 0.0
    %1802 = vmatprep.subr.mxu0 0.0
    %1803 = vmatpush1.msra.mxu0 0.0
    %1804 = vmatprep.subr.mxu0 0.0
    %1805 = vmatpush1.msra.mxu0 0.0
    %1806 = vmatprep.subr.mxu0 0.0
    %1807 = vmatpush1.msra.mxu0 0.0
    %1808 = vmatprep.subr.mxu0 0.0
    %1809 = vmatpush1.msra.mxu0 0.0
    %1810 = vmatprep.subr.mxu0 0.0
    %1811 = vmatpush1.msra.mxu0 0.0
    %1812 = vmatprep.subr.mxu0 0.0
    %1813 = vmatpush1.msra.mxu0 0.0
    %1814 = vmatprep.subr.mxu0 0.0
    %1815 = vmatpush1.msra.mxu0 0.0
    %1816 = vmatprep.subr.mxu0 0.0
    %1817 = vmatpush1.msra.mxu0 0.0
    %1818 = vmatprep.subr.mxu0 0.0
    %1819 = vmatpush1.msra.mxu0 0.0
    %1820 = vmatprep.subr.mxu0 0.0
    %1821 = vmatpush1.msra.mxu0 %v1072
    %1822 = vmatprep.subr.mxu0 0.0
    %1823 = vmatpush1.msra.mxu0 %v1071
    %1824 = vmatprep.subr.mxu0 0.0
    %1825 = vmatpush1.msra.mxu0 %v1070
    %1826 = vmatprep.subr.mxu0 0.0
    %1827 = vmatpush1.msra.mxu0 %v1069
    %1828 = vmatprep.subr.mxu0 0.0
    %1829 = vmatpush2.msra.mxu0 0.0
    %1830 = vmatprep.subr.mxu0 0.0
    %1831 = vmatpush2.msra.mxu0 0.0
    %1832 = vmatprep.subr.mxu0 0.0
    %1833 = vmatpush2.msra.mxu0 0.0
    %1834 = vmatprep.subr.mxu0 0.0
    %1835 = vmatpush2.msra.mxu0 0.0
    %1836 = vmatprep.subr.mxu0 0.0
    %1837 = vmatpush2.msra.mxu0 0.0
    %1838 = vmatprep.subr.mxu0 0.0
    %1839 = vmatpush2.msra.mxu0 0.0
    %1840 = vmatprep.subr.mxu0 0.0
    %1841 = vmatpush2.msra.mxu0 0.0
    %1842 = vmatprep.subr.mxu0 0.0
    %1843 = vmatpush2.msra.mxu0 0.0
    %1844 = vmatprep.subr.mxu0 0.0
    %1845 = vmatpush2.msra.mxu0 0.0
    %1846 = vmatprep.subr.mxu0 0.0
    %1847 = vmatpush2.msra.mxu0 0.0
    %1848 = vmatprep.subr.mxu0 0.0
    %1849 = vmatpush2.msra.mxu0 0.0
    %1850 = vmatprep.subr.mxu0 0.0
    %1851 = vmatpush2.msra.mxu0 0.0
    %1852 = vmatprep.subr.mxu0 0.0
    %1853 = vmatpush2.msra.mxu0 0.0
    %1854 = vmatprep.subr.mxu0 0.0
    %1855 = vmatpush2.msra.mxu0 0.0
    %1856 = vmatprep.subr.mxu0 0.0
    %1857 = vmatpush2.msra.mxu0 0.0
    %1858 = vmatprep.subr.mxu0 0.0
    %1859 = vmatpush2.msra.mxu0 0.0
    %1860 = vmatprep.mubr.f32.mxu0 0.0
    %1861 = vmatmul.mubr.f32.gmra.mxu0 %v1794
    %v1862 = vpop.f32.mrf.mxu0
    %v1863 = vadd.f32 %v1792, %v1862
    %v1864 = vpop.f32.mrf.mxu0
    %1865 = vdwg.mxu0
    %1866 = vmatprep.subr.mxu0 0.0
    %1867 = vmatpush1.msra.mxu0 0.0
    %1868 = vmatprep.subr.mxu0 0.0
    %1869 = vmatpush1.msra.mxu0 0.0
    %1870 = vmatprep.subr.mxu0 0.0
    %1871 = vmatpush1.msra.mxu0 0.0
    %1872 = vmatprep.subr.mxu0 0.0
    %1873 = vmatpush1.msra.mxu0 0.0
    %1874 = vmatprep.subr.mxu0 0.0
    %1875 = vmatpush1.msra.mxu0 0.0
    %1876 = vmatprep.subr.mxu0 0.0
    %1877 = vmatpush1.msra.mxu0 0.0
    %1878 = vmatprep.subr.mxu0 0.0
    %1879 = vmatpush1.msra.mxu0 0.0
    %1880 = vmatprep.subr.mxu0 0.0
    %1881 = vmatpush1.msra.mxu0 0.0
    %1882 = vmatprep.subr.mxu0 0.0
    %1883 = vmatpush1.msra.mxu0 0.0
    %1884 = vmatprep.subr.mxu0 0.0
    %1885 = vmatpush1.msra.mxu0 0.0
    %1886 = vmatprep.subr.mxu0 0.0
    %1887 = vmatpush1.msra.mxu0 0.0
    %1888 = vmatprep.subr.mxu0 0.0
    %1889 = vmatpush1.msra.mxu0 0.0
    %1890 = vmatprep.subr.mxu0 0.0
    %1891 = vmatpush1.msra.mxu0 %v1076
    %1892 = vmatprep.subr.mxu0 0.0
    %1893 = vmatpush1.msra.mxu0 %v1075
    %1894 = vmatprep.subr.mxu0 0.0
    %1895 = vmatpush1.msra.mxu0 %v1074
    %1896 = vmatprep.subr.mxu0 0.0
    %1897 = vmatpush1.msra.mxu0 %v1073
    %1898 = vmatprep.subr.mxu0 0.0
    %1899 = vmatpush2.msra.mxu0 0.0
    %1900 = vmatprep.subr.mxu0 0.0
    %1901 = vmatpush2.msra.mxu0 0.0
    %1902 = vmatprep.subr.mxu0 0.0
    %1903 = vmatpush2.msra.mxu0 0.0
    %1904 = vmatprep.subr.mxu0 0.0
    %1905 = vmatpush2.msra.mxu0 0.0
    %1906 = vmatprep.subr.mxu0 0.0
    %1907 = vmatpush2.msra.mxu0 0.0
    %1908 = vmatprep.subr.mxu0 0.0
    %1909 = vmatpush2.msra.mxu0 0.0
    %1910 = vmatprep.subr.mxu0 0.0
    %1911 = vmatpush2.msra.mxu0 0.0
    %1912 = vmatprep.subr.mxu0 0.0
    %1913 = vmatpush2.msra.mxu0 0.0
    %1914 = vmatprep.subr.mxu0 0.0
    %1915 = vmatpush2.msra.mxu0 0.0
    %1916 = vmatprep.subr.mxu0 0.0
    %1917 = vmatpush2.msra.mxu0 0.0
    %1918 = vmatprep.subr.mxu0 0.0
    %1919 = vmatpush2.msra.mxu0 0.0
    %1920 = vmatprep.subr.mxu0 0.0
    %1921 = vmatpush2.msra.mxu0 0.0
    %1922 = vmatprep.subr.mxu0 0.0
    %1923 = vmatpush2.msra.mxu0 0.0
    %1924 = vmatprep.subr.mxu0 0.0
    %1925 = vmatpush2.msra.mxu0 0.0
    %1926 = vmatprep.subr.mxu0 0.0
    %1927 = vmatpush2.msra.mxu0 0.0
    %1928 = vmatprep.subr.mxu0 0.0
    %1929 = vmatpush2.msra.mxu0 0.0
    %1930 = vmatprep.mubr.f32.mxu0 0.0
    %1931 = vmatmul.mubr.f32.gmra.mxu0 %v1498
    %v1932 = vpop.f32.mrf.mxu0
    %v1933 = vadd.f32 %v1082, %v1932
    %v1934 = vpop.f32.mrf.mxu0
    %1935 = vdwg.mxu0
    %v1936 = vadd.f32 %v1863, %v1933
    %v1937 = vxor.u32 %v1936, 2147483648
    %v1938 = vmul.f32 %v1937, 1.442695
    %v1939 = vpow.pop %v1938
    %v1940 = vadd.f32 %v1939, 1.0
    %v1941 = vrcp.pop %v1940
    %v1942 = vmul.f32 1.0, %v1941
    %1944 = vrot.lane.b32.xlu0 %v1933, 64
    %v1945 = vpop.permute.xlu0 %1944
    %v1947 = vmul.f32 %v1942, %v1945
    %1949 = vrot.lane.b32.xlu0 %v1947, 64
    %v1950 = vpop.permute.xlu0 %1949
    %v1952 = vadd.f32 %v1863, %v1950
    %v1953 = vtanh.pop %v1952
    %v1954 = vsub.f32 1.0, %v1942
    %1956 = vrot.lane.b32.xlu0 %v1953, 96
    %v1957 = vpop.permute.xlu0 %1956
    %v1959 = vmul.f32 %v1954, %v1957
    %v1960 = vmul.f32 %v1942, %v1494
    %v1961 = vadd.f32 %v1959, %v1960
    %1963 = vrot.lane.b32.xlu0 %v1961, 96
    %v1964 = vpop.permute.xlu0 %1963
    %v1965 = vsel %vm50, %v1964, 0
    %1967 = vmatprep.subr.mxu0 0.0
    %1968 = vmatpush1.msra.mxu0 0.0
    %1969 = vmatprep.subr.mxu0 0.0
    %1970 = vmatpush1.msra.mxu0 0.0
    %1971 = vmatprep.subr.mxu0 0.0
    %1972 = vmatpush1.msra.mxu0 0.0
    %1973 = vmatprep.subr.mxu0 0.0
    %1974 = vmatpush1.msra.mxu0 0.0
    %1975 = vmatprep.subr.mxu0 0.0
    %1976 = vmatpush1.msra.mxu0 0.0
    %1977 = vmatprep.subr.mxu0 0.0
    %1978 = vmatpush1.msra.mxu0 0.0
    %1979 = vmatprep.subr.mxu0 0.0
    %1980 = vmatpush1.msra.mxu0 0.0
    %1981 = vmatprep.subr.mxu0 0.0
    %1982 = vmatpush1.msra.mxu0 0.0
    %1983 = vmatprep.subr.mxu0 0.0
    %1984 = vmatpush1.msra.mxu0 0.0
    %1985 = vmatprep.subr.mxu0 0.0
    %1986 = vmatpush1.msra.mxu0 0.0
    %1987 = vmatprep.subr.mxu0 0.0
    %1988 = vmatpush1.msra.mxu0 0.0
    %1989 = vmatprep.subr.mxu0 0.0
    %1990 = vmatpush1.msra.mxu0 0.0
    %1991 = vmatprep.subr.mxu0 0.0
    %1992 = vmatpush1.msra.mxu0 %v1087
    %1993 = vmatprep.subr.mxu0 0.0
    %1994 = vmatpush1.msra.mxu0 %v1086
    %1995 = vmatprep.subr.mxu0 0.0
    %1996 = vmatpush1.msra.mxu0 %v1085
    %1997 = vmatprep.subr.mxu0 0.0
    %1998 = vmatpush1.msra.mxu0 %v1084
    %1999 = vmatprep.subr.mxu0 0.0
    %2000 = vmatpush2.msra.mxu0 0.0
    %2001 = vmatprep.subr.mxu0 0.0
    %2002 = vmatpush2.msra.mxu0 0.0
    %2003 = vmatprep.subr.mxu0 0.0
    %2004 = vmatpush2.msra.mxu0 0.0
    %2005 = vmatprep.subr.mxu0 0.0
    %2006 = vmatpush2.msra.mxu0 0.0
    %2007 = vmatprep.subr.mxu0 0.0
    %2008 = vmatpush2.msra.mxu0 0.0
    %2009 = vmatprep.subr.mxu0 0.0
    %2010 = vmatpush2.msra.mxu0 0.0
    %2011 = vmatprep.subr.mxu0 0.0
    %2012 = vmatpush2.msra.mxu0 0.0
    %2013 = vmatprep.subr.mxu0 0.0
    %2014 = vmatpush2.msra.mxu0 0.0
    %2015 = vmatprep.subr.mxu0 0.0
    %2016 = vmatpush2.msra.mxu0 0.0
    %2017 = vmatprep.subr.mxu0 0.0
    %2018 = vmatpush2.msra.mxu0 0.0
    %2019 = vmatprep.subr.mxu0 0.0
    %2020 = vmatpush2.msra.mxu0 0.0
    %2021 = vmatprep.subr.mxu0 0.0
    %2022 = vmatpush2.msra.mxu0 0.0
    %2023 = vmatprep.subr.mxu0 0.0
    %2024 = vmatpush2.msra.mxu0 0.0
    %2025 = vmatprep.subr.mxu0 0.0
    %2026 = vmatpush2.msra.mxu0 0.0
    %2027 = vmatprep.subr.mxu0 0.0
    %2028 = vmatpush2.msra.mxu0 0.0
    %2029 = vmatprep.subr.mxu0 0.0
    %2030 = vmatpush2.msra.mxu0 0.0
    %2031 = vmatprep.mubr.f32.mxu0 0.0
    %2032 = vmatmul.mubr.f32.gmra.mxu0 %v1965
    %v2033 = vpop.f32.mrf.mxu0
    %v2034 = vadd.f32 %v1093, %v2033
    %v2035 = vpop.f32.mrf.mxu0
    %2036 = vdwg.mxu0
    %s2037 = scalar_lea.vmem [#allocation4], 2
    %2038 = vst.msk [vmem:[%s2037] sm:$0x3] %vm1570, %v2034
    %2039 = vmatprep.subr.mxu0 0.0
    %2040 = vmatpush1.msra.mxu0 0.0
    %2041 = vmatprep.subr.mxu0 0.0
    %2042 = vmatpush1.msra.mxu0 0.0
    %2043 = vmatprep.subr.mxu0 0.0
    %2044 = vmatpush1.msra.mxu0 0.0
    %2045 = vmatprep.subr.mxu0 0.0
    %2046 = vmatpush1.msra.mxu0 0.0
    %2047 = vmatprep.subr.mxu0 0.0
    %2048 = vmatpush1.msra.mxu0 0.0
    %2049 = vmatprep.subr.mxu0 0.0
    %2050 = vmatpush1.msra.mxu0 0.0
    %2051 = vmatprep.subr.mxu0 0.0
    %2052 = vmatpush1.msra.mxu0 0.0
    %2053 = vmatprep.subr.mxu0 0.0
    %2054 = vmatpush1.msra.mxu0 0.0
    %2055 = vmatprep.subr.mxu0 0.0
    %2056 = vmatpush1.msra.mxu0 0.0
    %2057 = vmatprep.subr.mxu0 0.0
    %2058 = vmatpush1.msra.mxu0 0.0
    %2059 = vmatprep.subr.mxu0 0.0
    %2060 = vmatpush1.msra.mxu0 0.0
    %2061 = vmatprep.subr.mxu0 0.0
    %2062 = vmatpush1.msra.mxu0 0.0
    %2063 = vmatprep.subr.mxu0 0.0
    %2064 = vmatpush1.msra.mxu0 %v1060
    %2065 = vmatprep.subr.mxu0 0.0
    %2066 = vmatpush1.msra.mxu0 %v1059
    %2067 = vmatprep.subr.mxu0 0.0
    %2068 = vmatpush1.msra.mxu0 %v1058
    %2069 = vmatprep.subr.mxu0 0.0
    %2070 = vmatpush1.msra.mxu0 %v1057
    %2071 = vmatprep.subr.mxu0 0.0
    %2072 = vmatpush2.msra.mxu0 0.0
    %2073 = vmatprep.subr.mxu0 0.0
    %2074 = vmatpush2.msra.mxu0 0.0
    %2075 = vmatprep.subr.mxu0 0.0
    %2076 = vmatpush2.msra.mxu0 0.0
    %2077 = vmatprep.subr.mxu0 0.0
    %2078 = vmatpush2.msra.mxu0 0.0
    %2079 = vmatprep.subr.mxu0 0.0
    %2080 = vmatpush2.msra.mxu0 0.0
    %2081 = vmatprep.subr.mxu0 0.0
    %2082 = vmatpush2.msra.mxu0 0.0
    %2083 = vmatprep.subr.mxu0 0.0
    %2084 = vmatpush2.msra.mxu0 0.0
    %2085 = vmatprep.subr.mxu0 0.0
    %2086 = vmatpush2.msra.mxu0 0.0
    %2087 = vmatprep.subr.mxu0 0.0
    %2088 = vmatpush2.msra.mxu0 0.0
    %2089 = vmatprep.subr.mxu0 0.0
    %2090 = vmatpush2.msra.mxu0 0.0
    %2091 = vmatprep.subr.mxu0 0.0
    %2092 = vmatpush2.msra.mxu0 0.0
    %2093 = vmatprep.subr.mxu0 0.0
    %2094 = vmatpush2.msra.mxu0 0.0
    %2095 = vmatprep.subr.mxu0 0.0
    %2096 = vmatpush2.msra.mxu0 0.0
    %2097 = vmatprep.subr.mxu0 0.0
    %2098 = vmatpush2.msra.mxu0 0.0
    %2099 = vmatprep.subr.mxu0 0.0
    %2100 = vmatpush2.msra.mxu0 0.0
    %2101 = vmatprep.subr.mxu0 0.0
    %2102 = vmatpush2.msra.mxu0 0.0
    %2103 = vmatprep.mubr.f32.mxu0 0.0
    %2104 = vmatmul.mubr.f32.gmra.mxu0 %v1965
    %v2105 = vpop.f32.mrf.mxu0
    %v2106 = vadd.f32 %v1066, %v2105
    %v2107 = vpop.f32.mrf.mxu0
    %2108 = vdwg.mxu0
    %v2109 = vld [vmem:[#allocation2] sm:$0x3]
    %v2110 = vld [vmem:[#allocation2 + $0x2] sm:$0x3]
    %v2111 = vld [vmem:[#allocation2 + $0x4] sm:$0x3]
    %v2112 = vld [vmem:[#allocation2 + $0x6] sm:$0x3]
    %v2113 = vld [vmem:[#allocation2 + $0x8] sm:$0x3]
    %v2114 = vld [vmem:[#allocation2 + $0xa] sm:$0x3]
    %v2115 = vld [vmem:[#allocation2 + $0xc] sm:$0x3]
    %v2116 = vld [vmem:[#allocation2 + $0xe] sm:$0x3]
    %v2117 = vadd.f32 %v2109, %v2106
    %v2118 = vadd.f32 %v2110, %v2106
    %v2119 = vadd.f32 %v2111, %v2106
    %v2120 = vadd.f32 %v2112, %v2106
    %v2121 = vadd.f32 %v2113, %v2106
    %v2122 = vadd.f32 %v2114, %v2106
    %v2123 = vadd.f32 %v2115, %v2106
    %v2124 = vadd.f32 %v2116, %v2106
    %v2125 = vtanh.pop %v2117
    %v2126 = vtanh.pop %v2118
    %v2127 = vtanh.pop %v2119
    %v2128 = vtanh.pop %v2120
    %v2129 = vtanh.pop %v2121
    %v2130 = vtanh.pop %v2122
    %v2131 = vtanh.pop %v2123
    %v2132 = vtanh.pop %v2124
    %v2133 = vmul.f32 %v2125, %v1196
    %v2134 = vmul.f32 %v2126, %v1196
    %v2135 = vmul.f32 %v2127, %v1196
    %v2136 = vmul.f32 %v2128, %v1196
    %v2137 = vmul.f32 %v2129, %v1196
    %v2138 = vmul.f32 %v2130, %v1196
    %v2139 = vmul.f32 %v2131, %v1196
    %v2140 = vmul.f32 %v2132, %v1196
    %v2141 = vsel %vm124, %v2133, 0.0
    %2142 = vadd.xlane.f32.xlu0 %v2141
    %v2143 = vpop.xlane.xlu0 %2142
    %v2144 = vsel %vm124, %v2134, 0.0
    %2145 = vadd.xlane.f32.xlu0 %v2144
    %v2146 = vpop.xlane.xlu0 %2145
    %v2147 = vsel %vm124, %v2135, 0.0
    %2148 = vadd.xlane.f32.xlu0 %v2147
    %v2149 = vpop.xlane.xlu0 %2148
    %v2150 = vsel %vm124, %v2136, 0.0
    %2151 = vadd.xlane.f32.xlu0 %v2150
    %v2152 = vpop.xlane.xlu0 %2151
    %v2153 = vsel %vm124, %v2137, 0.0
    %2154 = vadd.xlane.f32.xlu0 %v2153
    %v2155 = vpop.xlane.xlu0 %2154
    %v2156 = vsel %vm124, %v2138, 0.0
    %2157 = vadd.xlane.f32.xlu0 %v2156
    %v2158 = vpop.xlane.xlu0 %2157
    %v2159 = vsel %vm124, %v2139, 0.0
    %2160 = vadd.xlane.f32.xlu0 %v2159
    %v2161 = vpop.xlane.xlu0 %2160
    %v2162 = vsel %vm124, %v2140, 0.0
    %2163 = vadd.xlane.f32.xlu0 %v2162
    %v2164 = vpop.xlane.xlu0 %2163
    %v2165 = vsel %vm1230, %v2143, -inf
    %v2166 = vsel %vm1230, %v2146, -inf
    %v2167 = vsel %vm1230, %v2149, -inf
    %v2168 = vsel %vm1230, %v2152, -inf
    %v2169 = vsel %vm1230, %v2155, -inf
    %v2170 = vmax.f32 %v2165, %v2169
    %v2171 = vsel %vm1230, %v2158, -inf
    %v2172 = vmax.f32 %v2166, %v2171
    %v2173 = vsel %vm1230, %v2161, -inf
    %v2174 = vmax.f32 %v2167, %v2173
    %v2175 = vsel %vm1230, %v2164, -inf
    %v2176 = vmax.f32 %v2168, %v2175
    %v2177 = vmax.f32 %v2170, %v2172
    %v2178 = vmax.f32 %v2174, %v2176
    %v2179 = vmax.f32 %v2177, %v2178
    %v2180 = vsub.f32 %v2143, %v2179
    %v2181 = vsub.f32 %v2146, %v2179
    %v2182 = vsub.f32 %v2149, %v2179
    %v2183 = vsub.f32 %v2152, %v2179
    %v2184 = vsub.f32 %v2155, %v2179
    %v2185 = vsub.f32 %v2158, %v2179
    %v2186 = vsub.f32 %v2161, %v2179
    %v2187 = vsub.f32 %v2164, %v2179
    %v2188 = vmul.f32 %v2180, 1.442695
    %v2189 = vpow.pop %v2188
    %v2190 = vmul.f32 %v2181, 1.442695
    %v2191 = vpow.pop %v2190
    %v2192 = vmul.f32 %v2182, 1.442695
    %v2193 = vpow.pop %v2192
    %v2194 = vmul.f32 %v2183, 1.442695
    %v2195 = vpow.pop %v2194
    %v2196 = vmul.f32 %v2184, 1.442695
    %v2197 = vpow.pop %v2196
    %v2198 = vmul.f32 %v2185, 1.442695
    %v2199 = vpow.pop %v2198
    %v2200 = vmul.f32 %v2186, 1.442695
    %v2201 = vpow.pop %v2200
    %v2202 = vmul.f32 %v2187, 1.442695
    %v2203 = vpow.pop %v2202
    %v2204 = vsel %vm1230, %v2189, 0.0
    %v2205 = vsel %vm1230, %v2191, 0.0
    %v2206 = vadd.f32 %v2204, %v2205
    %v2207 = vsel %vm1230, %v2193, 0.0
    %v2208 = vadd.f32 %v2206, %v2207
    %v2209 = vsel %vm1230, %v2195, 0.0
    %v2210 = vadd.f32 %v2208, %v2209
    %v2211 = vsel %vm1230, %v2197, 0.0
    %v2212 = vadd.f32 %v2210, %v2211
    %v2213 = vsel %vm1230, %v2199, 0.0
    %v2214 = vadd.f32 %v2212, %v2213
    %v2215 = vsel %vm1230, %v2201, 0.0
    %v2216 = vadd.f32 %v2214, %v2215
    %v2217 = vsel %vm1230, %v2203, 0.0
    %v2218 = vadd.f32 %v2216, %v2217
    %v2219 = vrcp.pop %v2218
    %v2220 = vmul.f32 %v2189, %v2219
    %v2221 = vmul.f32 %v2191, %v2219
    %v2222 = vmul.f32 %v2193, %v2219
    %v2223 = vmul.f32 %v2195, %v2219
    %v2224 = vmul.f32 %v2197, %v2219
    %v2225 = vmul.f32 %v2199, %v2219
    %v2226 = vmul.f32 %v2201, %v2219
    %v2227 = vmul.f32 %v2203, %v2219
    %v2228 = vld [vmem:[%s0] sm:$0x3]
    %v2229 = vld [vmem:[%s0 + $0x2] sm:$0x3]
    %v2230 = vld [vmem:[%s0 + $0x4] sm:$0x3]
    %v2231 = vld [vmem:[%s0 + $0x6] sm:$0x3]
    %v2232 = vld [vmem:[%s0 + $0x8] sm:$0x3]
    %v2233 = vld [vmem:[%s0 + $0xa] sm:$0x3]
    %v2234 = vld [vmem:[%s0 + $0xc] sm:$0x3]
    %v2235 = vld [vmem:[%s0 + $0xe] sm:$0x3]
    %v2236 = vmul.f32 %v2228, %v2220
    %v2237 = vmul.f32 %v2229, %v2221
    %v2238 = vmul.f32 %v2230, %v2222
    %v2239 = vmul.f32 %v2231, %v2223
    %v2240 = vmul.f32 %v2232, %v2224
    %v2241 = vmul.f32 %v2233, %v2225
    %v2242 = vmul.f32 %v2234, %v2226
    %v2243 = vmul.f32 %v2235, %v2227
    %v2244 = vsel %vm124, %v2236, 0.0
    %v2245 = vsel %vm124, %v2237, 0.0
    %v2246 = vadd.f32 %v2244, %v2245
    %v2247 = vsel %vm124, %v2238, 0.0
    %v2248 = vadd.f32 %v2246, %v2247
    %v2249 = vsel %vm124, %v2239, 0.0
    %v2250 = vadd.f32 %v2248, %v2249
    %v2251 = vsel %vm124, %v2240, 0.0
    %v2252 = vadd.f32 %v2250, %v2251
    %v2253 = vsel %vm124, %v2241, 0.0
    %v2254 = vadd.f32 %v2252, %v2253
    %v2255 = vsel %vm124, %v2242, 0.0
    %v2256 = vadd.f32 %v2254, %v2255
    %v2257 = vsel %vm124, %v2243, 0.0
    %v2258 = vadd.f32 %v2256, %v2257
    %v2259 = vld [vmem:[%s907] sm:$0x3]
    %v2261 = vsel %vm50, %v2258, 0
    %2263 = vmatprep.subr.mxu0 0.0
    %2264 = vmatpush1.msra.mxu0 0.0
    %2265 = vmatprep.subr.mxu0 0.0
    %2266 = vmatpush1.msra.mxu0 0.0
    %2267 = vmatprep.subr.mxu0 0.0
    %2268 = vmatpush1.msra.mxu0 0.0
    %2269 = vmatprep.subr.mxu0 0.0
    %2270 = vmatpush1.msra.mxu0 0.0
    %2271 = vmatprep.subr.mxu0 0.0
    %2272 = vmatpush1.msra.mxu0 0.0
    %2273 = vmatprep.subr.mxu0 0.0
    %2274 = vmatpush1.msra.mxu0 0.0
    %2275 = vmatprep.subr.mxu0 0.0
    %2276 = vmatpush1.msra.mxu0 0.0
    %2277 = vmatprep.subr.mxu0 0.0
    %2278 = vmatpush1.msra.mxu0 0.0
    %2279 = vmatprep.subr.mxu0 0.0
    %2280 = vmatpush1.msra.mxu0 0.0
    %2281 = vmatprep.subr.mxu0 0.0
    %2282 = vmatpush1.msra.mxu0 0.0
    %2283 = vmatprep.subr.mxu0 0.0
    %2284 = vmatpush1.msra.mxu0 0.0
    %2285 = vmatprep.subr.mxu0 0.0
    %2286 = vmatpush1.msra.mxu0 0.0
    %2287 = vmatprep.subr.mxu0 0.0
    %2288 = vmatpush1.msra.mxu0 %v1072
    %2289 = vmatprep.subr.mxu0 0.0
    %2290 = vmatpush1.msra.mxu0 %v1071
    %2291 = vmatprep.subr.mxu0 0.0
    %2292 = vmatpush1.msra.mxu0 %v1070
    %2293 = vmatprep.subr.mxu0 0.0
    %2294 = vmatpush1.msra.mxu0 %v1069
    %2295 = vmatprep.subr.mxu0 0.0
    %2296 = vmatpush2.msra.mxu0 0.0
    %2297 = vmatprep.subr.mxu0 0.0
    %2298 = vmatpush2.msra.mxu0 0.0
    %2299 = vmatprep.subr.mxu0 0.0
    %2300 = vmatpush2.msra.mxu0 0.0
    %2301 = vmatprep.subr.mxu0 0.0
    %2302 = vmatpush2.msra.mxu0 0.0
    %2303 = vmatprep.subr.mxu0 0.0
    %2304 = vmatpush2.msra.mxu0 0.0
    %2305 = vmatprep.subr.mxu0 0.0
    %2306 = vmatpush2.msra.mxu0 0.0
    %2307 = vmatprep.subr.mxu0 0.0
    %2308 = vmatpush2.msra.mxu0 0.0
    %2309 = vmatprep.subr.mxu0 0.0
    %2310 = vmatpush2.msra.mxu0 0.0
    %2311 = vmatprep.subr.mxu0 0.0
    %2312 = vmatpush2.msra.mxu0 0.0
    %2313 = vmatprep.subr.mxu0 0.0
    %2314 = vmatpush2.msra.mxu0 0.0
    %2315 = vmatprep.subr.mxu0 0.0
    %2316 = vmatpush2.msra.mxu0 0.0
    %2317 = vmatprep.subr.mxu0 0.0
    %2318 = vmatpush2.msra.mxu0 0.0
    %2319 = vmatprep.subr.mxu0 0.0
    %2320 = vmatpush2.msra.mxu0 0.0
    %2321 = vmatprep.subr.mxu0 0.0
    %2322 = vmatpush2.msra.mxu0 0.0
    %2323 = vmatprep.subr.mxu0 0.0
    %2324 = vmatpush2.msra.mxu0 0.0
    %2325 = vmatprep.subr.mxu0 0.0
    %2326 = vmatpush2.msra.mxu0 0.0
    %2327 = vmatprep.mubr.f32.mxu0 0.0
    %2328 = vmatmul.mubr.f32.gmra.mxu0 %v2261
    %v2329 = vpop.f32.mrf.mxu0
    %v2330 = vadd.f32 %v2259, %v2329
    %v2331 = vpop.f32.mrf.mxu0
    %2332 = vdwg.mxu0
    %2333 = vmatprep.subr.mxu0 0.0
    %2334 = vmatpush1.msra.mxu0 0.0
    %2335 = vmatprep.subr.mxu0 0.0
    %2336 = vmatpush1.msra.mxu0 0.0
    %2337 = vmatprep.subr.mxu0 0.0
    %2338 = vmatpush1.msra.mxu0 0.0
    %2339 = vmatprep.subr.mxu0 0.0
    %2340 = vmatpush1.msra.mxu0 0.0
    %2341 = vmatprep.subr.mxu0 0.0
    %2342 = vmatpush1.msra.mxu0 0.0
    %2343 = vmatprep.subr.mxu0 0.0
    %2344 = vmatpush1.msra.mxu0 0.0
    %2345 = vmatprep.subr.mxu0 0.0
    %2346 = vmatpush1.msra.mxu0 0.0
    %2347 = vmatprep.subr.mxu0 0.0
    %2348 = vmatpush1.msra.mxu0 0.0
    %2349 = vmatprep.subr.mxu0 0.0
    %2350 = vmatpush1.msra.mxu0 0.0
    %2351 = vmatprep.subr.mxu0 0.0
    %2352 = vmatpush1.msra.mxu0 0.0
    %2353 = vmatprep.subr.mxu0 0.0
    %2354 = vmatpush1.msra.mxu0 0.0
    %2355 = vmatprep.subr.mxu0 0.0
    %2356 = vmatpush1.msra.mxu0 0.0
    %2357 = vmatprep.subr.mxu0 0.0
    %2358 = vmatpush1.msra.mxu0 %v1076
    %2359 = vmatprep.subr.mxu0 0.0
    %2360 = vmatpush1.msra.mxu0 %v1075
    %2361 = vmatprep.subr.mxu0 0.0
    %2362 = vmatpush1.msra.mxu0 %v1074
    %2363 = vmatprep.subr.mxu0 0.0
    %2364 = vmatpush1.msra.mxu0 %v1073
    %2365 = vmatprep.subr.mxu0 0.0
    %2366 = vmatpush2.msra.mxu0 0.0
    %2367 = vmatprep.subr.mxu0 0.0
    %2368 = vmatpush2.msra.mxu0 0.0
    %2369 = vmatprep.subr.mxu0 0.0
    %2370 = vmatpush2.msra.mxu0 0.0
    %2371 = vmatprep.subr.mxu0 0.0
    %2372 = vmatpush2.msra.mxu0 0.0
    %2373 = vmatprep.subr.mxu0 0.0
    %2374 = vmatpush2.msra.mxu0 0.0
    %2375 = vmatprep.subr.mxu0 0.0
    %2376 = vmatpush2.msra.mxu0 0.0
    %2377 = vmatprep.subr.mxu0 0.0
    %2378 = vmatpush2.msra.mxu0 0.0
    %2379 = vmatprep.subr.mxu0 0.0
    %2380 = vmatpush2.msra.mxu0 0.0
    %2381 = vmatprep.subr.mxu0 0.0
    %2382 = vmatpush2.msra.mxu0 0.0
    %2383 = vmatprep.subr.mxu0 0.0
    %2384 = vmatpush2.msra.mxu0 0.0
    %2385 = vmatprep.subr.mxu0 0.0
    %2386 = vmatpush2.msra.mxu0 0.0
    %2387 = vmatprep.subr.mxu0 0.0
    %2388 = vmatpush2.msra.mxu0 0.0
    %2389 = vmatprep.subr.mxu0 0.0
    %2390 = vmatpush2.msra.mxu0 0.0
    %2391 = vmatprep.subr.mxu0 0.0
    %2392 = vmatpush2.msra.mxu0 0.0
    %2393 = vmatprep.subr.mxu0 0.0
    %2394 = vmatpush2.msra.mxu0 0.0
    %2395 = vmatprep.subr.mxu0 0.0
    %2396 = vmatpush2.msra.mxu0 0.0
    %2397 = vmatprep.mubr.f32.mxu0 0.0
    %2398 = vmatmul.mubr.f32.gmra.mxu0 %v1965
    %v2399 = vpop.f32.mrf.mxu0
    %v2400 = vadd.f32 %v1082, %v2399
    %v2401 = vpop.f32.mrf.mxu0
    %2402 = vdwg.mxu0
    %v2403 = vadd.f32 %v2330, %v2400
    %v2404 = vxor.u32 %v2403, 2147483648
    %v2405 = vmul.f32 %v2404, 1.442695
    %v2406 = vpow.pop %v2405
    %v2407 = vadd.f32 %v2406, 1.0
    %v2408 = vrcp.pop %v2407
    %v2409 = vmul.f32 1.0, %v2408
    %2411 = vrot.lane.b32.xlu0 %v2400, 64
    %v2412 = vpop.permute.xlu0 %2411
    %v2414 = vmul.f32 %v2409, %v2412
    %2416 = vrot.lane.b32.xlu0 %v2414, 64
    %v2417 = vpop.permute.xlu0 %2416
    %v2419 = vadd.f32 %v2330, %v2417
    %v2420 = vtanh.pop %v2419
    %v2421 = vsub.f32 1.0, %v2409
    %2423 = vrot.lane.b32.xlu0 %v2420, 96
    %v2424 = vpop.permute.xlu0 %2423
    %v2426 = vmul.f32 %v2421, %v2424
    %v2427 = vmul.f32 %v2409, %v1961
    %v2428 = vadd.f32 %v2426, %v2427
    %2430 = vrot.lane.b32.xlu0 %v2428, 96
    %v2431 = vpop.permute.xlu0 %2430
    %v2432 = vsel %vm50, %v2431, 0
    %2434 = vmatprep.subr.mxu0 0.0
    %2435 = vmatpush1.msra.mxu0 0.0
    %2436 = vmatprep.subr.mxu0 0.0
    %2437 = vmatpush1.msra.mxu0 0.0
    %2438 = vmatprep.subr.mxu0 0.0
    %2439 = vmatpush1.msra.mxu0 0.0
    %2440 = vmatprep.subr.mxu0 0.0
    %2441 = vmatpush1.msra.mxu0 0.0
    %2442 = vmatprep.subr.mxu0 0.0
    %2443 = vmatpush1.msra.mxu0 0.0
    %2444 = vmatprep.subr.mxu0 0.0
    %2445 = vmatpush1.msra.mxu0 0.0
    %2446 = vmatprep.subr.mxu0 0.0
    %2447 = vmatpush1.msra.mxu0 0.0
    %2448 = vmatprep.subr.mxu0 0.0
    %2449 = vmatpush1.msra.mxu0 0.0
    %2450 = vmatprep.subr.mxu0 0.0
    %2451 = vmatpush1.msra.mxu0 0.0
    %2452 = vmatprep.subr.mxu0 0.0
    %2453 = vmatpush1.msra.mxu0 0.0
    %2454 = vmatprep.subr.mxu0 0.0
    %2455 = vmatpush1.msra.mxu0 0.0
    %2456 = vmatprep.subr.mxu0 0.0
    %2457 = vmatpush1.msra.mxu0 0.0
    %2458 = vmatprep.subr.mxu0 0.0
    %2459 = vmatpush1.msra.mxu0 %v1087
    %2460 = vmatprep.subr.mxu0 0.0
    %2461 = vmatpush1.msra.mxu0 %v1086
    %2462 = vmatprep.subr.mxu0 0.0
    %2463 = vmatpush1.msra.mxu0 %v1085
    %2464 = vmatprep.subr.mxu0 0.0
    %2465 = vmatpush1.msra.mxu0 %v1084
    %2466 = vmatprep.subr.mxu0 0.0
    %2467 = vmatpush2.msra.mxu0 0.0
    %2468 = vmatprep.subr.mxu0 0.0
    %2469 = vmatpush2.msra.mxu0 0.0
    %2470 = vmatprep.subr.mxu0 0.0
    %2471 = vmatpush2.msra.mxu0 0.0
    %2472 = vmatprep.subr.mxu0 0.0
    %2473 = vmatpush2.msra.mxu0 0.0
    %2474 = vmatprep.subr.mxu0 0.0
    %2475 = vmatpush2.msra.mxu0 0.0
    %2476 = vmatprep.subr.mxu0 0.0
    %2477 = vmatpush2.msra.mxu0 0.0
    %2478 = vmatprep.subr.mxu0 0.0
    %2479 = vmatpush2.msra.mxu0 0.0
    %2480 = vmatprep.subr.mxu0 0.0
    %2481 = vmatpush2.msra.mxu0 0.0
    %2482 = vmatprep.subr.mxu0 0.0
    %2483 = vmatpush2.msra.mxu0 0.0
    %2484 = vmatprep.subr.mxu0 0.0
    %2485 = vmatpush2.msra.mxu0 0.0
    %2486 = vmatprep.subr.mxu0 0.0
    %2487 = vmatpush2.msra.mxu0 0.0
    %2488 = vmatprep.subr.mxu0 0.0
    %2489 = vmatpush2.msra.mxu0 0.0
    %2490 = vmatprep.subr.mxu0 0.0
    %2491 = vmatpush2.msra.mxu0 0.0
    %2492 = vmatprep.subr.mxu0 0.0
    %2493 = vmatpush2.msra.mxu0 0.0
    %2494 = vmatprep.subr.mxu0 0.0
    %2495 = vmatpush2.msra.mxu0 0.0
    %2496 = vmatprep.subr.mxu0 0.0
    %2497 = vmatpush2.msra.mxu0 0.0
    %2498 = vmatprep.mubr.f32.mxu0 0.0
    %2499 = vmatmul.mubr.f32.gmra.mxu0 %v2432
    %v2500 = vpop.f32.mrf.mxu0
    %v2501 = vadd.f32 %v1093, %v2500
    %v2502 = vpop.f32.mrf.mxu0
    %2503 = vdwg.mxu0
    %s2504 = scalar_lea.vmem [#allocation4], 4
    %2505 = vst.msk [vmem:[%s2504] sm:$0x3] %vm1570, %v2501
    %2506 = vmatprep.subr.mxu0 0.0
    %2507 = vmatpush1.msra.mxu0 0.0
    %2508 = vmatprep.subr.mxu0 0.0
    %2509 = vmatpush1.msra.mxu0 0.0
    %2510 = vmatprep.subr.mxu0 0.0
    %2511 = vmatpush1.msra.mxu0 0.0
    %2512 = vmatprep.subr.mxu0 0.0
    %2513 = vmatpush1.msra.mxu0 0.0
    %2514 = vmatprep.subr.mxu0 0.0
    %2515 = vmatpush1.msra.mxu0 0.0
    %2516 = vmatprep.subr.mxu0 0.0
    %2517 = vmatpush1.msra.mxu0 0.0
    %2518 = vmatprep.subr.mxu0 0.0
    %2519 = vmatpush1.msra.mxu0 0.0
    %2520 = vmatprep.subr.mxu0 0.0
    %2521 = vmatpush1.msra.mxu0 0.0
    %2522 = vmatprep.subr.mxu0 0.0
    %2523 = vmatpush1.msra.mxu0 0.0
    %2524 = vmatprep.subr.mxu0 0.0
    %2525 = vmatpush1.msra.mxu0 0.0
    %2526 = vmatprep.subr.mxu0 0.0
    %2527 = vmatpush1.msra.mxu0 0.0
    %2528 = vmatprep.subr.mxu0 0.0
    %2529 = vmatpush1.msra.mxu0 0.0
    %2530 = vmatprep.subr.mxu0 0.0
    %2531 = vmatpush1.msra.mxu0 %v1060
    %2532 = vmatprep.subr.mxu0 0.0
    %2533 = vmatpush1.msra.mxu0 %v1059
    %2534 = vmatprep.subr.mxu0 0.0
    %2535 = vmatpush1.msra.mxu0 %v1058
    %2536 = vmatprep.subr.mxu0 0.0
    %2537 = vmatpush1.msra.mxu0 %v1057
    %2538 = vmatprep.subr.mxu0 0.0
    %2539 = vmatpush2.msra.mxu0 0.0
    %2540 = vmatprep.subr.mxu0 0.0
    %2541 = vmatpush2.msra.mxu0 0.0
    %2542 = vmatprep.subr.mxu0 0.0
    %2543 = vmatpush2.msra.mxu0 0.0
    %2544 = vmatprep.subr.mxu0 0.0
    %2545 = vmatpush2.msra.mxu0 0.0
    %2546 = vmatprep.subr.mxu0 0.0
    %2547 = vmatpush2.msra.mxu0 0.0
    %2548 = vmatprep.subr.mxu0 0.0
    %2549 = vmatpush2.msra.mxu0 0.0
    %2550 = vmatprep.subr.mxu0 0.0
    %2551 = vmatpush2.msra.mxu0 0.0
    %2552 = vmatprep.subr.mxu0 0.0
    %2553 = vmatpush2.msra.mxu0 0.0
    %2554 = vmatprep.subr.mxu0 0.0
    %2555 = vmatpush2.msra.mxu0 0.0
    %2556 = vmatprep.subr.mxu0 0.0
    %2557 = vmatpush2.msra.mxu0 0.0
    %2558 = vmatprep.subr.mxu0 0.0
    %2559 = vmatpush2.msra.mxu0 0.0
    %2560 = vmatprep.subr.mxu0 0.0
    %2561 = vmatpush2.msra.mxu0 0.0
    %2562 = vmatprep.subr.mxu0 0.0
    %2563 = vmatpush2.msra.mxu0 0.0
    %2564 = vmatprep.subr.mxu0 0.0
    %2565 = vmatpush2.msra.mxu0 0.0
    %2566 = vmatprep.subr.mxu0 0.0
    %2567 = vmatpush2.msra.mxu0 0.0
    %2568 = vmatprep.subr.mxu0 0.0
    %2569 = vmatpush2.msra.mxu0 0.0
    %2570 = vmatprep.mubr.f32.mxu0 0.0
    %2571 = vmatmul.mubr.f32.gmra.mxu0 %v2432
    %v2572 = vpop.f32.mrf.mxu0
    %v2573 = vadd.f32 %v1066, %v2572
    %v2574 = vpop.f32.mrf.mxu0
    %2575 = vdwg.mxu0
    %v2576 = vld [vmem:[#allocation2] sm:$0x3]
    %v2577 = vld [vmem:[#allocation2 + $0x2] sm:$0x3]
    %v2578 = vld [vmem:[#allocation2 + $0x4] sm:$0x3]
    %v2579 = vld [vmem:[#allocation2 + $0x6] sm:$0x3]
    %v2580 = vld [vmem:[#allocation2 + $0x8] sm:$0x3]
    %v2581 = vld [vmem:[#allocation2 + $0xa] sm:$0x3]
    %v2582 = vld [vmem:[#allocation2 + $0xc] sm:$0x3]
    %v2583 = vld [vmem:[#allocation2 + $0xe] sm:$0x3]
    %v2584 = vadd.f32 %v2576, %v2573
    %v2585 = vadd.f32 %v2577, %v2573
    %v2586 = vadd.f32 %v2578, %v2573
    %v2587 = vadd.f32 %v2579, %v2573
    %v2588 = vadd.f32 %v2580, %v2573
    %v2589 = vadd.f32 %v2581, %v2573
    %v2590 = vadd.f32 %v2582, %v2573
    %v2591 = vadd.f32 %v2583, %v2573
    %v2592 = vtanh.pop %v2584
    %v2593 = vtanh.pop %v2585
    %v2594 = vtanh.pop %v2586
    %v2595 = vtanh.pop %v2587
    %v2596 = vtanh.pop %v2588
    %v2597 = vtanh.pop %v2589
    %v2598 = vtanh.pop %v2590
    %v2599 = vtanh.pop %v2591
    %v2600 = vmul.f32 %v2592, %v1196
    %v2601 = vmul.f32 %v2593, %v1196
    %v2602 = vmul.f32 %v2594, %v1196
    %v2603 = vmul.f32 %v2595, %v1196
    %v2604 = vmul.f32 %v2596, %v1196
    %v2605 = vmul.f32 %v2597, %v1196
    %v2606 = vmul.f32 %v2598, %v1196
    %v2607 = vmul.f32 %v2599, %v1196
    %v2608 = vsel %vm124, %v2600, 0.0
    %2609 = vadd.xlane.f32.xlu0 %v2608
    %v2610 = vpop.xlane.xlu0 %2609
    %v2611 = vsel %vm124, %v2601, 0.0
    %2612 = vadd.xlane.f32.xlu0 %v2611
    %v2613 = vpop.xlane.xlu0 %2612
    %v2614 = vsel %vm124, %v2602, 0.0
    %2615 = vadd.xlane.f32.xlu0 %v2614
    %v2616 = vpop.xlane.xlu0 %2615
    %v2617 = vsel %vm124, %v2603, 0.0
    %2618 = vadd.xlane.f32.xlu0 %v2617
    %v2619 = vpop.xlane.xlu0 %2618
    %v2620 = vsel %vm124, %v2604, 0.0
    %2621 = vadd.xlane.f32.xlu0 %v2620
    %v2622 = vpop.xlane.xlu0 %2621
    %v2623 = vsel %vm124, %v2605, 0.0
    %2624 = vadd.xlane.f32.xlu0 %v2623
    %v2625 = vpop.xlane.xlu0 %2624
    %v2626 = vsel %vm124, %v2606, 0.0
    %2627 = vadd.xlane.f32.xlu0 %v2626
    %v2628 = vpop.xlane.xlu0 %2627
    %v2629 = vsel %vm124, %v2607, 0.0
    %2630 = vadd.xlane.f32.xlu0 %v2629
    %v2631 = vpop.xlane.xlu0 %2630
    %v2632 = vsel %vm1230, %v2610, -inf
    %v2633 = vsel %vm1230, %v2613, -inf
    %v2634 = vsel %vm1230, %v2616, -inf
    %v2635 = vsel %vm1230, %v2619, -inf
    %v2636 = vsel %vm1230, %v2622, -inf
    %v2637 = vmax.f32 %v2632, %v2636
    %v2638 = vsel %vm1230, %v2625, -inf
    %v2639 = vmax.f32 %v2633, %v2638
    %v2640 = vsel %vm1230, %v2628, -inf
    %v2641 = vmax.f32 %v2634, %v2640
    %v2642 = vsel %vm1230, %v2631, -inf
    %v2643 = vmax.f32 %v2635, %v2642
    %v2644 = vmax.f32 %v2637, %v2639
    %v2645 = vmax.f32 %v2641, %v2643
    %v2646 = vmax.f32 %v2644, %v2645
    %v2647 = vsub.f32 %v2610, %v2646
    %v2648 = vsub.f32 %v2613, %v2646
    %v2649 = vsub.f32 %v2616, %v2646
    %v2650 = vsub.f32 %v2619, %v2646
    %v2651 = vsub.f32 %v2622, %v2646
    %v2652 = vsub.f32 %v2625, %v2646
    %v2653 = vsub.f32 %v2628, %v2646
    %v2654 = vsub.f32 %v2631, %v2646
    %v2655 = vmul.f32 %v2647, 1.442695
    %v2656 = vpow.pop %v2655
    %v2657 = vmul.f32 %v2648, 1.442695
    %v2658 = vpow.pop %v2657
    %v2659 = vmul.f32 %v2649, 1.442695
    %v2660 = vpow.pop %v2659
    %v2661 = vmul.f32 %v2650, 1.442695
    %v2662 = vpow.pop %v2661
    %v2663 = vmul.f32 %v2651, 1.442695
    %v2664 = vpow.pop %v2663
    %v2665 = vmul.f32 %v2652, 1.442695
    %v2666 = vpow.pop %v2665
    %v2667 = vmul.f32 %v2653, 1.442695
    %v2668 = vpow.pop %v2667
    %v2669 = vmul.f32 %v2654, 1.442695
    %v2670 = vpow.pop %v2669
    %v2671 = vsel %vm1230, %v2656, 0.0
    %v2672 = vsel %vm1230, %v2658, 0.0
    %v2673 = vadd.f32 %v2671, %v2672
    %v2674 = vsel %vm1230, %v2660, 0.0
    %v2675 = vadd.f32 %v2673, %v2674
    %v2676 = vsel %vm1230, %v2662, 0.0
    %v2677 = vadd.f32 %v2675, %v2676
    %v2678 = vsel %vm1230, %v2664, 0.0
    %v2679 = vadd.f32 %v2677, %v2678
    %v2680 = vsel %vm1230, %v2666, 0.0
    %v2681 = vadd.f32 %v2679, %v2680
    %v2682 = vsel %vm1230, %v2668, 0.0
    %v2683 = vadd.f32 %v2681, %v2682
    %v2684 = vsel %vm1230, %v2670, 0.0
    %v2685 = vadd.f32 %v2683, %v2684
    %v2686 = vrcp.pop %v2685
    %v2687 = vmul.f32 %v2656, %v2686
    %v2688 = vmul.f32 %v2658, %v2686
    %v2689 = vmul.f32 %v2660, %v2686
    %v2690 = vmul.f32 %v2662, %v2686
    %v2691 = vmul.f32 %v2664, %v2686
    %v2692 = vmul.f32 %v2666, %v2686
    %v2693 = vmul.f32 %v2668, %v2686
    %v2694 = vmul.f32 %v2670, %v2686
    %v2695 = vld [vmem:[%s0] sm:$0x3]
    %v2696 = vld [vmem:[%s0 + $0x2] sm:$0x3]
    %v2697 = vld [vmem:[%s0 + $0x4] sm:$0x3]
    %v2698 = vld [vmem:[%s0 + $0x6] sm:$0x3]
    %v2699 = vld [vmem:[%s0 + $0x8] sm:$0x3]
    %v2700 = vld [vmem:[%s0 + $0xa] sm:$0x3]
    %v2701 = vld [vmem:[%s0 + $0xc] sm:$0x3]
    %v2702 = vld [vmem:[%s0 + $0xe] sm:$0x3]
    %v2703 = vmul.f32 %v2695, %v2687
    %v2704 = vmul.f32 %v2696, %v2688
    %v2705 = vmul.f32 %v2697, %v2689
    %v2706 = vmul.f32 %v2698, %v2690
    %v2707 = vmul.f32 %v2699, %v2691
    %v2708 = vmul.f32 %v2700, %v2692
    %v2709 = vmul.f32 %v2701, %v2693
    %v2710 = vmul.f32 %v2702, %v2694
    %v2711 = vsel %vm124, %v2703, 0.0
    %v2712 = vsel %vm124, %v2704, 0.0
    %v2713 = vadd.f32 %v2711, %v2712
    %v2714 = vsel %vm124, %v2705, 0.0
    %v2715 = vadd.f32 %v2713, %v2714
    %v2716 = vsel %vm124, %v2706, 0.0
    %v2717 = vadd.f32 %v2715, %v2716
    %v2718 = vsel %vm124, %v2707, 0.0
    %v2719 = vadd.f32 %v2717, %v2718
    %v2720 = vsel %vm124, %v2708, 0.0
    %v2721 = vadd.f32 %v2719, %v2720
    %v2722 = vsel %vm124, %v2709, 0.0
    %v2723 = vadd.f32 %v2721, %v2722
    %v2724 = vsel %vm124, %v2710, 0.0
    %v2725 = vadd.f32 %v2723, %v2724
    %v2726 = vld [vmem:[%s981] sm:$0x3]
    %v2728 = vsel %vm50, %v2725, 0
    %2730 = vmatprep.subr.mxu0 0.0
    %2731 = vmatpush1.msra.mxu0 0.0
    %2732 = vmatprep.subr.mxu0 0.0
    %2733 = vmatpush1.msra.mxu0 0.0
    %2734 = vmatprep.subr.mxu0 0.0
    %2735 = vmatpush1.msra.mxu0 0.0
    %2736 = vmatprep.subr.mxu0 0.0
    %2737 = vmatpush1.msra.mxu0 0.0
    %2738 = vmatprep.subr.mxu0 0.0
    %2739 = vmatpush1.msra.mxu0 0.0
    %2740 = vmatprep.subr.mxu0 0.0
    %2741 = vmatpush1.msra.mxu0 0.0
    %2742 = vmatprep.subr.mxu0 0.0
    %2743 = vmatpush1.msra.mxu0 0.0
    %2744 = vmatprep.subr.mxu0 0.0
    %2745 = vmatpush1.msra.mxu0 0.0
    %2746 = vmatprep.subr.mxu0 0.0
    %2747 = vmatpush1.msra.mxu0 0.0
    %2748 = vmatprep.subr.mxu0 0.0
    %2749 = vmatpush1.msra.mxu0 0.0
    %2750 = vmatprep.subr.mxu0 0.0
    %2751 = vmatpush1.msra.mxu0 0.0
    %2752 = vmatprep.subr.mxu0 0.0
    %2753 = vmatpush1.msra.mxu0 0.0
    %2754 = vmatprep.subr.mxu0 0.0
    %2755 = vmatpush1.msra.mxu0 %v1072
    %2756 = vmatprep.subr.mxu0 0.0
    %2757 = vmatpush1.msra.mxu0 %v1071
    %2758 = vmatprep.subr.mxu0 0.0
    %2759 = vmatpush1.msra.mxu0 %v1070
    %2760 = vmatprep.subr.mxu0 0.0
    %2761 = vmatpush1.msra.mxu0 %v1069
    %2762 = vmatprep.subr.mxu0 0.0
    %2763 = vmatpush2.msra.mxu0 0.0
    %2764 = vmatprep.subr.mxu0 0.0
    %2765 = vmatpush2.msra.mxu0 0.0
    %2766 = vmatprep.subr.mxu0 0.0
    %2767 = vmatpush2.msra.mxu0 0.0
    %2768 = vmatprep.subr.mxu0 0.0
    %2769 = vmatpush2.msra.mxu0 0.0
    %2770 = vmatprep.subr.mxu0 0.0
    %2771 = vmatpush2.msra.mxu0 0.0
    %2772 = vmatprep.subr.mxu0 0.0
    %2773 = vmatpush2.msra.mxu0 0.0
    %2774 = vmatprep.subr.mxu0 0.0
    %2775 = vmatpush2.msra.mxu0 0.0
    %2776 = vmatprep.subr.mxu0 0.0
    %2777 = vmatpush2.msra.mxu0 0.0
    %2778 = vmatprep.subr.mxu0 0.0
    %2779 = vmatpush2.msra.mxu0 0.0
    %2780 = vmatprep.subr.mxu0 0.0
    %2781 = vmatpush2.msra.mxu0 0.0
    %2782 = vmatprep.subr.mxu0 0.0
    %2783 = vmatpush2.msra.mxu0 0.0
    %2784 = vmatprep.subr.mxu0 0.0
    %2785 = vmatpush2.msra.mxu0 0.0
    %2786 = vmatprep.subr.mxu0 0.0
    %2787 = vmatpush2.msra.mxu0 0.0
    %2788 = vmatprep.subr.mxu0 0.0
    %2789 = vmatpush2.msra.mxu0 0.0
    %2790 = vmatprep.subr.mxu0 0.0
    %2791 = vmatpush2.msra.mxu0 0.0
    %2792 = vmatprep.subr.mxu0 0.0
    %2793 = vmatpush2.msra.mxu0 0.0
    %2794 = vmatprep.mubr.f32.mxu0 0.0
    %2795 = vmatmul.mubr.f32.gmra.mxu0 %v2728
    %v2796 = vpop.f32.mrf.mxu0
    %v2797 = vadd.f32 %v2726, %v2796
    %v2798 = vpop.f32.mrf.mxu0
    %2799 = vdwg.mxu0
    %2800 = vmatprep.subr.mxu0 0.0
    %2801 = vmatpush1.msra.mxu0 0.0
    %2802 = vmatprep.subr.mxu0 0.0
    %2803 = vmatpush1.msra.mxu0 0.0
    %2804 = vmatprep.subr.mxu0 0.0
    %2805 = vmatpush1.msra.mxu0 0.0
    %2806 = vmatprep.subr.mxu0 0.0
    %2807 = vmatpush1.msra.mxu0 0.0
    %2808 = vmatprep.subr.mxu0 0.0
    %2809 = vmatpush1.msra.mxu0 0.0
    %2810 = vmatprep.subr.mxu0 0.0
    %2811 = vmatpush1.msra.mxu0 0.0
    %2812 = vmatprep.subr.mxu0 0.0
    %2813 = vmatpush1.msra.mxu0 0.0
    %2814 = vmatprep.subr.mxu0 0.0
    %2815 = vmatpush1.msra.mxu0 0.0
    %2816 = vmatprep.subr.mxu0 0.0
    %2817 = vmatpush1.msra.mxu0 0.0
    %2818 = vmatprep.subr.mxu0 0.0
    %2819 = vmatpush1.msra.mxu0 0.0
    %2820 = vmatprep.subr.mxu0 0.0
    %2821 = vmatpush1.msra.mxu0 0.0
    %2822 = vmatprep.subr.mxu0 0.0
    %2823 = vmatpush1.msra.mxu0 0.0
    %2824 = vmatprep.subr.mxu0 0.0
    %2825 = vmatpush1.msra.mxu0 %v1076
    %2826 = vmatprep.subr.mxu0 0.0
    %2827 = vmatpush1.msra.mxu0 %v1075
    %2828 = vmatprep.subr.mxu0 0.0
    %2829 = vmatpush1.msra.mxu0 %v1074
    %2830 = vmatprep.subr.mxu0 0.0
    %2831 = vmatpush1.msra.mxu0 %v1073
    %2832 = vmatprep.subr.mxu0 0.0
    %2833 = vmatpush2.msra.mxu0 0.0
    %2834 = vmatprep.subr.mxu0 0.0
    %2835 = vmatpush2.msra.mxu0 0.0
    %2836 = vmatprep.subr.mxu0 0.0
    %2837 = vmatpush2.msra.mxu0 0.0
    %2838 = vmatprep.subr.mxu0 0.0
    %2839 = vmatpush2.msra.mxu0 0.0
    %2840 = vmatprep.subr.mxu0 0.0
    %2841 = vmatpush2.msra.mxu0 0.0
    %2842 = vmatprep.subr.mxu0 0.0
    %2843 = vmatpush2.msra.mxu0 0.0
    %2844 = vmatprep.subr.mxu0 0.0
    %2845 = vmatpush2.msra.mxu0 0.0
    %2846 = vmatprep.subr.mxu0 0.0
    %2847 = vmatpush2.msra.mxu0 0.0
    %2848 = vmatprep.subr.mxu0 0.0
    %2849 = vmatpush2.msra.mxu0 0.0
    %2850 = vmatprep.subr.mxu0 0.0
    %2851 = vmatpush2.msra.mxu0 0.0
    %2852 = vmatprep.subr.mxu0 0.0
    %2853 = vmatpush2.msra.mxu0 0.0
    %2854 = vmatprep.subr.mxu0 0.0
    %2855 = vmatpush2.msra.mxu0 0.0
    %2856 = vmatprep.subr.mxu0 0.0
    %2857 = vmatpush2.msra.mxu0 0.0
    %2858 = vmatprep.subr.mxu0 0.0
    %2859 = vmatpush2.msra.mxu0 0.0
    %2860 = vmatprep.subr.mxu0 0.0
    %2861 = vmatpush2.msra.mxu0 0.0
    %2862 = vmatprep.subr.mxu0 0.0
    %2863 = vmatpush2.msra.mxu0 0.0
    %2864 = vmatprep.mubr.f32.mxu0 0.0
    %2865 = vmatmul.mubr.f32.gmra.mxu0 %v2432
    %v2866 = vpop.f32.mrf.mxu0
    %v2867 = vadd.f32 %v1082, %v2866
    %v2868 = vpop.f32.mrf.mxu0
    %2869 = vdwg.mxu0
    %v2870 = vadd.f32 %v2797, %v2867
    %v2871 = vxor.u32 %v2870, 2147483648
    %v2872 = vmul.f32 %v2871, 1.442695
    %v2873 = vpow.pop %v2872
    %v2874 = vadd.f32 %v2873, 1.0
    %v2875 = vrcp.pop %v2874
    %v2876 = vmul.f32 1.0, %v2875
    %2878 = vrot.lane.b32.xlu0 %v2867, 64
    %v2879 = vpop.permute.xlu0 %2878
    %v2881 = vmul.f32 %v2876, %v2879
    %2883 = vrot.lane.b32.xlu0 %v2881, 64
    %v2884 = vpop.permute.xlu0 %2883
    %v2886 = vadd.f32 %v2797, %v2884
    %v2887 = vtanh.pop %v2886
    %v2888 = vsub.f32 1.0, %v2876
    %2890 = vrot.lane.b32.xlu0 %v2887, 96
    %v2891 = vpop.permute.xlu0 %2890
    %v2893 = vmul.f32 %v2888, %v2891
    %v2894 = vmul.f32 %v2876, %v2428
    %v2895 = vadd.f32 %v2893, %v2894
    %2897 = vrot.lane.b32.xlu0 %v2895, 96
    %v2898 = vpop.permute.xlu0 %2897
    %v2899 = vsel %vm50, %v2898, 0
    %2901 = vmatprep.subr.mxu0 0.0
    %2902 = vmatpush1.msra.mxu0 0.0
    %2903 = vmatprep.subr.mxu0 0.0
    %2904 = vmatpush1.msra.mxu0 0.0
    %2905 = vmatprep.subr.mxu0 0.0
    %2906 = vmatpush1.msra.mxu0 0.0
    %2907 = vmatprep.subr.mxu0 0.0
    %2908 = vmatpush1.msra.mxu0 0.0
    %2909 = vmatprep.subr.mxu0 0.0
    %2910 = vmatpush1.msra.mxu0 0.0
    %2911 = vmatprep.subr.mxu0 0.0
    %2912 = vmatpush1.msra.mxu0 0.0
    %2913 = vmatprep.subr.mxu0 0.0
    %2914 = vmatpush1.msra.mxu0 0.0
    %2915 = vmatprep.subr.mxu0 0.0
    %2916 = vmatpush1.msra.mxu0 0.0
    %2917 = vmatprep.subr.mxu0 0.0
    %2918 = vmatpush1.msra.mxu0 0.0
    %2919 = vmatprep.subr.mxu0 0.0
    %2920 = vmatpush1.msra.mxu0 0.0
    %2921 = vmatprep.subr.mxu0 0.0
    %2922 = vmatpush1.msra.mxu0 0.0
    %2923 = vmatprep.subr.mxu0 0.0
    %2924 = vmatpush1.msra.mxu0 0.0
    %2925 = vmatprep.subr.mxu0 0.0
    %2926 = vmatpush1.msra.mxu0 %v1087
    %2927 = vmatprep.subr.mxu0 0.0
    %2928 = vmatpush1.msra.mxu0 %v1086
    %2929 = vmatprep.subr.mxu0 0.0
    %2930 = vmatpush1.msra.mxu0 %v1085
    %2931 = vmatprep.subr.mxu0 0.0
    %2932 = vmatpush1.msra.mxu0 %v1084
    %2933 = vmatprep.subr.mxu0 0.0
    %2934 = vmatpush2.msra.mxu0 0.0
    %2935 = vmatprep.subr.mxu0 0.0
    %2936 = vmatpush2.msra.mxu0 0.0
    %2937 = vmatprep.subr.mxu0 0.0
    %2938 = vmatpush2.msra.mxu0 0.0
    %2939 = vmatprep.subr.mxu0 0.0
    %2940 = vmatpush2.msra.mxu0 0.0
    %2941 = vmatprep.subr.mxu0 0.0
    %2942 = vmatpush2.msra.mxu0 0.0
    %2943 = vmatprep.subr.mxu0 0.0
    %2944 = vmatpush2.msra.mxu0 0.0
    %2945 = vmatprep.subr.mxu0 0.0
    %2946 = vmatpush2.msra.mxu0 0.0
    %2947 = vmatprep.subr.mxu0 0.0
    %2948 = vmatpush2.msra.mxu0 0.0
    %2949 = vmatprep.subr.mxu0 0.0
    %2950 = vmatpush2.msra.mxu0 0.0
    %2951 = vmatprep.subr.mxu0 0.0
    %2952 = vmatpush2.msra.mxu0 0.0
    %2953 = vmatprep.subr.mxu0 0.0
    %2954 = vmatpush2.msra.mxu0 0.0
    %2955 = vmatprep.subr.mxu0 0.0
    %2956 = vmatpush2.msra.mxu0 0.0
    %2957 = vmatprep.subr.mxu0 0.0
    %2958 = vmatpush2.msra.mxu0 0.0
    %2959 = vmatprep.subr.mxu0 0.0
    %2960 = vmatpush2.msra.mxu0 0.0
    %2961 = vmatprep.subr.mxu0 0.0
    %2962 = vmatpush2.msra.mxu0 0.0
    %2963 = vmatprep.subr.mxu0 0.0
    %2964 = vmatpush2.msra.mxu0 0.0
    %2965 = vmatprep.mubr.f32.mxu0 0.0
    %2966 = vmatmul.mubr.f32.gmra.mxu0 %v2899
    %v2967 = vpop.f32.mrf.mxu0
    %v2968 = vadd.f32 %v1093, %v2967
    %v2969 = vpop.f32.mrf.mxu0
    %2970 = vdwg.mxu0
    %s2971 = scalar_lea.vmem [#allocation4], 6
    %2972 = vst.msk [vmem:[%s2971] sm:$0x3] %vm1570, %v2968
    %2973 = vmatprep.subr.mxu0 0.0
    %2974 = vmatpush1.msra.mxu0 0.0
    %2975 = vmatprep.subr.mxu0 0.0
    %2976 = vmatpush1.msra.mxu0 0.0
    %2977 = vmatprep.subr.mxu0 0.0
    %2978 = vmatpush1.msra.mxu0 0.0
    %2979 = vmatprep.subr.mxu0 0.0
    %2980 = vmatpush1.msra.mxu0 0.0
    %2981 = vmatprep.subr.mxu0 0.0
    %2982 = vmatpush1.msra.mxu0 0.0
    %2983 = vmatprep.subr.mxu0 0.0
    %2984 = vmatpush1.msra.mxu0 0.0
    %2985 = vmatprep.subr.mxu0 0.0
    %2986 = vmatpush1.msra.mxu0 0.0
    %2987 = vmatprep.subr.mxu0 0.0
    %2988 = vmatpush1.msra.mxu0 0.0
    %2989 = vmatprep.subr.mxu0 0.0
    %2990 = vmatpush1.msra.mxu0 0.0
    %2991 = vmatprep.subr.mxu0 0.0
    %2992 = vmatpush1.msra.mxu0 0.0
    %2993 = vmatprep.subr.mxu0 0.0
    %2994 = vmatpush1.msra.mxu0 0.0
    %2995 = vmatprep.subr.mxu0 0.0
    %2996 = vmatpush1.msra.mxu0 0.0
    %2997 = vmatprep.subr.mxu0 0.0
    %2998 = vmatpush1.msra.mxu0 %v1060
    %2999 = vmatprep.subr.mxu0 0.0
    %3000 = vmatpush1.msra.mxu0 %v1059
    %3001 = vmatprep.subr.mxu0 0.0
    %3002 = vmatpush1.msra.mxu0 %v1058
    %3003 = vmatprep.subr.mxu0 0.0
    %3004 = vmatpush1.msra.mxu0 %v1057
    %3005 = vmatprep.subr.mxu0 0.0
    %3006 = vmatpush2.msra.mxu0 0.0
    %3007 = vmatprep.subr.mxu0 0.0
    %3008 = vmatpush2.msra.mxu0 0.0
    %3009 = vmatprep.subr.mxu0 0.0
    %3010 = vmatpush2.msra.mxu0 0.0
    %3011 = vmatprep.subr.mxu0 0.0
    %3012 = vmatpush2.msra.mxu0 0.0
    %3013 = vmatprep.subr.mxu0 0.0
    %3014 = vmatpush2.msra.mxu0 0.0
    %3015 = vmatprep.subr.mxu0 0.0
    %3016 = vmatpush2.msra.mxu0 0.0
    %3017 = vmatprep.subr.mxu0 0.0
    %3018 = vmatpush2.msra.mxu0 0.0
    %3019 = vmatprep.subr.mxu0 0.0
    %3020 = vmatpush2.msra.mxu0 0.0
    %3021 = vmatprep.subr.mxu0 0.0
    %3022 = vmatpush2.msra.mxu0 0.0
    %3023 = vmatprep.subr.mxu0 0.0
    %3024 = vmatpush2.msra.mxu0 0.0
    %3025 = vmatprep.subr.mxu0 0.0
    %3026 = vmatpush2.msra.mxu0 0.0
    %3027 = vmatprep.subr.mxu0 0.0
    %3028 = vmatpush2.msra.mxu0 0.0
    %3029 = vmatprep.subr.mxu0 0.0
    %3030 = vmatpush2.msra.mxu0 0.0
    %3031 = vmatprep.subr.mxu0 0.0
    %3032 = vmatpush2.msra.mxu0 0.0
    %3033 = vmatprep.subr.mxu0 0.0
    %3034 = vmatpush2.msra.mxu0 0.0
    %3035 = vmatprep.subr.mxu0 0.0
    %3036 = vmatpush2.msra.mxu0 0.0
    %3037 = vmatprep.mubr.f32.mxu0 0.0
    %3038 = vmatmul.mubr.f32.gmra.mxu0 %v2899
    %v3039 = vpop.f32.mrf.mxu0
    %v3040 = vadd.f32 %v1066, %v3039
    %v3041 = vpop.f32.mrf.mxu0
    %3042 = vdwg.mxu0
    %v3043 = vld [vmem:[#allocation2] sm:$0x3]
    %v3044 = vld [vmem:[#allocation2 + $0x2] sm:$0x3]
    %v3045 = vld [vmem:[#allocation2 + $0x4] sm:$0x3]
    %v3046 = vld [vmem:[#allocation2 + $0x6] sm:$0x3]
    %v3047 = vld [vmem:[#allocation2 + $0x8] sm:$0x3]
    %v3048 = vld [vmem:[#allocation2 + $0xa] sm:$0x3]
    %v3049 = vld [vmem:[#allocation2 + $0xc] sm:$0x3]
    %v3050 = vld [vmem:[#allocation2 + $0xe] sm:$0x3]
    %v3051 = vadd.f32 %v3043, %v3040
    %v3052 = vadd.f32 %v3044, %v3040
    %v3053 = vadd.f32 %v3045, %v3040
    %v3054 = vadd.f32 %v3046, %v3040
    %v3055 = vadd.f32 %v3047, %v3040
    %v3056 = vadd.f32 %v3048, %v3040
    %v3057 = vadd.f32 %v3049, %v3040
    %v3058 = vadd.f32 %v3050, %v3040
    %v3059 = vtanh.pop %v3051
    %v3060 = vtanh.pop %v3052
    %v3061 = vtanh.pop %v3053
    %v3062 = vtanh.pop %v3054
    %v3063 = vtanh.pop %v3055
    %v3064 = vtanh.pop %v3056
    %v3065 = vtanh.pop %v3057
    %v3066 = vtanh.pop %v3058
    %v3067 = vmul.f32 %v3059, %v1196
    %v3068 = vmul.f32 %v3060, %v1196
    %v3069 = vmul.f32 %v3061, %v1196
    %v3070 = vmul.f32 %v3062, %v1196
    %v3071 = vmul.f32 %v3063, %v1196
    %v3072 = vmul.f32 %v3064, %v1196
    %v3073 = vmul.f32 %v3065, %v1196
    %v3074 = vmul.f32 %v3066, %v1196
    %v3075 = vsel %vm124, %v3067, 0.0
    %3076 = vadd.xlane.f32.xlu0 %v3075
    %v3077 = vpop.xlane.xlu0 %3076
    %v3078 = vsel %vm124, %v3068, 0.0
    %3079 = vadd.xlane.f32.xlu0 %v3078
    %v3080 = vpop.xlane.xlu0 %3079
    %v3081 = vsel %vm124, %v3069, 0.0
    %3082 = vadd.xlane.f32.xlu0 %v3081
    %v3083 = vpop.xlane.xlu0 %3082
    %v3084 = vsel %vm124, %v3070, 0.0
    %3085 = vadd.xlane.f32.xlu0 %v3084
    %v3086 = vpop.xlane.xlu0 %3085
    %v3087 = vsel %vm124, %v3071, 0.0
    %3088 = vadd.xlane.f32.xlu0 %v3087
    %v3089 = vpop.xlane.xlu0 %3088
    %v3090 = vsel %vm124, %v3072, 0.0
    %3091 = vadd.xlane.f32.xlu0 %v3090
    %v3092 = vpop.xlane.xlu0 %3091
    %v3093 = vsel %vm124, %v3073, 0.0
    %3094 = vadd.xlane.f32.xlu0 %v3093
    %v3095 = vpop.xlane.xlu0 %3094
    %v3096 = vsel %vm124, %v3074, 0.0
    %3097 = vadd.xlane.f32.xlu0 %v3096
    %v3098 = vpop.xlane.xlu0 %3097
    %v3099 = vsel %vm1230, %v3077, -inf
    %v3100 = vsel %vm1230, %v3080, -inf
    %v3101 = vsel %vm1230, %v3083, -inf
    %v3102 = vsel %vm1230, %v3086, -inf
    %v3103 = vsel %vm1230, %v3089, -inf
    %v3104 = vmax.f32 %v3099, %v3103
    %v3105 = vsel %vm1230, %v3092, -inf
    %v3106 = vmax.f32 %v3100, %v3105
    %v3107 = vsel %vm1230, %v3095, -inf
    %v3108 = vmax.f32 %v3101, %v3107
    %v3109 = vsel %vm1230, %v3098, -inf
    %v3110 = vmax.f32 %v3102, %v3109
    %v3111 = vmax.f32 %v3104, %v3106
    %v3112 = vmax.f32 %v3108, %v3110
    %v3113 = vmax.f32 %v3111, %v3112
    %v3114 = vsub.f32 %v3077, %v3113
    %v3115 = vsub.f32 %v3080, %v3113
    %v3116 = vsub.f32 %v3083, %v3113
    %v3117 = vsub.f32 %v3086, %v3113
    %v3118 = vsub.f32 %v3089, %v3113
    %v3119 = vsub.f32 %v3092, %v3113
    %v3120 = vsub.f32 %v3095, %v3113
    %v3121 = vsub.f32 %v3098, %v3113
    %v3122 = vmul.f32 %v3114, 1.442695
    %v3123 = vpow.pop %v3122
    %v3124 = vmul.f32 %v3115, 1.442695
    %v3125 = vpow.pop %v3124
    %v3126 = vmul.f32 %v3116, 1.442695
    %v3127 = vpow.pop %v3126
    %v3128 = vmul.f32 %v3117, 1.442695
    %v3129 = vpow.pop %v3128
    %v3130 = vmul.f32 %v3118, 1.442695
    %v3131 = vpow.pop %v3130
    %v3132 = vmul.f32 %v3119, 1.442695
    %v3133 = vpow.pop %v3132
    %v3134 = vmul.f32 %v3120, 1.442695
    %v3135 = vpow.pop %v3134
    %v3136 = vmul.f32 %v3121, 1.442695
    %v3137 = vpow.pop %v3136
    %v3138 = vsel %vm1230, %v3123, 0.0
    %v3139 = vsel %vm1230, %v3125, 0.0
    %v3140 = vadd.f32 %v3138, %v3139
    %v3141 = vsel %vm1230, %v3127, 0.0
    %v3142 = vadd.f32 %v3140, %v3141
    %v3143 = vsel %vm1230, %v3129, 0.0
    %v3144 = vadd.f32 %v3142, %v3143
    %v3145 = vsel %vm1230, %v3131, 0.0
    %v3146 = vadd.f32 %v3144, %v3145
    %v3147 = vsel %vm1230, %v3133, 0.0
    %v3148 = vadd.f32 %v3146, %v3147
    %v3149 = vsel %vm1230, %v3135, 0.0
    %v3150 = vadd.f32 %v3148, %v3149
    %v3151 = vsel %vm1230, %v3137, 0.0
    %v3152 = vadd.f32 %v3150, %v3151
    %v3153 = vrcp.pop %v3152
    %v3154 = vmul.f32 %v3123, %v3153
    %v3155 = vmul.f32 %v3125, %v3153
    %v3156 = vmul.f32 %v3127, %v3153
    %v3157 = vmul.f32 %v3129, %v3153
    %v3158 = vmul.f32 %v3131, %v3153
    %v3159 = vmul.f32 %v3133, %v3153
    %v3160 = vmul.f32 %v3135, %v3153
    %v3161 = vmul.f32 %v3137, %v3153
    %v3162 = vld [vmem:[%s0] sm:$0x3]
    %v3163 = vld [vmem:[%s0 + $0x2] sm:$0x3]
    %v3164 = vld [vmem:[%s0 + $0x4] sm:$0x3]
    %v3165 = vld [vmem:[%s0 + $0x6] sm:$0x3]
    %v3166 = vld [vmem:[%s0 + $0x8] sm:$0x3]
    %v3167 = vld [vmem:[%s0 + $0xa] sm:$0x3]
    %v3168 = vld [vmem:[%s0 + $0xc] sm:$0x3]
    %v3169 = vld [vmem:[%s0 + $0xe] sm:$0x3]
    %v3170 = vmul.f32 %v3162, %v3154
    %v3171 = vmul.f32 %v3163, %v3155
    %v3172 = vmul.f32 %v3164, %v3156
    %v3173 = vmul.f32 %v3165, %v3157
    %v3174 = vmul.f32 %v3166, %v3158
    %v3175 = vmul.f32 %v3167, %v3159
    %v3176 = vmul.f32 %v3168, %v3160
    %v3177 = vmul.f32 %v3169, %v3161
    %v3178 = vsel %vm124, %v3170, 0.0
    %v3179 = vsel %vm124, %v3171, 0.0
    %v3180 = vadd.f32 %v3178, %v3179
    %v3181 = vsel %vm124, %v3172, 0.0
    %v3182 = vadd.f32 %v3180, %v3181
    %v3183 = vsel %vm124, %v3173, 0.0
    %v3184 = vadd.f32 %v3182, %v3183
    %v3185 = vsel %vm124, %v3174, 0.0
    %v3186 = vadd.f32 %v3184, %v3185
    %v3187 = vsel %vm124, %v3175, 0.0
    %v3188 = vadd.f32 %v3186, %v3187
    %v3189 = vsel %vm124, %v3176, 0.0
    %v3190 = vadd.f32 %v3188, %v3189
    %v3191 = vsel %vm124, %v3177, 0.0
    %v3192 = vadd.f32 %v3190, %v3191
    %v3193 = vld [vmem:[%s1055] sm:$0x3]
    %v3195 = vsel %vm50, %v3192, 0
    %3197 = vmatprep.subr.mxu0 0.0
    %3198 = vmatpush1.msra.mxu0 0.0
    %3199 = vmatprep.subr.mxu0 0.0
    %3200 = vmatpush1.msra.mxu0 0.0
    %3201 = vmatprep.subr.mxu0 0.0
    %3202 = vmatpush1.msra.mxu0 0.0
    %3203 = vmatprep.subr.mxu0 0.0
    %3204 = vmatpush1.msra.mxu0 0.0
    %3205 = vmatprep.subr.mxu0 0.0
    %3206 = vmatpush1.msra.mxu0 0.0
    %3207 = vmatprep.subr.mxu0 0.0
    %3208 = vmatpush1.msra.mxu0 0.0
    %3209 = vmatprep.subr.mxu0 0.0
    %3210 = vmatpush1.msra.mxu0 0.0
    %3211 = vmatprep.subr.mxu0 0.0
    %3212 = vmatpush1.msra.mxu0 0.0
    %3213 = vmatprep.subr.mxu0 0.0
    %3214 = vmatpush1.msra.mxu0 0.0
    %3215 = vmatprep.subr.mxu0 0.0
    %3216 = vmatpush1.msra.mxu0 0.0
    %3217 = vmatprep.subr.mxu0 0.0
    %3218 = vmatpush1.msra.mxu0 0.0
    %3219 = vmatprep.subr.mxu0 0.0
    %3220 = vmatpush1.msra.mxu0 0.0
    %3221 = vmatprep.subr.mxu0 0.0
    %3222 = vmatpush1.msra.mxu0 %v1072
    %3223 = vmatprep.subr.mxu0 0.0
    %3224 = vmatpush1.msra.mxu0 %v1071
    %3225 = vmatprep.subr.mxu0 0.0
    %3226 = vmatpush1.msra.mxu0 %v1070
    %3227 = vmatprep.subr.mxu0 0.0
    %3228 = vmatpush1.msra.mxu0 %v1069
    %3229 = vmatprep.subr.mxu0 0.0
    %3230 = vmatpush2.msra.mxu0 0.0
    %3231 = vmatprep.subr.mxu0 0.0
    %3232 = vmatpush2.msra.mxu0 0.0
    %3233 = vmatprep.subr.mxu0 0.0
    %3234 = vmatpush2.msra.mxu0 0.0
    %3235 = vmatprep.subr.mxu0 0.0
    %3236 = vmatpush2.msra.mxu0 0.0
    %3237 = vmatprep.subr.mxu0 0.0
    %3238 = vmatpush2.msra.mxu0 0.0
    %3239 = vmatprep.subr.mxu0 0.0
    %3240 = vmatpush2.msra.mxu0 0.0
    %3241 = vmatprep.subr.mxu0 0.0
    %3242 = vmatpush2.msra.mxu0 0.0
    %3243 = vmatprep.subr.mxu0 0.0
    %3244 = vmatpush2.msra.mxu0 0.0
    %3245 = vmatprep.subr.mxu0 0.0
    %3246 = vmatpush2.msra.mxu0 0.0
    %3247 = vmatprep.subr.mxu0 0.0
    %3248 = vmatpush2.msra.mxu0 0.0
    %3249 = vmatprep.subr.mxu0 0.0
    %3250 = vmatpush2.msra.mxu0 0.0
    %3251 = vmatprep.subr.mxu0 0.0
    %3252 = vmatpush2.msra.mxu0 0.0
    %3253 = vmatprep.subr.mxu0 0.0
    %3254 = vmatpush2.msra.mxu0 0.0
    %3255 = vmatprep.subr.mxu0 0.0
    %3256 = vmatpush2.msra.mxu0 0.0
    %3257 = vmatprep.subr.mxu0 0.0
    %3258 = vmatpush2.msra.mxu0 0.0
    %3259 = vmatprep.subr.mxu0 0.0
    %3260 = vmatpush2.msra.mxu0 0.0
    %3261 = vmatprep.mubr.f32.mxu0 0.0
    %3262 = vmatmul.mubr.f32.gmra.mxu0 %v3195
    %v3263 = vpop.f32.mrf.mxu0
    %v3264 = vadd.f32 %v3193, %v3263
    %v3265 = vpop.f32.mrf.mxu0
    %3266 = vdwg.mxu0
    %3267 = vmatprep.subr.mxu0 0.0
    %3268 = vmatpush1.msra.mxu0 0.0
    %3269 = vmatprep.subr.mxu0 0.0
    %3270 = vmatpush1.msra.mxu0 0.0
    %3271 = vmatprep.subr.mxu0 0.0
    %3272 = vmatpush1.msra.mxu0 0.0
    %3273 = vmatprep.subr.mxu0 0.0
    %3274 = vmatpush1.msra.mxu0 0.0
    %3275 = vmatprep.subr.mxu0 0.0
    %3276 = vmatpush1.msra.mxu0 0.0
    %3277 = vmatprep.subr.mxu0 0.0
    %3278 = vmatpush1.msra.mxu0 0.0
    %3279 = vmatprep.subr.mxu0 0.0
    %3280 = vmatpush1.msra.mxu0 0.0
    %3281 = vmatprep.subr.mxu0 0.0
    %3282 = vmatpush1.msra.mxu0 0.0
    %3283 = vmatprep.subr.mxu0 0.0
    %3284 = vmatpush1.msra.mxu0 0.0
    %3285 = vmatprep.subr.mxu0 0.0
    %3286 = vmatpush1.msra.mxu0 0.0
    %3287 = vmatprep.subr.mxu0 0.0
    %3288 = vmatpush1.msra.mxu0 0.0
    %3289 = vmatprep.subr.mxu0 0.0
    %3290 = vmatpush1.msra.mxu0 0.0
    %3291 = vmatprep.subr.mxu0 0.0
    %3292 = vmatpush1.msra.mxu0 %v1076
    %3293 = vmatprep.subr.mxu0 0.0
    %3294 = vmatpush1.msra.mxu0 %v1075
    %3295 = vmatprep.subr.mxu0 0.0
    %3296 = vmatpush1.msra.mxu0 %v1074
    %3297 = vmatprep.subr.mxu0 0.0
    %3298 = vmatpush1.msra.mxu0 %v1073
    %3299 = vmatprep.subr.mxu0 0.0
    %3300 = vmatpush2.msra.mxu0 0.0
    %3301 = vmatprep.subr.mxu0 0.0
    %3302 = vmatpush2.msra.mxu0 0.0
    %3303 = vmatprep.subr.mxu0 0.0
    %3304 = vmatpush2.msra.mxu0 0.0
    %3305 = vmatprep.subr.mxu0 0.0
    %3306 = vmatpush2.msra.mxu0 0.0
    %3307 = vmatprep.subr.mxu0 0.0
    %3308 = vmatpush2.msra.mxu0 0.0
    %3309 = vmatprep.subr.mxu0 0.0
    %3310 = vmatpush2.msra.mxu0 0.0
    %3311 = vmatprep.subr.mxu0 0.0
    %3312 = vmatpush2.msra.mxu0 0.0
    %3313 = vmatprep.subr.mxu0 0.0
    %3314 = vmatpush2.msra.mxu0 0.0
    %3315 = vmatprep.subr.mxu0 0.0
    %3316 = vmatpush2.msra.mxu0 0.0
    %3317 = vmatprep.subr.mxu0 0.0
    %3318 = vmatpush2.msra.mxu0 0.0
    %3319 = vmatprep.subr.mxu0 0.0
    %3320 = vmatpush2.msra.mxu0 0.0
    %3321 = vmatprep.subr.mxu0 0.0
    %3322 = vmatpush2.msra.mxu0 0.0
    %3323 = vmatprep.subr.mxu0 0.0
    %3324 = vmatpush2.msra.mxu0 0.0
    %3325 = vmatprep.subr.mxu0 0.0
    %3326 = vmatpush2.msra.mxu0 0.0
    %3327 = vmatprep.subr.mxu0 0.0
    %3328 = vmatpush2.msra.mxu0 0.0
    %3329 = vmatprep.subr.mxu0 0.0
    %3330 = vmatpush2.msra.mxu0 0.0
    %3331 = vmatprep.mubr.f32.mxu0 0.0
    %3332 = vmatmul.mubr.f32.gmra.mxu0 %v2899
    %v3333 = vpop.f32.mrf.mxu0
    %v3334 = vadd.f32 %v1082, %v3333
    %v3335 = vpop.f32.mrf.mxu0
    %3336 = vdwg.mxu0
    %v3337 = vadd.f32 %v3264, %v3334
    %v3338 = vxor.u32 %v3337, 2147483648
    %v3339 = vmul.f32 %v3338, 1.442695
    %v3340 = vpow.pop %v3339
    %v3341 = vadd.f32 %v3340, 1.0
    %v3342 = vrcp.pop %v3341
    %v3343 = vmul.f32 1.0, %v3342
    %3345 = vrot.lane.b32.xlu0 %v3334, 64
    %v3346 = vpop.permute.xlu0 %3345
    %v3348 = vmul.f32 %v3343, %v3346
    %3350 = vrot.lane.b32.xlu0 %v3348, 64
    %v3351 = vpop.permute.xlu0 %3350
    %v3353 = vadd.f32 %v3264, %v3351
    %v3354 = vtanh.pop %v3353
    %v3355 = vsub.f32 1.0, %v3343
    %3357 = vrot.lane.b32.xlu0 %v3354, 96
    %v3358 = vpop.permute.xlu0 %3357
    %v3360 = vmul.f32 %v3355, %v3358
    %v3361 = vmul.f32 %v3343, %v2895
    %v3362 = vadd.f32 %v3360, %v3361
    %3364 = vrot.lane.b32.xlu0 %v3362, 96
    %v3365 = vpop.permute.xlu0 %3364
    %v3366 = vsel %vm50, %v3365, 0
    %3368 = vmatprep.subr.mxu0 0.0
    %3369 = vmatpush1.msra.mxu0 0.0
    %3370 = vmatprep.subr.mxu0 0.0
    %3371 = vmatpush1.msra.mxu0 0.0
    %3372 = vmatprep.subr.mxu0 0.0
    %3373 = vmatpush1.msra.mxu0 0.0
    %3374 = vmatprep.subr.mxu0 0.0
    %3375 = vmatpush1.msra.mxu0 0.0
    %3376 = vmatprep.subr.mxu0 0.0
    %3377 = vmatpush1.msra.mxu0 0.0
    %3378 = vmatprep.subr.mxu0 0.0
    %3379 = vmatpush1.msra.mxu0 0.0
    %3380 = vmatprep.subr.mxu0 0.0
    %3381 = vmatpush1.msra.mxu0 0.0
    %3382 = vmatprep.subr.mxu0 0.0
    %3383 = vmatpush1.msra.mxu0 0.0
    %3384 = vmatprep.subr.mxu0 0.0
    %3385 = vmatpush1.msra.mxu0 0.0
    %3386 = vmatprep.subr.mxu0 0.0
    %3387 = vmatpush1.msra.mxu0 0.0
    %3388 = vmatprep.subr.mxu0 0.0
    %3389 = vmatpush1.msra.mxu0 0.0
    %3390 = vmatprep.subr.mxu0 0.0
    %3391 = vmatpush1.msra.mxu0 0.0
    %3392 = vmatprep.subr.mxu0 0.0
    %3393 = vmatpush1.msra.mxu0 %v1087
    %3394 = vmatprep.subr.mxu0 0.0
    %3395 = vmatpush1.msra.mxu0 %v1086
    %3396 = vmatprep.subr.mxu0 0.0
    %3397 = vmatpush1.msra.mxu0 %v1085
    %3398 = vmatprep.subr.mxu0 0.0
    %3399 = vmatpush1.msra.mxu0 %v1084
    %3400 = vmatprep.subr.mxu0 0.0
    %3401 = vmatpush2.msra.mxu0 0.0
    %3402 = vmatprep.subr.mxu0 0.0
    %3403 = vmatpush2.msra.mxu0 0.0
    %3404 = vmatprep.subr.mxu0 0.0
    %3405 = vmatpush2.msra.mxu0 0.0
    %3406 = vmatprep.subr.mxu0 0.0
    %3407 = vmatpush2.msra.mxu0 0.0
    %3408 = vmatprep.subr.mxu0 0.0
    %3409 = vmatpush2.msra.mxu0 0.0
    %3410 = vmatprep.subr.mxu0 0.0
    %3411 = vmatpush2.msra.mxu0 0.0
    %3412 = vmatprep.subr.mxu0 0.0
    %3413 = vmatpush2.msra.mxu0 0.0
    %3414 = vmatprep.subr.mxu0 0.0
    %3415 = vmatpush2.msra.mxu0 0.0
    %3416 = vmatprep.subr.mxu0 0.0
    %3417 = vmatpush2.msra.mxu0 0.0
    %3418 = vmatprep.subr.mxu0 0.0
    %3419 = vmatpush2.msra.mxu0 0.0
    %3420 = vmatprep.subr.mxu0 0.0
    %3421 = vmatpush2.msra.mxu0 0.0
    %3422 = vmatprep.subr.mxu0 0.0
    %3423 = vmatpush2.msra.mxu0 0.0
    %3424 = vmatprep.subr.mxu0 0.0
    %3425 = vmatpush2.msra.mxu0 0.0
    %3426 = vmatprep.subr.mxu0 0.0
    %3427 = vmatpush2.msra.mxu0 0.0
    %3428 = vmatprep.subr.mxu0 0.0
    %3429 = vmatpush2.msra.mxu0 0.0
    %3430 = vmatprep.subr.mxu0 0.0
    %3431 = vmatpush2.msra.mxu0 0.0
    %3432 = vmatprep.mubr.f32.mxu0 0.0
    %3433 = vmatmul.mubr.f32.gmra.mxu0 %v3366
    %v3434 = vpop.f32.mrf.mxu0
    %v3435 = vadd.f32 %v1093, %v3434
    %v3436 = vpop.f32.mrf.mxu0
    %3437 = vdwg.mxu0
    %s3438 = scalar_lea.vmem [#allocation4], 8
    %3439 = vst.msk [vmem:[%s3438] sm:$0x3] %vm1570, %v3435
    // Predicated region
    $region54: #{tpu_custom_call.1} parent=1 // pred_check
      _
    $region55: #{tpu_custom_call.1} parent=1 // pred_check_branch
      %3441 = sbr.rel (0) target = $region57
    $region56: #{tpu_custom_call.1} parent=1 // pred_region
      %s3443 = ssub.s32 160, 160
      %3444 = vsyncadd [#allocation5], %s3443
      %s3445 = sshll.u32 [#allocation4], 4
      %s3446 = int_to_ptr.vmem [resolvable:$true] %s3445
      %3451 = dma.vmem_to_hbm [thread:$0]  %s3446, 160, %s13, [#allocation5], 32, 32, 2
    $region57: #{tpu_custom_call.1} parent=1 // pred_fallthru
      _
    // Predicated region
    $region58: #{tpu_custom_call.1} parent=1 // pred_check
      _
    $region59: #{tpu_custom_call.1} parent=1 // pred_check_branch
      %3453 = sbr.rel (0) target = $region61
    $region60: #{tpu_custom_call.1} parent=1 // pred_region
      %3454 = dma.done [#allocation5], 160
    $region61: #{tpu_custom_call.1} parent=1 // pred_fallthru
      _
    %3455 = vsyncpa [#allocation5], 1

</llo_original>
